<compile_context>
chip_gen: v5e
topology: v5e:2x2
jax: 0.10.0
libtpu: 0.0.40
codegen_flags: <defaults>
</compile_context>

<pallas_src>
import functools

import jax
import jax.numpy as jnp
from jax import lax
from jax.experimental import pallas as pl
from jax.experimental.pallas import tpu as pltpu

BATCH = 250        # fixed by the module (Linear(1000) = 250*4, decoder h0 = randn(1, 250, 1))
BP = 256           # padded batch (lane dim)
HP = 8             # padded per-gate hidden rows (sublane tile)
G4 = 4 * HP        # 32 encoder gate rows, PyTorch gate order [i | f | g | o]
FC1 = 512          # fc1 width


# ------------------------------ fused Pallas kernel ------------------------------ #

def _lstm_ae_kernel(x_ref, ewih_ref, ewhh_ref, eb_ref,
                    w1_hbm, b1_ref, w2_hbm, b2_ref,
                    dwih_ref, dwhh_ref, db_ref, h0_ref,
                    y_ref,
                    gxe_sc, yenc_sc, gxd_sc, w1_vmem, w2_vmem, dma_sem,
                    *, seq_len):
    """Enc LSTM -> MLP -> Dec LSTM, all intermediates resident in VMEM.

    x_ref:    (1, T*BP)            enc input, x[t, b] at lane t*BP+b
    ewih_ref: (G4, 1)  ewhh_ref: (G4, HP)  eb_ref: (G4, 1)   (i/f/o rows pre-scaled 0.5)
    w1_hbm:   (BP, 4*FC1)  HBM (pl.ANY); w1[b, hh*FC1+j] = fc1_w[j, 4b+hh]
    b1_ref:   (1, FC1)  w2_hbm: (FC1, BP) HBM (pl.ANY)  b2_ref: (1, BP)
    dwih_ref: (HP, HP) dwhh_ref: (HP, 1)  db_ref: (HP, 1)  (dense dec gates, rows 0..3)
    h0_ref:   (1, BP)
    y_ref:    (T, BP)              yrec[t, b] = decoder hidden unit 0
    scratch:  gxe_sc (G4, T*BP), yenc_sc (HP, T*BP), gxd_sc (HP, T*BP),
              w1_vmem (BP, 4*FC1), w2_vmem (FC1, BP), dma_sem DMA((2,))
    """
    f32 = jnp.float32

    # Kick off the fc1/fc2 weight fetch now; it overlaps the encoder recurrence.
    cp_w1 = pltpu.make_async_copy(w1_hbm, w1_vmem, dma_sem.at[0])
    cp_w2 = pltpu.make_async_copy(w2_hbm, w2_vmem, dma_sem.at[1])
    cp_w1.start()
    cp_w2.start()

    # ---------------- Encoder LSTM (input_size=1, hidden_size=4) ----------------
    # Hoisted input projection for ALL timesteps (outer product, since I == 1):
    #   gx[r, t*BP + b] = W_ih[r] * x[t, b] + bias[r]   (i/f/o rows already *0.5)
    gxe_sc[...] = ewih_ref[...] * x_ref[...] + eb_ref[...]            # (G4, T*BP)

    ewhh = ewhh_ref[...]                                              # (G4, HP)
    h = jnp.zeros((HP, BP), f32)
    c = jnp.zeros((HP, BP), f32)
    for t in range(seq_len):                                          # fully unrolled
        pre = gxe_sc[:, t * BP:(t + 1) * BP] + jnp.dot(
            ewhh, h, preferred_element_type=f32)                      # (G4, BP)
        # sigmoid(z) = 0.5*(1 + tanh(z/2)); i/f/o rows were pre-scaled by 0.5,
        # so ONE tanh over the whole gate block + a VPU fixup replaces 3 sigmoids + tanh.
        th = jnp.tanh(pre)
        sg = 0.5 * (th + 1.0)
        c = sg[HP:2 * HP, :] * c + sg[0:HP, :] * th[2 * HP:3 * HP, :]
        h = sg[3 * HP:4 * HP, :] * jnp.tanh(c)
        yenc_sc[:, t * BP:(t + 1) * BP] = h                           # decoder input, stays in VMEM

    # ------------- Decoder input projection (hoisted, one matmul) ---------------
    gxd_sc[...] = jnp.dot(dwih_ref[...], yenc_sc[...],
                          preferred_element_type=f32) + db_ref[...]   # (HP, T*BP)

    # ---------------- Enc MLP: cn = fc2(relu(fc1(flatten(cell_n)))) ----------------
    # stacked[4*b + hh] = cell_n[b, hh] = c[hh, b]; the 1000-wide contraction is ONE
    # (8,256)@(256,2048) matmul with host-side re-concatenated fc1 weights, then the
    # 4 relevant (row hh, block hh) slices are summed (pure VPU, no serial MXU chain).
    # TODO(synk): source does cell_n.reshape((1000, 1)) which cannot feed
    # Linear(in_features=1000); interpreted as a (1, 1000) batch-major row vector.
    cp_w1.wait()
    cp_w2.wait()
    big = jnp.dot(c, w1_vmem[...], preferred_element_type=f32)        # (HP, 4*FC1)
    hid = b1_ref[...]                                                 # (1, FC1)
    for hh in range(4):
        hid = hid + big[hh:hh + 1, hh * FC1:(hh + 1) * FC1]
    hid = jnp.maximum(hid, 0.0)
    hid8 = jnp.broadcast_to(hid, (HP, FC1))                           # keep MXU M >= 8
    cn = (jnp.dot(hid8, w2_vmem[...], preferred_element_type=f32)
          + b2_ref[...])[0:1, :]                                      # (1, BP)

    # ---------------- Decoder LSTM (input_size=4, hidden_size=1) ----------------
    # Densely packed gates (rows 0..3 of an 8-sublane tile); the recurrence term is
    # an outer product (hidden=1) -> pure VPU broadcast-multiply, no MXU round trip.
    dwhh = dwhh_ref[...]                                              # (HP, 1)
    h_d = h0_ref[...]                                                 # (1, BP)
    c_d = cn                                                          # (1, BP)
    row = lax.broadcasted_iota(jnp.int32, (seq_len, BP), 0)
    out = jnp.zeros((seq_len, BP), f32)
    for t in range(seq_len):                                          # fully unrolled
        pre = gxd_sc[:, t * BP:(t + 1) * BP] + dwhh * h_d             # (HP, BP), VPU only
        th = jnp.tanh(pre)                                            # one EUP stream (2 vregs)
        sg = 0.5 * (th + 1.0)
        c_d = sg[1:2, :] * c_d + sg[0:1, :] * th[2:3, :]              # f*c + i*g
        h_d = sg[3:4, :] * jnp.tanh(c_d)                              # o*tanh(c)
        out = jnp.where(row == t, jnp.broadcast_to(h_d, (seq_len, BP)), out)
    y_ref[...] = out                                                  # single dense store


# --------------------------- parameter construction ------------------------------ #

_SIG_GATES = (0, 1, 3)   # i, f, o get the 0.5 pre-scale for the sigmoid-via-tanh fusion


def _pack_lstm_enc(w_ih, w_hh, b_ih, b_hh):
    """Encoder LSTM params (16,1),(16,4),(16,),(16,) -> padded (G4,*) mats, i/f/o *0.5."""
    H = 4
    wih = jnp.zeros((G4, 1), jnp.float32)
    whh = jnp.zeros((G4, HP), jnp.float32)
    b = jnp.zeros((G4, 1), jnp.float32)
    for g in range(4):
        s = 0.5 if g in _SIG_GATES else 1.0
        wih = wih.at[g * HP:g * HP + H, :].set(s * w_ih[g * H:(g + 1) * H, :])
        whh = whh.at[g * HP:g * HP + H, :H].set(s * w_hh[g * H:(g + 1) * H, :])
        b = b.at[g * HP:g * HP + H, 0].set(
            s * (b_ih[g * H:(g + 1) * H] + b_hh[g * H:(g + 1) * H]))
    return wih, whh, b


def _pack_lstm_dec(w_ih, w_hh, b_ih, b_hh):
    """Decoder LSTM params (4,4),(4,1),(4,),(4,) -> DENSE gate rows 0..3 of an 8-row tile."""
    wih = jnp.zeros((HP, HP), jnp.float32)    # cols 0..3 match encoder hidden packing
    whh = jnp.zeros((HP, 1), jnp.float32)
    b = jnp.zeros((HP, 1), jnp.float32)
    for g in range(4):
        s = 0.5 if g in _SIG_GATES else 1.0
        wih = wih.at[g, :4].set(s * w_ih[g, :])
        whh = whh.at[g, 0].set(s * w_hh[g, 0])
        b = b.at[g, 0].set(s * (b_ih[g] + b_hh[g]))
    return wih, whh, b


def init_params(key):
    ks = jax.random.split(key, 13)

    def u(k, shape, bound):
        return jax.random.uniform(k, shape, jnp.float32, -bound, bound)

    # Enc.rnn1 = LSTM(input_size=1, hidden_size=4)   (`batch_fist` typo in source ignored)
    kb = 1.0 / jnp.sqrt(4.0)
    enc = _pack_lstm_enc(u(ks[0], (16, 1), kb), u(ks[1], (16, 4), kb),
                         u(ks[2], (16,), kb), u(ks[3], (16,), kb))

    # Enc.fc1 = Linear(1000, 512); Enc.fc2 = Linear(512, 250)
    k1 = 1.0 / jnp.sqrt(1000.0)
    k2 = 1.0 / jnp.sqrt(512.0)
    fc1_w, fc1_b = u(ks[4], (FC1, 1000), k1), u(ks[5], (FC1,), k1)
    fc2_w, fc2_b = u(ks[6], (BATCH, FC1), k2), u(ks[7], (BATCH,), k2)
    # w1[b, hh*FC1 + j] = fc1_w[j, 4*b + hh]  (batch-major flatten of cell_n)
    w1cat = jnp.transpose(fc1_w.reshape(FC1, BATCH, 4), (1, 2, 0)).reshape(BATCH, 4 * FC1)
    w1 = jnp.zeros((BP, 4 * FC1), jnp.float32).at[:BATCH, :].set(w1cat)
    b1 = fc1_b.reshape(1, FC1)
    w2 = jnp.zeros((FC1, BP), jnp.float32).at[:, :BATCH].set(fc2_w.T)
    b2 = jnp.zeros((1, BP), jnp.float32).at[0, :BATCH].set(fc2_b)

    # Dec.rnn1 = LSTM(input_size=4, hidden_size=1)
    dec = _pack_lstm_dec(u(ks[8], (4, 4), 1.0), u(ks[9], (4, 1), 1.0),
                         u(ks[10], (4,), 1.0), u(ks[11], (4,), 1.0))

    # TODO(synk): PyTorch redraws h0 = torch.randn(1, 250, 1) on every Dec.forward;
    # drawn once at init here for determinism.
    h0 = jnp.zeros((1, BP), jnp.float32).at[0, :BATCH].set(
        jax.random.normal(ks[12], (BATCH,), jnp.float32))

    return dict(enc=enc, mlp=(w1, b1, w2, b2), dec=dec, h0_dec=h0)


# ----------------------------------- forward ------------------------------------- #

@jax.jit
def lstm_simp_forward(x, params):
    inp = x.reshape(-1, BATCH).astype(jnp.float32)                    # x.reshape((-1, 250, 1))
    seq_len = inp.shape[0]
    xp = jnp.zeros((seq_len, BP), jnp.float32).at[:, :BATCH].set(inp)
    x_flat = xp.reshape(1, seq_len * BP)                              # lane-dense (1, T*256)

    ewih, ewhh, eb = params["enc"]
    w1, b1, w2, b2 = params["mlp"]
    dwih, dwhh, db = params["dec"]
    h0 = params["h0_dec"]

    vmem = pl.BlockSpec(memory_space=pltpu.MemorySpace.VMEM)
    anym = pl.BlockSpec(memory_space=pl.ANY)                          # fc1/fc2 weights: manual DMA
    y = pl.pallas_call(
        functools.partial(_lstm_ae_kernel, seq_len=seq_len),
        out_shape=jax.ShapeDtypeStruct((seq_len, BP), jnp.float32),
        in_specs=[vmem, vmem, vmem, vmem,
                  anym, vmem, anym, vmem,
                  vmem, vmem, vmem, vmem],
        out_specs=vmem,
        scratch_shapes=[pltpu.VMEM((G4, seq_len * BP), jnp.float32),   # enc gx (hoisted)
                        pltpu.VMEM((HP, seq_len * BP), jnp.float32),   # enc outputs (dec input)
                        pltpu.VMEM((HP, seq_len * BP), jnp.float32),   # dec gx (hoisted, dense)
                        pltpu.VMEM((BP, 4 * FC1), jnp.float32),        # fc1 weights (DMA target)
                        pltpu.VMEM((FC1, BP), jnp.float32),            # fc2 weights (DMA target)
                        pltpu.SemaphoreType.DMA((2,))],
    )(x_flat, ewih, ewhh, eb, w1, b1, w2, b2, dwih, dwhh, db, h0)

    return y[:, :BATCH].reshape(seq_len, BATCH, 1)                    # yrec (T, 250, 1)


if __name__ == "__main__":
    key = jax.random.PRNGKey(0)
    kp, kx = jax.random.split(key)
    params = init_params(kp)
    x = jax.random.normal(kx, (8, BATCH), jnp.float32)   # reshapes to (T=8, 250, 1)
    yrec = lstm_simp_forward(x, params)
    jax.block_until_ready(yrec)
    assert yrec.shape == (8, BATCH, 1) and yrec.dtype == jnp.float32
    print("KERNEL_OK")
</pallas_src>

<mosaic_0001>
module attributes {stable_mosaic.version = 11 : i64} {
  func.func @_lstm_ae_kernel(%arg0: memref<1x2048xf32, #tpu.memory_space<vmem>>, %arg1: memref<32x1xf32, #tpu.memory_space<vmem>>, %arg2: memref<32x8xf32, #tpu.memory_space<vmem>>, %arg3: memref<32x1xf32, #tpu.memory_space<vmem>>, %arg4: memref<256x2048xf32, #tpu.memory_space<any>>, %arg5: memref<1x512xf32, #tpu.memory_space<vmem>>, %arg6: memref<512x256xf32, #tpu.memory_space<any>>, %arg7: memref<1x256xf32, #tpu.memory_space<vmem>>, %arg8: memref<8x8xf32, #tpu.memory_space<vmem>>, %arg9: memref<8x1xf32, #tpu.memory_space<vmem>>, %arg10: memref<8x1xf32, #tpu.memory_space<vmem>>, %arg11: memref<1x256xf32, #tpu.memory_space<vmem>>, %arg12: memref<8x256xf32, #tpu.memory_space<vmem>>, %arg13: memref<32x2048xf32, #tpu.memory_space<vmem>>, %arg14: memref<8x2048xf32, #tpu.memory_space<vmem>>, %arg15: memref<8x2048xf32, #tpu.memory_space<vmem>>, %arg16: memref<256x2048xf32, #tpu.memory_space<vmem>>, %arg17: memref<512x256xf32, #tpu.memory_space<vmem>>, %arg18: memref<2x!tpu.dma_semaphore, #tpu.memory_space<semaphore_mem>>) attributes {dimension_semantics = [], scalar_prefetch = 0 : i64, scratch_operands = 6 : i64, tpu.core_type = #tpu.core_type<tc>} {
    %c0_i32 = arith.constant 0 : i32
    %0 = tpu.memref_slice %arg18[%c0_i32] : memref<2x!tpu.dma_semaphore, #tpu.memory_space<semaphore_mem>> -> memref<1x!tpu.dma_semaphore, #tpu.memory_space<semaphore_mem>>
    %1 = tpu.memref_squeeze %0 : memref<1x!tpu.dma_semaphore, #tpu.memory_space<semaphore_mem>> -> memref<!tpu.dma_semaphore, #tpu.memory_space<semaphore_mem>>
    tpu.enqueue_dma source(%arg4 : memref<256x2048xf32, #tpu.memory_space<any>>) target(%arg16 : memref<256x2048xf32, #tpu.memory_space<vmem>>) target_semaphore(%1 : memref<!tpu.dma_semaphore, #tpu.memory_space<semaphore_mem>>)
    %c1_i32 = arith.constant 1 : i32
    %2 = tpu.memref_slice %arg18[%c1_i32] : memref<2x!tpu.dma_semaphore, #tpu.memory_space<semaphore_mem>> -> memref<1x!tpu.dma_semaphore, #tpu.memory_space<semaphore_mem>>
    %3 = tpu.memref_squeeze %2 : memref<1x!tpu.dma_semaphore, #tpu.memory_space<semaphore_mem>> -> memref<!tpu.dma_semaphore, #tpu.memory_space<semaphore_mem>>
    tpu.enqueue_dma source(%arg6 : memref<512x256xf32, #tpu.memory_space<any>>) target(%arg17 : memref<512x256xf32, #tpu.memory_space<vmem>>) target_semaphore(%3 : memref<!tpu.dma_semaphore, #tpu.memory_space<semaphore_mem>>)
    %c0 = arith.constant 0 : index
    %c0_0 = arith.constant 0 : index
    %4 = vector.load %arg1[%c0, %c0_0] : memref<32x1xf32, #tpu.memory_space<vmem>>, vector<32x1xf32>
    %c0_1 = arith.constant 0 : index
    %c0_2 = arith.constant 0 : index
    %5 = vector.load %arg0[%c0_1, %c0_2] : memref<1x2048xf32, #tpu.memory_space<vmem>>, vector<1x2048xf32>
    %6 = vector.broadcast %4 : vector<32x1xf32> to vector<32x2048xf32>
    %7 = vector.broadcast %5 : vector<1x2048xf32> to vector<32x2048xf32>
    %8 = arith.mulf %6, %7 : vector<32x2048xf32>
    %c0_3 = arith.constant 0 : index
    %c0_4 = arith.constant 0 : index
    %9 = vector.load %arg3[%c0_3, %c0_4] : memref<32x1xf32, #tpu.memory_space<vmem>>, vector<32x1xf32>
    %10 = vector.broadcast %9 : vector<32x1xf32> to vector<32x2048xf32>
    %11 = arith.addf %8, %10 : vector<32x2048xf32>
    %c0_5 = arith.constant 0 : index
    %c0_6 = arith.constant 0 : index
    %12 = vector.load %arg13[%c0_5, %c0_6] : memref<32x2048xf32, #tpu.memory_space<vmem>>, vector<32x2048xf32>
    tpu.vector_store %arg13[%c0_5, %c0_6], %11 {strides = array<i32>} : memref<32x2048xf32, #tpu.memory_space<vmem>>, vector<32x2048xf32>,
    %c0_7 = arith.constant 0 : index
    %c0_8 = arith.constant 0 : index
    %13 = vector.load %arg2[%c0_7, %c0_8] : memref<32x8xf32, #tpu.memory_space<vmem>>, vector<32x8xf32>
    %cst = arith.constant 0.000000e+00 : f32
    %14 = vector.broadcast %cst : f32 to vector<8x256xf32>
    %cst_9 = arith.constant 0.000000e+00 : f32
    %15 = vector.broadcast %cst_9 : f32 to vector<8x256xf32>
    %c0_10 = arith.constant 0 : index
    %c0_11 = arith.constant 0 : index
    %16 = vector.load %arg13[%c0_10, %c0_11] : memref<32x2048xf32, #tpu.memory_space<vmem>>, vector<32x256xf32>
    %cst_12 = arith.constant dense<0.000000e+00> : vector<32x256xf32>
    %17 = tpu.matmul %13, %14, %cst_12 {dimension_numbers = #tpu.dot_dimension_numbers<[1], [0], [0], [1], [0, 0, 1, 1], [], []>} : vector<32x8xf32>, vector<8x256xf32>, vector<32x256xf32> -> vector<32x256xf32>
    %18 = arith.addf %16, %17 : vector<32x256xf32>
    %19 = math.tanh %18 : vector<32x256xf32>
    %cst_13 = arith.constant 1.000000e+00 : f32
    %20 = vector.broadcast %cst_13 : f32 to vector<32x256xf32>
    %21 = arith.addf %19, %20 : vector<32x256xf32>
    %cst_14 = arith.constant 5.000000e-01 : f32
    %22 = vector.broadcast %cst_14 : f32 to vector<32x256xf32>
    %23 = arith.mulf %22, %21 : vector<32x256xf32>
    %24 = vector.extract_strided_slice %23 {offsets = [8, 0], sizes = [8, 256], strides = [1, 1]} : vector<32x256xf32> to vector<8x256xf32>
    %25 = arith.mulf %24, %15 : vector<8x256xf32>
    %26 = vector.extract_strided_slice %23 {offsets = [0, 0], sizes = [8, 256], strides = [1, 1]} : vector<32x256xf32> to vector<8x256xf32>
    %27 = vector.extract_strided_slice %19 {offsets = [16, 0], sizes = [8, 256], strides = [1, 1]} : vector<32x256xf32> to vector<8x256xf32>
    %28 = arith.mulf %26, %27 : vector<8x256xf32>
    %29 = arith.addf %25, %28 : vector<8x256xf32>
    %30 = vector.extract_strided_slice %23 {offsets = [24, 0], sizes = [8, 256], strides = [1, 1]} : vector<32x256xf32> to vector<8x256xf32>
    %31 = math.tanh %29 : vector<8x256xf32>
    %32 = arith.mulf %30, %31 : vector<8x256xf32>
    %c0_15 = arith.constant 0 : index
    %c0_16 = arith.constant 0 : index
    %33 = vector.load %arg14[%c0_15, %c0_16] : memref<8x2048xf32, #tpu.memory_space<vmem>>, vector<8x256xf32>
    tpu.vector_store %arg14[%c0_15, %c0_16], %32 {strides = array<i32>} : memref<8x2048xf32, #tpu.memory_space<vmem>>, vector<8x256xf32>,
    %c0_17 = arith.constant 0 : index
    %c256 = arith.constant 256 : index
    %34 = vector.load %arg13[%c0_17, %c256] : memref<32x2048xf32, #tpu.memory_space<vmem>>, vector<32x256xf32>
    %cst_18 = arith.constant dense<0.000000e+00> : vector<32x256xf32>
    %35 = tpu.matmul %13, %32, %cst_18 {dimension_numbers = #tpu.dot_dimension_numbers<[1], [0], [0], [1], [0, 0, 1, 1], [], []>} : vector<32x8xf32>, vector<8x256xf32>, vector<32x256xf32> -> vector<32x256xf32>
    %36 = arith.addf %34, %35 : vector<32x256xf32>
    %37 = math.tanh %36 : vector<32x256xf32>
    %cst_19 = arith.constant 1.000000e+00 : f32
    %38 = vector.broadcast %cst_19 : f32 to vector<32x256xf32>
    %39 = arith.addf %37, %38 : vector<32x256xf32>
    %cst_20 = arith.constant 5.000000e-01 : f32
    %40 = vector.broadcast %cst_20 : f32 to vector<32x256xf32>
    %41 = arith.mulf %40, %39 : vector<32x256xf32>
    %42 = vector.extract_strided_slice %41 {offsets = [8, 0], sizes = [8, 256], strides = [1, 1]} : vector<32x256xf32> to vector<8x256xf32>
    %43 = arith.mulf %42, %29 : vector<8x256xf32>
    %44 = vector.extract_strided_slice %41 {offsets = [0, 0], sizes = [8, 256], strides = [1, 1]} : vector<32x256xf32> to vector<8x256xf32>
    %45 = vector.extract_strided_slice %37 {offsets = [16, 0], sizes = [8, 256], strides = [1, 1]} : vector<32x256xf32> to vector<8x256xf32>
    %46 = arith.mulf %44, %45 : vector<8x256xf32>
    %47 = arith.addf %43, %46 : vector<8x256xf32>
    %48 = vector.extract_strided_slice %41 {offsets = [24, 0], sizes = [8, 256], strides = [1, 1]} : vector<32x256xf32> to vector<8x256xf32>
    %49 = math.tanh %47 : vector<8x256xf32>
    %50 = arith.mulf %48, %49 : vector<8x256xf32>
    %c0_21 = arith.constant 0 : index
    %c256_22 = arith.constant 256 : index
    %51 = vector.load %arg14[%c0_21, %c256_22] : memref<8x2048xf32, #tpu.memory_space<vmem>>, vector<8x256xf32>
    tpu.vector_store %arg14[%c0_21, %c256_22], %50 {strides = array<i32>} : memref<8x2048xf32, #tpu.memory_space<vmem>>, vector<8x256xf32>,
    %c0_23 = arith.constant 0 : index
    %c512 = arith.constant 512 : index
    %52 = vector.load %arg13[%c0_23, %c512] : memref<32x2048xf32, #tpu.memory_space<vmem>>, vector<32x256xf32>
    %cst_24 = arith.constant dense<0.000000e+00> : vector<32x256xf32>
    %53 = tpu.matmul %13, %50, %cst_24 {dimension_numbers = #tpu.dot_dimension_numbers<[1], [0], [0], [1], [0, 0, 1, 1], [], []>} : vector<32x8xf32>, vector<8x256xf32>, vector<32x256xf32> -> vector<32x256xf32>
    %54 = arith.addf %52, %53 : vector<32x256xf32>
    %55 = math.tanh %54 : vector<32x256xf32>
    %cst_25 = arith.constant 1.000000e+00 : f32
    %56 = vector.broadcast %cst_25 : f32 to vector<32x256xf32>
    %57 = arith.addf %55, %56 : vector<32x256xf32>
    %cst_26 = arith.constant 5.000000e-01 : f32
    %58 = vector.broadcast %cst_26 : f32 to vector<32x256xf32>
    %59 = arith.mulf %58, %57 : vector<32x256xf32>
    %60 = vector.extract_strided_slice %59 {offsets = [8, 0], sizes = [8, 256], strides = [1, 1]} : vector<32x256xf32> to vector<8x256xf32>
    %61 = arith.mulf %60, %47 : vector<8x256xf32>
    %62 = vector.extract_strided_slice %59 {offsets = [0, 0], sizes = [8, 256], strides = [1, 1]} : vector<32x256xf32> to vector<8x256xf32>
    %63 = vector.extract_strided_slice %55 {offsets = [16, 0], sizes = [8, 256], strides = [1, 1]} : vector<32x256xf32> to vector<8x256xf32>
    %64 = arith.mulf %62, %63 : vector<8x256xf32>
    %65 = arith.addf %61, %64 : vector<8x256xf32>
    %66 = vector.extract_strided_slice %59 {offsets = [24, 0], sizes = [8, 256], strides = [1, 1]} : vector<32x256xf32> to vector<8x256xf32>
    %67 = math.tanh %65 : vector<8x256xf32>
    %68 = arith.mulf %66, %67 : vector<8x256xf32>
    %c0_27 = arith.constant 0 : index
    %c512_28 = arith.constant 512 : index
    %69 = vector.load %arg14[%c0_27, %c512_28] : memref<8x2048xf32, #tpu.memory_space<vmem>>, vector<8x256xf32>
    tpu.vector_store %arg14[%c0_27, %c512_28], %68 {strides = array<i32>} : memref<8x2048xf32, #tpu.memory_space<vmem>>, vector<8x256xf32>,
    %c0_29 = arith.constant 0 : index
    %c768 = arith.constant 768 : index
    %70 = vector.load %arg13[%c0_29, %c768] : memref<32x2048xf32, #tpu.memory_space<vmem>>, vector<32x256xf32>
    %cst_30 = arith.constant dense<0.000000e+00> : vector<32x256xf32>
    %71 = tpu.matmul %13, %68, %cst_30 {dimension_numbers = #tpu.dot_dimension_numbers<[1], [0], [0], [1], [0, 0, 1, 1], [], []>} : vector<32x8xf32>, vector<8x256xf32>, vector<32x256xf32> -> vector<32x256xf32>
    %72 = arith.addf %70, %71 : vector<32x256xf32>
    %73 = math.tanh %72 : vector<32x256xf32>
    %cst_31 = arith.constant 1.000000e+00 : f32
    %74 = vector.broadcast %cst_31 : f32 to vector<32x256xf32>
    %75 = arith.addf %73, %74 : vector<32x256xf32>
    %cst_32 = arith.constant 5.000000e-01 : f32
    %76 = vector.broadcast %cst_32 : f32 to vector<32x256xf32>
    %77 = arith.mulf %76, %75 : vector<32x256xf32>
    %78 = vector.extract_strided_slice %77 {offsets = [8, 0], sizes = [8, 256], strides = [1, 1]} : vector<32x256xf32> to vector<8x256xf32>
    %79 = arith.mulf %78, %65 : vector<8x256xf32>
    %80 = vector.extract_strided_slice %77 {offsets = [0, 0], sizes = [8, 256], strides = [1, 1]} : vector<32x256xf32> to vector<8x256xf32>
    %81 = vector.extract_strided_slice %73 {offsets = [16, 0], sizes = [8, 256], strides = [1, 1]} : vector<32x256xf32> to vector<8x256xf32>
    %82 = arith.mulf %80, %81 : vector<8x256xf32>
    %83 = arith.addf %79, %82 : vector<8x256xf32>
    %84 = vector.extract_strided_slice %77 {offsets = [24, 0], sizes = [8, 256], strides = [1, 1]} : vector<32x256xf32> to vector<8x256xf32>
    %85 = math.tanh %83 : vector<8x256xf32>
    %86 = arith.mulf %84, %85 : vector<8x256xf32>
    %c0_33 = arith.constant 0 : index
    %c768_34 = arith.constant 768 : index
    %87 = vector.load %arg14[%c0_33, %c768_34] : memref<8x2048xf32, #tpu.memory_space<vmem>>, vector<8x256xf32>
    tpu.vector_store %arg14[%c0_33, %c768_34], %86 {strides = array<i32>} : memref<8x2048xf32, #tpu.memory_space<vmem>>, vector<8x256xf32>,
    %c0_35 = arith.constant 0 : index
    %c1024 = arith.constant 1024 : index
    %88 = vector.load %arg13[%c0_35, %c1024] : memref<32x2048xf32, #tpu.memory_space<vmem>>, vector<32x256xf32>
    %cst_36 = arith.constant dense<0.000000e+00> : vector<32x256xf32>
    %89 = tpu.matmul %13, %86, %cst_36 {dimension_numbers = #tpu.dot_dimension_numbers<[1], [0], [0], [1], [0, 0, 1, 1], [], []>} : vector<32x8xf32>, vector<8x256xf32>, vector<32x256xf32> -> vector<32x256xf32>
    %90 = arith.addf %88, %89 : vector<32x256xf32>
    %91 = math.tanh %90 : vector<32x256xf32>
    %cst_37 = arith.constant 1.000000e+00 : f32
    %92 = vector.broadcast %cst_37 : f32 to vector<32x256xf32>
    %93 = arith.addf %91, %92 : vector<32x256xf32>
    %cst_38 = arith.constant 5.000000e-01 : f32
    %94 = vector.broadcast %cst_38 : f32 to vector<32x256xf32>
    %95 = arith.mulf %94, %93 : vector<32x256xf32>
    %96 = vector.extract_strided_slice %95 {offsets = [8, 0], sizes = [8, 256], strides = [1, 1]} : vector<32x256xf32> to vector<8x256xf32>
    %97 = arith.mulf %96, %83 : vector<8x256xf32>
    %98 = vector.extract_strided_slice %95 {offsets = [0, 0], sizes = [8, 256], strides = [1, 1]} : vector<32x256xf32> to vector<8x256xf32>
    %99 = vector.extract_strided_slice %91 {offsets = [16, 0], sizes = [8, 256], strides = [1, 1]} : vector<32x256xf32> to vector<8x256xf32>
    %100 = arith.mulf %98, %99 : vector<8x256xf32>
    %101 = arith.addf %97, %100 : vector<8x256xf32>
    %102 = vector.extract_strided_slice %95 {offsets = [24, 0], sizes = [8, 256], strides = [1, 1]} : vector<32x256xf32> to vector<8x256xf32>
    %103 = math.tanh %101 : vector<8x256xf32>
    %104 = arith.mulf %102, %103 : vector<8x256xf32>
    %c0_39 = arith.constant 0 : index
    %c1024_40 = arith.constant 1024 : index
    %105 = vector.load %arg14[%c0_39, %c1024_40] : memref<8x2048xf32, #tpu.memory_space<vmem>>, vector<8x256xf32>
    tpu.vector_store %arg14[%c0_39, %c1024_40], %104 {strides = array<i32>} : memref<8x2048xf32, #tpu.memory_space<vmem>>, vector<8x256xf32>,
    %c0_41 = arith.constant 0 : index
    %c1280 = arith.constant 1280 : index
    %106 = vector.load %arg13[%c0_41, %c1280] : memref<32x2048xf32, #tpu.memory_space<vmem>>, vector<32x256xf32>
    %cst_42 = arith.constant dense<0.000000e+00> : vector<32x256xf32>
    %107 = tpu.matmul %13, %104, %cst_42 {dimension_numbers = #tpu.dot_dimension_numbers<[1], [0], [0], [1], [0, 0, 1, 1], [], []>} : vector<32x8xf32>, vector<8x256xf32>, vector<32x256xf32> -> vector<32x256xf32>
    %108 = arith.addf %106, %107 : vector<32x256xf32>
    %109 = math.tanh %108 : vector<32x256xf32>
    %cst_43 = arith.constant 1.000000e+00 : f32
    %110 = vector.broadcast %cst_43 : f32 to vector<32x256xf32>
    %111 = arith.addf %109, %110 : vector<32x256xf32>
    %cst_44 = arith.constant 5.000000e-01 : f32
    %112 = vector.broadcast %cst_44 : f32 to vector<32x256xf32>
    %113 = arith.mulf %112, %111 : vector<32x256xf32>
    %114 = vector.extract_strided_slice %113 {offsets = [8, 0], sizes = [8, 256], strides = [1, 1]} : vector<32x256xf32> to vector<8x256xf32>
    %115 = arith.mulf %114, %101 : vector<8x256xf32>
    %116 = vector.extract_strided_slice %113 {offsets = [0, 0], sizes = [8, 256], strides = [1, 1]} : vector<32x256xf32> to vector<8x256xf32>
    %117 = vector.extract_strided_slice %109 {offsets = [16, 0], sizes = [8, 256], strides = [1, 1]} : vector<32x256xf32> to vector<8x256xf32>
    %118 = arith.mulf %116, %117 : vector<8x256xf32>
    %119 = arith.addf %115, %118 : vector<8x256xf32>
    %120 = vector.extract_strided_slice %113 {offsets = [24, 0], sizes = [8, 256], strides = [1, 1]} : vector<32x256xf32> to vector<8x256xf32>
    %121 = math.tanh %119 : vector<8x256xf32>
    %122 = arith.mulf %120, %121 : vector<8x256xf32>
    %c0_45 = arith.constant 0 : index
    %c1280_46 = arith.constant 1280 : index
    %123 = vector.load %arg14[%c0_45, %c1280_46] : memref<8x2048xf32, #tpu.memory_space<vmem>>, vector<8x256xf32>
    tpu.vector_store %arg14[%c0_45, %c1280_46], %122 {strides = array<i32>} : memref<8x2048xf32, #tpu.memory_space<vmem>>, vector<8x256xf32>,
    %c0_47 = arith.constant 0 : index
    %c1536 = arith.constant 1536 : index
    %124 = vector.load %arg13[%c0_47, %c1536] : memref<32x2048xf32, #tpu.memory_space<vmem>>, vector<32x256xf32>
    %cst_48 = arith.constant dense<0.000000e+00> : vector<32x256xf32>
    %125 = tpu.matmul %13, %122, %cst_48 {dimension_numbers = #tpu.dot_dimension_numbers<[1], [0], [0], [1], [0, 0, 1, 1], [], []>} : vector<32x8xf32>, vector<8x256xf32>, vector<32x256xf32> -> vector<32x256xf32>
    %126 = arith.addf %124, %125 : vector<32x256xf32>
    %127 = math.tanh %126 : vector<32x256xf32>
    %cst_49 = arith.constant 1.000000e+00 : f32
    %128 = vector.broadcast %cst_49 : f32 to vector<32x256xf32>
    %129 = arith.addf %127, %128 : vector<32x256xf32>
    %cst_50 = arith.constant 5.000000e-01 : f32
    %130 = vector.broadcast %cst_50 : f32 to vector<32x256xf32>
    %131 = arith.mulf %130, %129 : vector<32x256xf32>
    %132 = vector.extract_strided_slice %131 {offsets = [8, 0], sizes = [8, 256], strides = [1, 1]} : vector<32x256xf32> to vector<8x256xf32>
    %133 = arith.mulf %132, %119 : vector<8x256xf32>
    %134 = vector.extract_strided_slice %131 {offsets = [0, 0], sizes = [8, 256], strides = [1, 1]} : vector<32x256xf32> to vector<8x256xf32>
    %135 = vector.extract_strided_slice %127 {offsets = [16, 0], sizes = [8, 256], strides = [1, 1]} : vector<32x256xf32> to vector<8x256xf32>
    %136 = arith.mulf %134, %135 : vector<8x256xf32>
    %137 = arith.addf %133, %136 : vector<8x256xf32>
    %138 = vector.extract_strided_slice %131 {offsets = [24, 0], sizes = [8, 256], strides = [1, 1]} : vector<32x256xf32> to vector<8x256xf32>
    %139 = math.tanh %137 : vector<8x256xf32>
    %140 = arith.mulf %138, %139 : vector<8x256xf32>
    %c0_51 = arith.constant 0 : index
    %c1536_52 = arith.constant 1536 : index
    %141 = vector.load %arg14[%c0_51, %c1536_52] : memref<8x2048xf32, #tpu.memory_space<vmem>>, vector<8x256xf32>
    tpu.vector_store %arg14[%c0_51, %c1536_52], %140 {strides = array<i32>} : memref<8x2048xf32, #tpu.memory_space<vmem>>, vector<8x256xf32>,
    %c0_53 = arith.constant 0 : index
    %c1792 = arith.constant 1792 : index
    %142 = vector.load %arg13[%c0_53, %c1792] : memref<32x2048xf32, #tpu.memory_space<vmem>>, vector<32x256xf32>
    %cst_54 = arith.constant dense<0.000000e+00> : vector<32x256xf32>
    %143 = tpu.matmul %13, %140, %cst_54 {dimension_numbers = #tpu.dot_dimension_numbers<[1], [0], [0], [1], [0, 0, 1, 1], [], []>} : vector<32x8xf32>, vector<8x256xf32>, vector<32x256xf32> -> vector<32x256xf32>
    %144 = arith.addf %142, %143 : vector<32x256xf32>
    %145 = math.tanh %144 : vector<32x256xf32>
    %cst_55 = arith.constant 1.000000e+00 : f32
    %146 = vector.broadcast %cst_55 : f32 to vector<32x256xf32>
    %147 = arith.addf %145, %146 : vector<32x256xf32>
    %cst_56 = arith.constant 5.000000e-01 : f32
    %148 = vector.broadcast %cst_56 : f32 to vector<32x256xf32>
    %149 = arith.mulf %148, %147 : vector<32x256xf32>
    %150 = vector.extract_strided_slice %149 {offsets = [8, 0], sizes = [8, 256], strides = [1, 1]} : vector<32x256xf32> to vector<8x256xf32>
    %151 = arith.mulf %150, %137 : vector<8x256xf32>
    %152 = vector.extract_strided_slice %149 {offsets = [0, 0], sizes = [8, 256], strides = [1, 1]} : vector<32x256xf32> to vector<8x256xf32>
    %153 = vector.extract_strided_slice %145 {offsets = [16, 0], sizes = [8, 256], strides = [1, 1]} : vector<32x256xf32> to vector<8x256xf32>
    %154 = arith.mulf %152, %153 : vector<8x256xf32>
    %155 = arith.addf %151, %154 : vector<8x256xf32>
    %156 = vector.extract_strided_slice %149 {offsets = [24, 0], sizes = [8, 256], strides = [1, 1]} : vector<32x256xf32> to vector<8x256xf32>
    %157 = math.tanh %155 : vector<8x256xf32>
    %158 = arith.mulf %156, %157 : vector<8x256xf32>
    %c0_57 = arith.constant 0 : index
    %c1792_58 = arith.constant 1792 : index
    %159 = vector.load %arg14[%c0_57, %c1792_58] : memref<8x2048xf32, #tpu.memory_space<vmem>>, vector<8x256xf32>
    tpu.vector_store %arg14[%c0_57, %c1792_58], %158 {strides = array<i32>} : memref<8x2048xf32, #tpu.memory_space<vmem>>, vector<8x256xf32>,
    %c0_59 = arith.constant 0 : index
    %c0_60 = arith.constant 0 : index
    %160 = vector.load %arg8[%c0_59, %c0_60] : memref<8x8xf32, #tpu.memory_space<vmem>>, vector<8x8xf32>
    %c0_61 = arith.constant 0 : index
    %c0_62 = arith.constant 0 : index
    %161 = vector.load %arg14[%c0_61, %c0_62] : memref<8x2048xf32, #tpu.memory_space<vmem>>, vector<8x2048xf32>
    %cst_63 = arith.constant dense<0.000000e+00> : vector<8x2048xf32>
    %162 = tpu.matmul %160, %161, %cst_63 {dimension_numbers = #tpu.dot_dimension_numbers<[1], [0], [0], [1], [0, 0, 1, 1], [], []>} : vector<8x8xf32>, vector<8x2048xf32>, vector<8x2048xf32> -> vector<8x2048xf32>
    %c0_64 = arith.constant 0 : index
    %c0_65 = arith.constant 0 : index
    %163 = vector.load %arg10[%c0_64, %c0_65] : memref<8x1xf32, #tpu.memory_space<vmem>>, vector<8x1xf32>
    %164 = vector.broadcast %163 : vector<8x1xf32> to vector<8x2048xf32>
    %165 = arith.addf %162, %164 : vector<8x2048xf32>
    %c0_66 = arith.constant 0 : index
    %c0_67 = arith.constant 0 : index
    %166 = vector.load %arg15[%c0_66, %c0_67] : memref<8x2048xf32, #tpu.memory_space<vmem>>, vector<8x2048xf32>
    tpu.vector_store %arg15[%c0_66, %c0_67], %165 {strides = array<i32>} : memref<8x2048xf32, #tpu.memory_space<vmem>>, vector<8x2048xf32>,
    %c0_i32_68 = arith.constant 0 : i32
    %167 = tpu.memref_slice %arg18[%c0_i32_68] : memref<2x!tpu.dma_semaphore, #tpu.memory_space<semaphore_mem>> -> memref<1x!tpu.dma_semaphore, #tpu.memory_space<semaphore_mem>>
    %168 = tpu.memref_squeeze %167 : memref<1x!tpu.dma_semaphore, #tpu.memory_space<semaphore_mem>> -> memref<!tpu.dma_semaphore, #tpu.memory_space<semaphore_mem>>
    tpu.wait_dma2 semaphore(%168 : memref<!tpu.dma_semaphore, #tpu.memory_space<semaphore_mem>>) src(%arg4 : memref<256x2048xf32, #tpu.memory_space<any>>) dst(%arg16 : memref<256x2048xf32, #tpu.memory_space<vmem>>)
    %c1_i32_69 = arith.constant 1 : i32
    %169 = tpu.memref_slice %arg18[%c1_i32_69] : memref<2x!tpu.dma_semaphore, #tpu.memory_space<semaphore_mem>> -> memref<1x!tpu.dma_semaphore, #tpu.memory_space<semaphore_mem>>
    %170 = tpu.memref_squeeze %169 : memref<1x!tpu.dma_semaphore, #tpu.memory_space<semaphore_mem>> -> memref<!tpu.dma_semaphore, #tpu.memory_space<semaphore_mem>>
    tpu.wait_dma2 semaphore(%170 : memref<!tpu.dma_semaphore, #tpu.memory_space<semaphore_mem>>) src(%arg6 : memref<512x256xf32, #tpu.memory_space<any>>) dst(%arg17 : memref<512x256xf32, #tpu.memory_space<vmem>>)
    %c0_70 = arith.constant 0 : index
    %c0_71 = arith.constant 0 : index
    %171 = vector.load %arg16[%c0_70, %c0_71] : memref<256x2048xf32, #tpu.memory_space<vmem>>, vector<256x2048xf32>
    %cst_72 = arith.constant dense<0.000000e+00> : vector<8x2048xf32>
    %172 = tpu.matmul %155, %171, %cst_72 {dimension_numbers = #tpu.dot_dimension_numbers<[1], [0], [0], [1], [0, 0, 1, 1], [], []>} : vector<8x256xf32>, vector<256x2048xf32>, vector<8x2048xf32> -> vector<8x2048xf32>
    %c0_73 = arith.constant 0 : index
    %c0_74 = arith.constant 0 : index
    %173 = vector.load %arg5[%c0_73, %c0_74] : memref<1x512xf32, #tpu.memory_space<vmem>>, vector<1x512xf32>
    %174 = vector.extract_strided_slice %172 {offsets = [0, 0], sizes = [1, 512], strides = [1, 1]} : vector<8x2048xf32> to vector<1x512xf32>
    %175 = arith.addf %173, %174 : vector<1x512xf32>
    %176 = vector.extract_strided_slice %172 {offsets = [1, 512], sizes = [1, 512], strides = [1, 1]} : vector<8x2048xf32> to vector<1x512xf32>
    %177 = arith.addf %175, %176 : vector<1x512xf32>
    %178 = vector.extract_strided_slice %172 {offsets = [2, 1024], sizes = [1, 512], strides = [1, 1]} : vector<8x2048xf32> to vector<1x512xf32>
    %179 = arith.addf %177, %178 : vector<1x512xf32>
    %180 = vector.extract_strided_slice %172 {offsets = [3, 1536], sizes = [1, 512], strides = [1, 1]} : vector<8x2048xf32> to vector<1x512xf32>
    %181 = arith.addf %179, %180 : vector<1x512xf32>
    %cst_75 = arith.constant 0.000000e+00 : f32
    %182 = vector.broadcast %cst_75 : f32 to vector<1x512xf32>
    %183 = arith.maximumf %181, %182 : vector<1x512xf32>
    %184 = vector.shape_cast %183 : vector<1x512xf32> to vector<1x512xf32>
    %185 = vector.broadcast %184 : vector<1x512xf32> to vector<8x512xf32>
    %c0_76 = arith.constant 0 : index
    %c0_77 = arith.constant 0 : index
    %186 = vector.load %arg17[%c0_76, %c0_77] : memref<512x256xf32, #tpu.memory_space<vmem>>, vector<512x256xf32>
    %cst_78 = arith.constant dense<0.000000e+00> : vector<8x256xf32>
    %187 = tpu.matmul %185, %186, %cst_78 {dimension_numbers = #tpu.dot_dimension_numbers<[1], [0], [0], [1], [0, 0, 1, 1], [], []>} : vector<8x512xf32>, vector<512x256xf32>, vector<8x256xf32> -> vector<8x256xf32>
    %c0_79 = arith.constant 0 : index
    %c0_80 = arith.constant 0 : index
    %188 = vector.load %arg7[%c0_79, %c0_80] : memref<1x256xf32, #tpu.memory_space<vmem>>, vector<1x256xf32>
    %189 = vector.broadcast %188 : vector<1x256xf32> to vector<8x256xf32>
    %190 = arith.addf %187, %189 : vector<8x256xf32>
    %191 = vector.extract_strided_slice %190 {offsets = [0, 0], sizes = [1, 256], strides = [1, 1]} : vector<8x256xf32> to vector<1x256xf32>
    %c0_81 = arith.constant 0 : index
    %c0_82 = arith.constant 0 : index
    %192 = vector.load %arg9[%c0_81, %c0_82] : memref<8x1xf32, #tpu.memory_space<vmem>>, vector<8x1xf32>
    %c0_83 = arith.constant 0 : index
    %c0_84 = arith.constant 0 : index
    %193 = vector.load %arg11[%c0_83, %c0_84] : memref<1x256xf32, #tpu.memory_space<vmem>>, vector<1x256xf32>
    %194 = tpu.iota {dimensions = array<i32: 0>} : vector<8x256xi32>
    %cst_85 = arith.constant 0.000000e+00 : f32
    %195 = vector.broadcast %cst_85 : f32 to vector<8x256xf32>
    %c0_86 = arith.constant 0 : index
    %c0_87 = arith.constant 0 : index
    %196 = vector.load %arg15[%c0_86, %c0_87] : memref<8x2048xf32, #tpu.memory_space<vmem>>, vector<8x256xf32>
    %197 = vector.broadcast %192 : vector<8x1xf32> to vector<8x256xf32>
    %198 = vector.broadcast %193 : vector<1x256xf32> to vector<8x256xf32>
    %199 = arith.mulf %197, %198 : vector<8x256xf32>
    %200 = arith.addf %196, %199 : vector<8x256xf32>
    %201 = math.tanh %200 : vector<8x256xf32>
    %cst_88 = arith.constant 1.000000e+00 : f32
    %202 = vector.broadcast %cst_88 : f32 to vector<8x256xf32>
    %203 = arith.addf %201, %202 : vector<8x256xf32>
    %cst_89 = arith.constant 5.000000e-01 : f32
    %204 = vector.broadcast %cst_89 : f32 to vector<8x256xf32>
    %205 = arith.mulf %204, %203 : vector<8x256xf32>
    %206 = vector.extract_strided_slice %205 {offsets = [1, 0], sizes = [1, 256], strides = [1, 1]} : vector<8x256xf32> to vector<1x256xf32>
    %207 = arith.mulf %206, %191 : vector<1x256xf32>
    %208 = vector.extract_strided_slice %205 {offsets = [0, 0], sizes = [1, 256], strides = [1, 1]} : vector<8x256xf32> to vector<1x256xf32>
    %209 = vector.extract_strided_slice %201 {offsets = [2, 0], sizes = [1, 256], strides = [1, 1]} : vector<8x256xf32> to vector<1x256xf32>
    %210 = arith.mulf %208, %209 : vector<1x256xf32>
    %211 = arith.addf %207, %210 : vector<1x256xf32>
    %212 = vector.extract_strided_slice %205 {offsets = [3, 0], sizes = [1, 256], strides = [1, 1]} : vector<8x256xf32> to vector<1x256xf32>
    %213 = math.tanh %211 : vector<1x256xf32>
    %214 = arith.mulf %212, %213 : vector<1x256xf32>
    %c0_i32_90 = arith.constant 0 : i32
    %215 = vector.broadcast %c0_i32_90 : i32 to vector<8x256xi32>
    %216 = arith.cmpi eq, %194, %215 : vector<8x256xi32>
    %217 = vector.shape_cast %214 : vector<1x256xf32> to vector<1x256xf32>
    %218 = vector.broadcast %217 : vector<1x256xf32> to vector<8x256xf32>
    %219 = arith.select %216, %218, %195 : vector<8x256xi1>, vector<8x256xf32>
    %c0_91 = arith.constant 0 : index
    %c256_92 = arith.constant 256 : index
    %220 = vector.load %arg15[%c0_91, %c256_92] : memref<8x2048xf32, #tpu.memory_space<vmem>>, vector<8x256xf32>
    %221 = vector.broadcast %192 : vector<8x1xf32> to vector<8x256xf32>
    %222 = vector.broadcast %214 : vector<1x256xf32> to vector<8x256xf32>
    %223 = arith.mulf %221, %222 : vector<8x256xf32>
    %224 = arith.addf %220, %223 : vector<8x256xf32>
    %225 = math.tanh %224 : vector<8x256xf32>
    %cst_93 = arith.constant 1.000000e+00 : f32
    %226 = vector.broadcast %cst_93 : f32 to vector<8x256xf32>
    %227 = arith.addf %225, %226 : vector<8x256xf32>
    %cst_94 = arith.constant 5.000000e-01 : f32
    %228 = vector.broadcast %cst_94 : f32 to vector<8x256xf32>
    %229 = arith.mulf %228, %227 : vector<8x256xf32>
    %230 = vector.extract_strided_slice %229 {offsets = [1, 0], sizes = [1, 256], strides = [1, 1]} : vector<8x256xf32> to vector<1x256xf32>
    %231 = arith.mulf %230, %211 : vector<1x256xf32>
    %232 = vector.extract_strided_slice %229 {offsets = [0, 0], sizes = [1, 256], strides = [1, 1]} : vector<8x256xf32> to vector<1x256xf32>
    %233 = vector.extract_strided_slice %225 {offsets = [2, 0], sizes = [1, 256], strides = [1, 1]} : vector<8x256xf32> to vector<1x256xf32>
    %234 = arith.mulf %232, %233 : vector<1x256xf32>
    %235 = arith.addf %231, %234 : vector<1x256xf32>
    %236 = vector.extract_strided_slice %229 {offsets = [3, 0], sizes = [1, 256], strides = [1, 1]} : vector<8x256xf32> to vector<1x256xf32>
    %237 = math.tanh %235 : vector<1x256xf32>
    %238 = arith.mulf %236, %237 : vector<1x256xf32>
    %c1_i32_95 = arith.constant 1 : i32
    %239 = vector.broadcast %c1_i32_95 : i32 to vector<8x256xi32>
    %240 = arith.cmpi eq, %194, %239 : vector<8x256xi32>
    %241 = vector.shape_cast %238 : vector<1x256xf32> to vector<1x256xf32>
    %242 = vector.broadcast %241 : vector<1x256xf32> to vector<8x256xf32>
    %243 = arith.select %240, %242, %219 : vector<8x256xi1>, vector<8x256xf32>
    %c0_96 = arith.constant 0 : index
    %c512_97 = arith.constant 512 : index
    %244 = vector.load %arg15[%c0_96, %c512_97] : memref<8x2048xf32, #tpu.memory_space<vmem>>, vector<8x256xf32>
    %245 = vector.broadcast %192 : vector<8x1xf32> to vector<8x256xf32>
    %246 = vector.broadcast %238 : vector<1x256xf32> to vector<8x256xf32>
    %247 = arith.mulf %245, %246 : vector<8x256xf32>
    %248 = arith.addf %244, %247 : vector<8x256xf32>
    %249 = math.tanh %248 : vector<8x256xf32>
    %cst_98 = arith.constant 1.000000e+00 : f32
    %250 = vector.broadcast %cst_98 : f32 to vector<8x256xf32>
    %251 = arith.addf %249, %250 : vector<8x256xf32>
    %cst_99 = arith.constant 5.000000e-01 : f32
    %252 = vector.broadcast %cst_99 : f32 to vector<8x256xf32>
    %253 = arith.mulf %252, %251 : vector<8x256xf32>
    %254 = vector.extract_strided_slice %253 {offsets = [1, 0], sizes = [1, 256], strides = [1, 1]} : vector<8x256xf32> to vector<1x256xf32>
    %255 = arith.mulf %254, %235 : vector<1x256xf32>
    %256 = vector.extract_strided_slice %253 {offsets = [0, 0], sizes = [1, 256], strides = [1, 1]} : vector<8x256xf32> to vector<1x256xf32>
    %257 = vector.extract_strided_slice %249 {offsets = [2, 0], sizes = [1, 256], strides = [1, 1]} : vector<8x256xf32> to vector<1x256xf32>
    %258 = arith.mulf %256, %257 : vector<1x256xf32>
    %259 = arith.addf %255, %258 : vector<1x256xf32>
    %260 = vector.extract_strided_slice %253 {offsets = [3, 0], sizes = [1, 256], strides = [1, 1]} : vector<8x256xf32> to vector<1x256xf32>
    %261 = math.tanh %259 : vector<1x256xf32>
    %262 = arith.mulf %260, %261 : vector<1x256xf32>
    %c2_i32 = arith.constant 2 : i32
    %263 = vector.broadcast %c2_i32 : i32 to vector<8x256xi32>
    %264 = arith.cmpi eq, %194, %263 : vector<8x256xi32>
    %265 = vector.shape_cast %262 : vector<1x256xf32> to vector<1x256xf32>
    %266 = vector.broadcast %265 : vector<1x256xf32> to vector<8x256xf32>
    %267 = arith.select %264, %266, %243 : vector<8x256xi1>, vector<8x256xf32>
    %c0_100 = arith.constant 0 : index
    %c768_101 = arith.constant 768 : index
    %268 = vector.load %arg15[%c0_100, %c768_101] : memref<8x2048xf32, #tpu.memory_space<vmem>>, vector<8x256xf32>
    %269 = vector.broadcast %192 : vector<8x1xf32> to vector<8x256xf32>
    %270 = vector.broadcast %262 : vector<1x256xf32> to vector<8x256xf32>
    %271 = arith.mulf %269, %270 : vector<8x256xf32>
    %272 = arith.addf %268, %271 : vector<8x256xf32>
    %273 = math.tanh %272 : vector<8x256xf32>
    %cst_102 = arith.constant 1.000000e+00 : f32
    %274 = vector.broadcast %cst_102 : f32 to vector<8x256xf32>
    %275 = arith.addf %273, %274 : vector<8x256xf32>
    %cst_103 = arith.constant 5.000000e-01 : f32
    %276 = vector.broadcast %cst_103 : f32 to vector<8x256xf32>
    %277 = arith.mulf %276, %275 : vector<8x256xf32>
    %278 = vector.extract_strided_slice %277 {offsets = [1, 0], sizes = [1, 256], strides = [1, 1]} : vector<8x256xf32> to vector<1x256xf32>
    %279 = arith.mulf %278, %259 : vector<1x256xf32>
    %280 = vector.extract_strided_slice %277 {offsets = [0, 0], sizes = [1, 256], strides = [1, 1]} : vector<8x256xf32> to vector<1x256xf32>
    %281 = vector.extract_strided_slice %273 {offsets = [2, 0], sizes = [1, 256], strides = [1, 1]} : vector<8x256xf32> to vector<1x256xf32>
    %282 = arith.mulf %280, %281 : vector<1x256xf32>
    %283 = arith.addf %279, %282 : vector<1x256xf32>
    %284 = vector.extract_strided_slice %277 {offsets = [3, 0], sizes = [1, 256], strides = [1, 1]} : vector<8x256xf32> to vector<1x256xf32>
    %285 = math.tanh %283 : vector<1x256xf32>
    %286 = arith.mulf %284, %285 : vector<1x256xf32>
    %c3_i32 = arith.constant 3 : i32
    %287 = vector.broadcast %c3_i32 : i32 to vector<8x256xi32>
    %288 = arith.cmpi eq, %194, %287 : vector<8x256xi32>
    %289 = vector.shape_cast %286 : vector<1x256xf32> to vector<1x256xf32>
    %290 = vector.broadcast %289 : vector<1x256xf32> to vector<8x256xf32>
    %291 = arith.select %288, %290, %267 : vector<8x256xi1>, vector<8x256xf32>
    %c0_104 = arith.constant 0 : index
    %c1024_105 = arith.constant 1024 : index
    %292 = vector.load %arg15[%c0_104, %c1024_105] : memref<8x2048xf32, #tpu.memory_space<vmem>>, vector<8x256xf32>
    %293 = vector.broadcast %192 : vector<8x1xf32> to vector<8x256xf32>
    %294 = vector.broadcast %286 : vector<1x256xf32> to vector<8x256xf32>
    %295 = arith.mulf %293, %294 : vector<8x256xf32>
    %296 = arith.addf %292, %295 : vector<8x256xf32>
    %297 = math.tanh %296 : vector<8x256xf32>
    %cst_106 = arith.constant 1.000000e+00 : f32
    %298 = vector.broadcast %cst_106 : f32 to vector<8x256xf32>
    %299 = arith.addf %297, %298 : vector<8x256xf32>
    %cst_107 = arith.constant 5.000000e-01 : f32
    %300 = vector.broadcast %cst_107 : f32 to vector<8x256xf32>
    %301 = arith.mulf %300, %299 : vector<8x256xf32>
    %302 = vector.extract_strided_slice %301 {offsets = [1, 0], sizes = [1, 256], strides = [1, 1]} : vector<8x256xf32> to vector<1x256xf32>
    %303 = arith.mulf %302, %283 : vector<1x256xf32>
    %304 = vector.extract_strided_slice %301 {offsets = [0, 0], sizes = [1, 256], strides = [1, 1]} : vector<8x256xf32> to vector<1x256xf32>
    %305 = vector.extract_strided_slice %297 {offsets = [2, 0], sizes = [1, 256], strides = [1, 1]} : vector<8x256xf32> to vector<1x256xf32>
    %306 = arith.mulf %304, %305 : vector<1x256xf32>
    %307 = arith.addf %303, %306 : vector<1x256xf32>
    %308 = vector.extract_strided_slice %301 {offsets = [3, 0], sizes = [1, 256], strides = [1, 1]} : vector<8x256xf32> to vector<1x256xf32>
    %309 = math.tanh %307 : vector<1x256xf32>
    %310 = arith.mulf %308, %309 : vector<1x256xf32>
    %c4_i32 = arith.constant 4 : i32
    %311 = vector.broadcast %c4_i32 : i32 to vector<8x256xi32>
    %312 = arith.cmpi eq, %194, %311 : vector<8x256xi32>
    %313 = vector.shape_cast %310 : vector<1x256xf32> to vector<1x256xf32>
    %314 = vector.broadcast %313 : vector<1x256xf32> to vector<8x256xf32>
    %315 = arith.select %312, %314, %291 : vector<8x256xi1>, vector<8x256xf32>
    %c0_108 = arith.constant 0 : index
    %c1280_109 = arith.constant 1280 : index
    %316 = vector.load %arg15[%c0_108, %c1280_109] : memref<8x2048xf32, #tpu.memory_space<vmem>>, vector<8x256xf32>
    %317 = vector.broadcast %192 : vector<8x1xf32> to vector<8x256xf32>
    %318 = vector.broadcast %310 : vector<1x256xf32> to vector<8x256xf32>
    %319 = arith.mulf %317, %318 : vector<8x256xf32>
    %320 = arith.addf %316, %319 : vector<8x256xf32>
    %321 = math.tanh %320 : vector<8x256xf32>
    %cst_110 = arith.constant 1.000000e+00 : f32
    %322 = vector.broadcast %cst_110 : f32 to vector<8x256xf32>
    %323 = arith.addf %321, %322 : vector<8x256xf32>
    %cst_111 = arith.constant 5.000000e-01 : f32
    %324 = vector.broadcast %cst_111 : f32 to vector<8x256xf32>
    %325 = arith.mulf %324, %323 : vector<8x256xf32>
    %326 = vector.extract_strided_slice %325 {offsets = [1, 0], sizes = [1, 256], strides = [1, 1]} : vector<8x256xf32> to vector<1x256xf32>
    %327 = arith.mulf %326, %307 : vector<1x256xf32>
    %328 = vector.extract_strided_slice %325 {offsets = [0, 0], sizes = [1, 256], strides = [1, 1]} : vector<8x256xf32> to vector<1x256xf32>
    %329 = vector.extract_strided_slice %321 {offsets = [2, 0], sizes = [1, 256], strides = [1, 1]} : vector<8x256xf32> to vector<1x256xf32>
    %330 = arith.mulf %328, %329 : vector<1x256xf32>
    %331 = arith.addf %327, %330 : vector<1x256xf32>
    %332 = vector.extract_strided_slice %325 {offsets = [3, 0], sizes = [1, 256], strides = [1, 1]} : vector<8x256xf32> to vector<1x256xf32>
    %333 = math.tanh %331 : vector<1x256xf32>
    %334 = arith.mulf %332, %333 : vector<1x256xf32>
    %c5_i32 = arith.constant 5 : i32
    %335 = vector.broadcast %c5_i32 : i32 to vector<8x256xi32>
    %336 = arith.cmpi eq, %194, %335 : vector<8x256xi32>
    %337 = vector.shape_cast %334 : vector<1x256xf32> to vector<1x256xf32>
    %338 = vector.broadcast %337 : vector<1x256xf32> to vector<8x256xf32>
    %339 = arith.select %336, %338, %315 : vector<8x256xi1>, vector<8x256xf32>
    %c0_112 = arith.constant 0 : index
    %c1536_113 = arith.constant 1536 : index
    %340 = vector.load %arg15[%c0_112, %c1536_113] : memref<8x2048xf32, #tpu.memory_space<vmem>>, vector<8x256xf32>
    %341 = vector.broadcast %192 : vector<8x1xf32> to vector<8x256xf32>
    %342 = vector.broadcast %334 : vector<1x256xf32> to vector<8x256xf32>
    %343 = arith.mulf %341, %342 : vector<8x256xf32>
    %344 = arith.addf %340, %343 : vector<8x256xf32>
    %345 = math.tanh %344 : vector<8x256xf32>
    %cst_114 = arith.constant 1.000000e+00 : f32
    %346 = vector.broadcast %cst_114 : f32 to vector<8x256xf32>
    %347 = arith.addf %345, %346 : vector<8x256xf32>
    %cst_115 = arith.constant 5.000000e-01 : f32
    %348 = vector.broadcast %cst_115 : f32 to vector<8x256xf32>
    %349 = arith.mulf %348, %347 : vector<8x256xf32>
    %350 = vector.extract_strided_slice %349 {offsets = [1, 0], sizes = [1, 256], strides = [1, 1]} : vector<8x256xf32> to vector<1x256xf32>
    %351 = arith.mulf %350, %331 : vector<1x256xf32>
    %352 = vector.extract_strided_slice %349 {offsets = [0, 0], sizes = [1, 256], strides = [1, 1]} : vector<8x256xf32> to vector<1x256xf32>
    %353 = vector.extract_strided_slice %345 {offsets = [2, 0], sizes = [1, 256], strides = [1, 1]} : vector<8x256xf32> to vector<1x256xf32>
    %354 = arith.mulf %352, %353 : vector<1x256xf32>
    %355 = arith.addf %351, %354 : vector<1x256xf32>
    %356 = vector.extract_strided_slice %349 {offsets = [3, 0], sizes = [1, 256], strides = [1, 1]} : vector<8x256xf32> to vector<1x256xf32>
    %357 = math.tanh %355 : vector<1x256xf32>
    %358 = arith.mulf %356, %357 : vector<1x256xf32>
    %c6_i32 = arith.constant 6 : i32
    %359 = vector.broadcast %c6_i32 : i32 to vector<8x256xi32>
    %360 = arith.cmpi eq, %194, %359 : vector<8x256xi32>
    %361 = vector.shape_cast %358 : vector<1x256xf32> to vector<1x256xf32>
    %362 = vector.broadcast %361 : vector<1x256xf32> to vector<8x256xf32>
    %363 = arith.select %360, %362, %339 : vector<8x256xi1>, vector<8x256xf32>
    %c0_116 = arith.constant 0 : index
    %c1792_117 = arith.constant 1792 : index
    %364 = vector.load %arg15[%c0_116, %c1792_117] : memref<8x2048xf32, #tpu.memory_space<vmem>>, vector<8x256xf32>
    %365 = vector.broadcast %192 : vector<8x1xf32> to vector<8x256xf32>
    %366 = vector.broadcast %358 : vector<1x256xf32> to vector<8x256xf32>
    %367 = arith.mulf %365, %366 : vector<8x256xf32>
    %368 = arith.addf %364, %367 : vector<8x256xf32>
    %369 = math.tanh %368 : vector<8x256xf32>
    %cst_118 = arith.constant 1.000000e+00 : f32
    %370 = vector.broadcast %cst_118 : f32 to vector<8x256xf32>
    %371 = arith.addf %369, %370 : vector<8x256xf32>
    %cst_119 = arith.constant 5.000000e-01 : f32
    %372 = vector.broadcast %cst_119 : f32 to vector<8x256xf32>
    %373 = arith.mulf %372, %371 : vector<8x256xf32>
    %374 = vector.extract_strided_slice %373 {offsets = [1, 0], sizes = [1, 256], strides = [1, 1]} : vector<8x256xf32> to vector<1x256xf32>
    %375 = arith.mulf %374, %355 : vector<1x256xf32>
    %376 = vector.extract_strided_slice %373 {offsets = [0, 0], sizes = [1, 256], strides = [1, 1]} : vector<8x256xf32> to vector<1x256xf32>
    %377 = vector.extract_strided_slice %369 {offsets = [2, 0], sizes = [1, 256], strides = [1, 1]} : vector<8x256xf32> to vector<1x256xf32>
    %378 = arith.mulf %376, %377 : vector<1x256xf32>
    %379 = arith.addf %375, %378 : vector<1x256xf32>
    %380 = vector.extract_strided_slice %373 {offsets = [3, 0], sizes = [1, 256], strides = [1, 1]} : vector<8x256xf32> to vector<1x256xf32>
    %381 = math.tanh %379 : vector<1x256xf32>
    %382 = arith.mulf %380, %381 : vector<1x256xf32>
    %c7_i32 = arith.constant 7 : i32
    %383 = vector.broadcast %c7_i32 : i32 to vector<8x256xi32>
    %384 = arith.cmpi eq, %194, %383 : vector<8x256xi32>
    %385 = vector.shape_cast %382 : vector<1x256xf32> to vector<1x256xf32>
    %386 = vector.broadcast %385 : vector<1x256xf32> to vector<8x256xf32>
    %387 = arith.select %384, %386, %363 : vector<8x256xi1>, vector<8x256xf32>
    %c0_120 = arith.constant 0 : index
    %c0_121 = arith.constant 0 : index
    %388 = vector.load %arg12[%c0_120, %c0_121] : memref<8x256xf32, #tpu.memory_space<vmem>>, vector<8x256xf32>
    tpu.vector_store %arg12[%c0_120, %c0_121], %387 {strides = array<i32>} : memref<8x256xf32, #tpu.memory_space<vmem>>, vector<8x256xf32>,
    return
  }
}

</mosaic_0001>

<llo_original>
// kernel: lstm_simp_forward.1
$region0: #{lstm_simp_forward.1}
  #allocation0 [shape = 'u32[]', space=smem, size = 0x4, offset = 0x4, fixed_abs, tag = 'smem constant byte address 0x4 - core index']
  #allocation1 [shape = 'u32[72,128]{1,0:T(1,128)}', space=vmem, size = 0x9000, scoped, tag = 'internal scratch']
  #allocation2 [shape = 'f32[32,2048]{1,0:T(8,128)}', space=vmem, size = 0x40000, scoped, tag = 'scratch operand']
  #allocation3 [shape = 'f32[8,2048]{1,0:T(8,128)}', space=vmem, size = 0x10000, scoped, tag = 'scratch operand']
  #allocation4 [shape = 'f32[8,2048]{1,0:T(8,128)}', space=vmem, size = 0x10000, scoped, tag = 'scratch operand']
  #allocation5 [shape = 'f32[256,2048]{1,0:T(8,128)}', space=vmem, size = 0x200000, scoped, tag = 'scratch operand']
  #allocation6 [shape = 'f32[512,256]{1,0:T(8,128)}', space=vmem, size = 0x80000, scoped, tag = 'scratch operand']
  #allocation7 [shape = 's32[2]{0}', space=sflag, size = 0x8, scoped, tag = 'scratch operand']
  #allocation15 [shape = 's32[]', space=sflag, size = 0x4, offset = 0, fixed_abs, tag = 'sflag constant byte address 0x0 - dummy sync flag']
  #allocation16 [shape = 's32[]', space=sflag, size = 0x4, offset = 0, fixed_abs, tag = 'sflag constant byte address 0x0 - dummy sync flag']
  #allocation17 [shape = 'u32[]', space=smem, size = 0x4, offset = 0x44, fixed_abs, tag = 'smem constant byte address 0x44 - assertion arg 0']
  #allocation18 [shape = 'u32[]', space=smem, size = 0x4, offset = 0x48, fixed_abs, tag = 'smem constant byte address 0x48 - assertion arg 1']
  #allocation19 [shape = 's32[]', space=sflag, size = 0x4, offset = 0, fixed_abs, tag = 'sflag constant byte address 0x0 - dummy sync flag']
  #allocation20 [shape = 's32[]', space=sflag, size = 0x4, offset = 0, fixed_abs, tag = 'sflag constant byte address 0x0 - dummy sync flag']
  %s0 = inlined_call_operand.vmem [shape: f32[1,2048], index: 0, kind: input, shape index: {}]
  %s1 = inlined_call_operand.vmem [shape: f32[32,1], index: 1, kind: input, shape index: {}]
  %s2 = inlined_call_operand.vmem [shape: f32[32,8], index: 2, kind: input, shape index: {}]
  %s3 = inlined_call_operand.vmem [shape: f32[32,1], index: 3, kind: input, shape index: {}]
  %s4 = inlined_call_operand.hbm [shape: f32[256,2048], index: 4, kind: input, shape index: {}]
  %s5 = inlined_call_operand.hbm [shape: f32[1,512], index: 5, kind: input, shape index: {}]
  %s6 = inlined_call_operand.hbm [shape: f32[512,256], index: 6, kind: input, shape index: {}]
  %s7 = inlined_call_operand.hbm [shape: f32[1,256], index: 7, kind: input, shape index: {}]
  %s8 = inlined_call_operand.hbm [shape: f32[8,8], index: 8, kind: input, shape index: {}]
  %s9 = inlined_call_operand.vmem [shape: f32[8,1], index: 9, kind: input, shape index: {}]
  %s10 = inlined_call_operand.vmem [shape: f32[8,1], index: 10, kind: input, shape index: {}]
  %s11 = inlined_call_operand.hbm [shape: f32[1,256], index: 11, kind: input, shape index: {}]
  %s12 = inlined_call_operand.vmem [shape: f32[8,256], index: 12, kind: output, shape index: {}]
  %s13 = sld [smem:[#allocation0]]
  $region74: #{lstm_simp_forward.1} parent=0
    _
  %s15 = ssub.s32 1, %s13
  %s16 = scalar_select 0, %s15, %s13
  $region1: #{lstm_simp_forward.1} parent=0
    #allocation8 [shape = 'u8[2048]{0}', space=vmem, size = 0x800, scoped, tag = 'input window, operand 5, single buffered']
    #allocation9 [shape = 's32[1]{0}', space=sflag, size = 0x4, scoped, tag = 'scoped memory for lstm_simp_forward.1']
    #allocation10 [shape = 'u8[1024]{0}', space=vmem, size = 0x400, scoped, tag = 'input window, operand 7, single buffered']
    #allocation11 [shape = 's32[1]{0}', space=sflag, size = 0x4, scoped, tag = 'scoped memory for lstm_simp_forward.1']
    #allocation12 [shape = 'u8[4096]{0}', space=vmem, size = 0x1000, scoped, tag = 'input window, operand 8, single buffered']
    #allocation13 [shape = 'u8[1024]{0}', space=vmem, size = 0x400, scoped, tag = 'input window, operand 11, single buffered']
    #allocation14 [shape = 's32[1]{0}', space=sflag, size = 0x4, scoped, tag = 'scoped memory for lstm_simp_forward.1']
    %17 = vsyncpa [#allocation9], 0
    %18 = vsyncpa [#allocation11], 0
    %19 = vsyncpa [#allocation14], 0
    // Predicated region
    $region2: #{lstm_simp_forward.1} parent=1 // pred_check
      _
    $region3: #{lstm_simp_forward.1} parent=1 // pred_check_branch
      %21 = sbr.rel (0) target = $region5
    $region4: #{lstm_simp_forward.1} parent=1 // pred_region
      _
    $region5: #{lstm_simp_forward.1} parent=1 // pred_fallthru
      _
    // Predicated region
    $region6: #{lstm_simp_forward.1} parent=1 // pred_check
      _
    $region7: #{lstm_simp_forward.1} parent=1 // pred_check_branch
      %23 = sbr.rel (0) target = $region9
    $region8: #{lstm_simp_forward.1} parent=1 // pred_region
      _
    $region9: #{lstm_simp_forward.1} parent=1 // pred_fallthru
      _
    // Predicated region
    $region10: #{lstm_simp_forward.1} parent=1 // pred_check
      _
    $region11: #{lstm_simp_forward.1} parent=1 // pred_check_branch
      %25 = sbr.rel (0) target = $region13
    $region12: #{lstm_simp_forward.1} parent=1 // pred_region
      _
    $region13: #{lstm_simp_forward.1} parent=1 // pred_fallthru
      _
    // Predicated region
    $region14: #{lstm_simp_forward.1} parent=1 // pred_check
      _
    $region15: #{lstm_simp_forward.1} parent=1 // pred_check_branch
      %27 = sbr.rel (0) target = $region17
    $region16: #{lstm_simp_forward.1} parent=1 // pred_region
      _
    $region17: #{lstm_simp_forward.1} parent=1 // pred_fallthru
      _
    // Predicated region
    $region18: #{lstm_simp_forward.1} parent=1 // pred_check
      _
    $region19: #{lstm_simp_forward.1} parent=1 // pred_check_branch
      %29 = sbr.rel (0) target = $region21
    $region20: #{lstm_simp_forward.1} parent=1 // pred_region
      %31 = vsyncadd [#allocation9], 0
      %s33 = sshll.u32 %s5, 4
      %s34 = int_to_ptr.hbm [resolvable:$true] %s33
      %s35 = sshll.u32 [#allocation8], 4
      %s36 = int_to_ptr.vmem [resolvable:$true] %s35
      %38 = dma.hbm_to_vmem [thread:$0]  %s34, 64, %s36, [#allocation9]
    $region21: #{lstm_simp_forward.1} parent=1 // pred_fallthru
      _
    // Predicated region
    $region22: #{lstm_simp_forward.1} parent=1 // pred_check
      _
    $region23: #{lstm_simp_forward.1} parent=1 // pred_check_branch
      %40 = sbr.rel (0) target = $region25
    $region24: #{lstm_simp_forward.1} parent=1 // pred_region
      %42 = vsyncadd [#allocation11], 0
      %s44 = sshll.u32 %s7, 4
      %s45 = int_to_ptr.hbm [resolvable:$true] %s44
      %s46 = sshll.u32 [#allocation10], 4
      %s47 = int_to_ptr.vmem [resolvable:$true] %s46
      %49 = dma.hbm_to_vmem [thread:$0]  %s45, 32, %s47, [#allocation11]
    $region25: #{lstm_simp_forward.1} parent=1 // pred_fallthru
      _
    // Predicated region
    $region26: #{lstm_simp_forward.1} parent=1 // pred_check
      _
    $region27: #{lstm_simp_forward.1} parent=1 // pred_check_branch
      %51 = sbr.rel (0) target = $region29
    $region28: #{lstm_simp_forward.1} parent=1 // pred_region
      %53 = vsyncadd [#allocation11], 0
      %s55 = sshll.u32 %s8, 4
      %s56 = int_to_ptr.hbm [resolvable:$true] %s55
      %s57 = sshll.u32 [#allocation12], 4
      %s58 = int_to_ptr.vmem [resolvable:$true] %s57
      %60 = dma.hbm_to_vmem [thread:$0]  %s56, 128, %s58, [#allocation11]
    $region29: #{lstm_simp_forward.1} parent=1 // pred_fallthru
      _
    // Predicated region
    $region30: #{lstm_simp_forward.1} parent=1 // pred_check
      _
    $region31: #{lstm_simp_forward.1} parent=1 // pred_check_branch
      %62 = sbr.rel (0) target = $region33
    $region32: #{lstm_simp_forward.1} parent=1 // pred_region
      _
    $region33: #{lstm_simp_forward.1} parent=1 // pred_fallthru
      _
    // Predicated region
    $region34: #{lstm_simp_forward.1} parent=1 // pred_check
      _
    $region35: #{lstm_simp_forward.1} parent=1 // pred_check_branch
      %64 = sbr.rel (0) target = $region37
    $region36: #{lstm_simp_forward.1} parent=1 // pred_region
      _
    $region37: #{lstm_simp_forward.1} parent=1 // pred_fallthru
      _
    // Predicated region
    $region38: #{lstm_simp_forward.1} parent=1 // pred_check
      _
    $region39: #{lstm_simp_forward.1} parent=1 // pred_check_branch
      %66 = sbr.rel (0) target = $region41
    $region40: #{lstm_simp_forward.1} parent=1 // pred_region
      %68 = vsyncadd [#allocation14], 0
      %s70 = sshll.u32 %s11, 4
      %s71 = int_to_ptr.hbm [resolvable:$true] %s70
      %s72 = sshll.u32 [#allocation13], 4
      %s73 = int_to_ptr.vmem [resolvable:$true] %s72
      %75 = dma.hbm_to_vmem [thread:$0]  %s71, 32, %s73, [#allocation14]
    $region41: #{lstm_simp_forward.1} parent=1 // pred_fallthru
      _
    // Predicated region
    $region42: #{lstm_simp_forward.1} parent=1 // pred_check
      _
    $region43: #{lstm_simp_forward.1} parent=1 // pred_check_branch
      %77 = sbr.rel (0) target = $region45
    $region44: #{lstm_simp_forward.1} parent=1 // pred_region
      %79 = dma.done [#allocation9], 64
    $region45: #{lstm_simp_forward.1} parent=1 // pred_fallthru
      _
    // Predicated region
    $region46: #{lstm_simp_forward.1} parent=1 // pred_check
      _
    $region47: #{lstm_simp_forward.1} parent=1 // pred_check_branch
      %81 = sbr.rel (0) target = $region49
    $region48: #{lstm_simp_forward.1} parent=1 // pred_region
      %83 = dma.done [#allocation11], 32
    $region49: #{lstm_simp_forward.1} parent=1 // pred_fallthru
      _
    // Predicated region
    $region50: #{lstm_simp_forward.1} parent=1 // pred_check
      _
    $region51: #{lstm_simp_forward.1} parent=1 // pred_check_branch
      %85 = sbr.rel (0) target = $region53
    $region52: #{lstm_simp_forward.1} parent=1 // pred_region
      %87 = dma.done [#allocation11], 128
    $region53: #{lstm_simp_forward.1} parent=1 // pred_fallthru
      _
    // Predicated region
    $region54: #{lstm_simp_forward.1} parent=1 // pred_check
      _
    $region55: #{lstm_simp_forward.1} parent=1 // pred_check_branch
      %89 = sbr.rel (0) target = $region57
    $region56: #{lstm_simp_forward.1} parent=1 // pred_region
      %91 = dma.done [#allocation14], 32
    $region57: #{lstm_simp_forward.1} parent=1 // pred_fallthru
      _
    // Predicated region
    $region58: #{lstm_simp_forward.1} parent=1 // pred_check
      _
    $region59: #{lstm_simp_forward.1} parent=1 // pred_check_branch
      %93 = sbr.rel target = $region61
    $region60: #{lstm_simp_forward.1} parent=1 // pred_region
      %94 = sst [smem:[#allocation17]] [#allocation16]
      %95 = sst [smem:[#allocation18]] [#allocation15]
    $region61: #{lstm_simp_forward.1} parent=1 // pred_fallthru
      _
    %97 = shalt.err (0)
    %s99 = sshll.u32 %s4, 4
    %s100 = int_to_ptr.hbm [resolvable:$true] %s99
    %s101 = sshll.u32 [#allocation5], 4
    %s102 = int_to_ptr.vmem [resolvable:$true] %s101
    %104 = dma.hbm_to_vmem [thread:$0]  %s100, 65536, %s102, [#allocation7]
    %s105 = scalar_lea.sflag [#allocation7], 1
    // Predicated region
    $region62: #{lstm_simp_forward.1} parent=1 // pred_check
      _
    $region63: #{lstm_simp_forward.1} parent=1 // pred_check_branch
      %107 = sbr.rel target = $region65
    $region64: #{lstm_simp_forward.1} parent=1 // pred_region
      %108 = sst [smem:[#allocation17]] [#allocation20]
      %109 = sst [smem:[#allocation18]] [#allocation19]
    $region65: #{lstm_simp_forward.1} parent=1 // pred_fallthru
      _
    %111 = shalt.err (0)
    %s113 = sshll.u32 %s6, 4
    %s114 = int_to_ptr.hbm [resolvable:$true] %s113
    %s115 = sshll.u32 [#allocation6], 4
    %s116 = int_to_ptr.vmem [resolvable:$true] %s115
    %118 = dma.hbm_to_vmem [thread:$0]  %s114, 16384, %s116, %s105
    %v119 = vld [vmem:[%s1] sm:$0xff]
    %v120 = vld [vmem:[%s1 + $0x8] sm:$0xff]
    %v121 = vld [vmem:[%s1 + $0x10] sm:$0xff]
    %v122 = vld [vmem:[%s1 + $0x18] sm:$0xff]
    %v123 = vld [vmem:[%s0] sm:$0xff]
    %v124 = vld [vmem:[%s0 + $0x8] sm:$0xff]
    %126 = vset.pattern.permute.xlu0 0
    %127 = vperm.xlu0 %126, %v119
    %v128 = vpop.permute.xlu0 %127
    %131 = vset.pattern.permute.xlu0 0
    %132 = vperm.xlu0 %131, %v120
    %v133 = vpop.permute.xlu0 %132
    %136 = vset.pattern.permute.xlu0 0
    %137 = vperm.xlu0 %136, %v121
    %v138 = vpop.permute.xlu0 %137
    %141 = vset.pattern.permute.xlu0 0
    %142 = vperm.xlu0 %141, %v122
    %v143 = vpop.permute.xlu0 %142
    %v147 = vperm.slane %v123, 0
    %v148 = vperm.slane %v123, 1
    %v149 = vperm.slane %v123, 2
    %v150 = vperm.slane %v123, 3
    %v151 = vperm.slane %v123, 4
    %v152 = vperm.slane %v123, 5
    %v153 = vperm.slane %v123, 6
    %v154 = vperm.slane %v123, 7
    %v155 = vperm.slane %v124, 0
    %v156 = vperm.slane %v124, 1
    %v157 = vperm.slane %v124, 2
    %v158 = vperm.slane %v124, 3
    %v159 = vperm.slane %v124, 4
    %v160 = vperm.slane %v124, 5
    %v161 = vperm.slane %v124, 6
    %v162 = vperm.slane %v124, 7
    %v179 = vmul.f32 %v128, %v147
    %v180 = vmul.f32 %v128, %v148
    %v181 = vmul.f32 %v128, %v149
    %v182 = vmul.f32 %v128, %v150
    %v183 = vmul.f32 %v128, %v151
    %v184 = vmul.f32 %v128, %v152
    %v185 = vmul.f32 %v128, %v153
    %v186 = vmul.f32 %v128, %v154
    %v187 = vmul.f32 %v128, %v155
    %v188 = vmul.f32 %v128, %v156
    %v189 = vmul.f32 %v128, %v157
    %v190 = vmul.f32 %v128, %v158
    %v191 = vmul.f32 %v128, %v159
    %v192 = vmul.f32 %v128, %v160
    %v193 = vmul.f32 %v128, %v161
    %v194 = vmul.f32 %v128, %v162
    %v195 = vmul.f32 %v133, %v147
    %v196 = vmul.f32 %v133, %v148
    %v197 = vmul.f32 %v133, %v149
    %v198 = vmul.f32 %v133, %v150
    %v199 = vmul.f32 %v133, %v151
    %v200 = vmul.f32 %v133, %v152
    %v201 = vmul.f32 %v133, %v153
    %v202 = vmul.f32 %v133, %v154
    %v203 = vmul.f32 %v133, %v155
    %v204 = vmul.f32 %v133, %v156
    %v205 = vmul.f32 %v133, %v157
    %v206 = vmul.f32 %v133, %v158
    %v207 = vmul.f32 %v133, %v159
    %v208 = vmul.f32 %v133, %v160
    %v209 = vmul.f32 %v133, %v161
    %v210 = vmul.f32 %v133, %v162
    %v211 = vmul.f32 %v138, %v147
    %v212 = vmul.f32 %v138, %v148
    %v213 = vmul.f32 %v138, %v149
    %v214 = vmul.f32 %v138, %v150
    %v215 = vmul.f32 %v138, %v151
    %v216 = vmul.f32 %v138, %v152
    %v217 = vmul.f32 %v138, %v153
    %v218 = vmul.f32 %v138, %v154
    %v219 = vmul.f32 %v138, %v155
    %v220 = vmul.f32 %v138, %v156
    %v221 = vmul.f32 %v138, %v157
    %v222 = vmul.f32 %v138, %v158
    %v223 = vmul.f32 %v138, %v159
    %v224 = vmul.f32 %v138, %v160
    %v225 = vmul.f32 %v138, %v161
    %v226 = vmul.f32 %v138, %v162
    %v227 = vmul.f32 %v143, %v147
    %v228 = vmul.f32 %v143, %v148
    %v229 = vmul.f32 %v143, %v149
    %v230 = vmul.f32 %v143, %v150
    %v231 = vmul.f32 %v143, %v151
    %v232 = vmul.f32 %v143, %v152
    %v233 = vmul.f32 %v143, %v153
    %v234 = vmul.f32 %v143, %v154
    %v235 = vmul.f32 %v143, %v155
    %v236 = vmul.f32 %v143, %v156
    %v237 = vmul.f32 %v143, %v157
    %v238 = vmul.f32 %v143, %v158
    %v239 = vmul.f32 %v143, %v159
    %v240 = vmul.f32 %v143, %v160
    %v241 = vmul.f32 %v143, %v161
    %v242 = vmul.f32 %v143, %v162
    %v243 = vld [vmem:[%s3] sm:$0xff]
    %v244 = vld [vmem:[%s3 + $0x8] sm:$0xff]
    %v245 = vld [vmem:[%s3 + $0x10] sm:$0xff]
    %v246 = vld [vmem:[%s3 + $0x18] sm:$0xff]
    %248 = vset.pattern.permute.xlu0 0
    %249 = vperm.xlu0 %248, %v243
    %v250 = vpop.permute.xlu0 %249
    %253 = vset.pattern.permute.xlu0 0
    %254 = vperm.xlu0 %253, %v244
    %v255 = vpop.permute.xlu0 %254
    %258 = vset.pattern.permute.xlu0 0
    %259 = vperm.xlu0 %258, %v245
    %v260 = vpop.permute.xlu0 %259
    %263 = vset.pattern.permute.xlu0 0
    %264 = vperm.xlu0 %263, %v246
    %v265 = vpop.permute.xlu0 %264
    %v267 = vadd.f32 %v179, %v250
    %v268 = vadd.f32 %v180, %v250
    %v269 = vadd.f32 %v181, %v250
    %v270 = vadd.f32 %v182, %v250
    %v271 = vadd.f32 %v183, %v250
    %v272 = vadd.f32 %v184, %v250
    %v273 = vadd.f32 %v185, %v250
    %v274 = vadd.f32 %v186, %v250
    %v275 = vadd.f32 %v187, %v250
    %v276 = vadd.f32 %v188, %v250
    %v277 = vadd.f32 %v189, %v250
    %v278 = vadd.f32 %v190, %v250
    %v279 = vadd.f32 %v191, %v250
    %v280 = vadd.f32 %v192, %v250
    %v281 = vadd.f32 %v193, %v250
    %v282 = vadd.f32 %v194, %v250
    %v283 = vadd.f32 %v195, %v255
    %v284 = vadd.f32 %v196, %v255
    %v285 = vadd.f32 %v197, %v255
    %v286 = vadd.f32 %v198, %v255
    %v287 = vadd.f32 %v199, %v255
    %v288 = vadd.f32 %v200, %v255
    %v289 = vadd.f32 %v201, %v255
    %v290 = vadd.f32 %v202, %v255
    %v291 = vadd.f32 %v203, %v255
    %v292 = vadd.f32 %v204, %v255
    %v293 = vadd.f32 %v205, %v255
    %v294 = vadd.f32 %v206, %v255
    %v295 = vadd.f32 %v207, %v255
    %v296 = vadd.f32 %v208, %v255
    %v297 = vadd.f32 %v209, %v255
    %v298 = vadd.f32 %v210, %v255
    %v299 = vadd.f32 %v211, %v260
    %v300 = vadd.f32 %v212, %v260
    %v301 = vadd.f32 %v213, %v260
    %v302 = vadd.f32 %v214, %v260
    %v303 = vadd.f32 %v215, %v260
    %v304 = vadd.f32 %v216, %v260
    %v305 = vadd.f32 %v217, %v260
    %v306 = vadd.f32 %v218, %v260
    %v307 = vadd.f32 %v219, %v260
    %v308 = vadd.f32 %v220, %v260
    %v309 = vadd.f32 %v221, %v260
    %v310 = vadd.f32 %v222, %v260
    %v311 = vadd.f32 %v223, %v260
    %v312 = vadd.f32 %v224, %v260
    %v313 = vadd.f32 %v225, %v260
    %v314 = vadd.f32 %v226, %v260
    %v315 = vadd.f32 %v227, %v265
    %v316 = vadd.f32 %v228, %v265
    %v317 = vadd.f32 %v229, %v265
    %v318 = vadd.f32 %v230, %v265
    %v319 = vadd.f32 %v231, %v265
    %v320 = vadd.f32 %v232, %v265
    %v321 = vadd.f32 %v233, %v265
    %v322 = vadd.f32 %v234, %v265
    %v323 = vadd.f32 %v235, %v265
    %v324 = vadd.f32 %v236, %v265
    %v325 = vadd.f32 %v237, %v265
    %v326 = vadd.f32 %v238, %v265
    %v327 = vadd.f32 %v239, %v265
    %v328 = vadd.f32 %v240, %v265
    %v329 = vadd.f32 %v241, %v265
    %v330 = vadd.f32 %v242, %v265
    %331 = vst [vmem:[#allocation2] sm:$0xff] %v267
    %332 = vst [vmem:[#allocation2 + $0x8] sm:$0xff] %v268
    %333 = vst [vmem:[#allocation2 + $0x10] sm:$0xff] %v269
    %334 = vst [vmem:[#allocation2 + $0x18] sm:$0xff] %v270
    %335 = vst [vmem:[#allocation2 + $0x20] sm:$0xff] %v271
    %336 = vst [vmem:[#allocation2 + $0x28] sm:$0xff] %v272
    %337 = vst [vmem:[#allocation2 + $0x30] sm:$0xff] %v273
    %338 = vst [vmem:[#allocation2 + $0x38] sm:$0xff] %v274
    %339 = vst [vmem:[#allocation2 + $0x40] sm:$0xff] %v275
    %340 = vst [vmem:[#allocation2 + $0x48] sm:$0xff] %v276
    %341 = vst [vmem:[#allocation2 + $0x50] sm:$0xff] %v277
    %342 = vst [vmem:[#allocation2 + $0x58] sm:$0xff] %v278
    %343 = vst [vmem:[#allocation2 + $0x60] sm:$0xff] %v279
    %344 = vst [vmem:[#allocation2 + $0x68] sm:$0xff] %v280
    %345 = vst [vmem:[#allocation2 + $0x70] sm:$0xff] %v281
    %346 = vst [vmem:[#allocation2 + $0x78] sm:$0xff] %v282
    %347 = vst [vmem:[#allocation2 + $0x80] sm:$0xff] %v283
    %348 = vst [vmem:[#allocation2 + $0x88] sm:$0xff] %v284
    %349 = vst [vmem:[#allocation2 + $0x90] sm:$0xff] %v285
    %350 = vst [vmem:[#allocation2 + $0x98] sm:$0xff] %v286
    %351 = vst [vmem:[#allocation2 + $0xa0] sm:$0xff] %v287
    %352 = vst [vmem:[#allocation2 + $0xa8] sm:$0xff] %v288
    %353 = vst [vmem:[#allocation2 + $0xb0] sm:$0xff] %v289
    %354 = vst [vmem:[#allocation2 + $0xb8] sm:$0xff] %v290
    %355 = vst [vmem:[#allocation2 + $0xc0] sm:$0xff] %v291
    %356 = vst [vmem:[#allocation2 + $0xc8] sm:$0xff] %v292
    %357 = vst [vmem:[#allocation2 + $0xd0] sm:$0xff] %v293
    %358 = vst [vmem:[#allocation2 + $0xd8] sm:$0xff] %v294
    %359 = vst [vmem:[#allocation2 + $0xe0] sm:$0xff] %v295
    %360 = vst [vmem:[#allocation2 + $0xe8] sm:$0xff] %v296
    %361 = vst [vmem:[#allocation2 + $0xf0] sm:$0xff] %v297
    %362 = vst [vmem:[#allocation2 + $0xf8] sm:$0xff] %v298
    %363 = vst [vmem:[#allocation2 + $0x100] sm:$0xff] %v299
    %364 = vst [vmem:[#allocation2 + $0x108] sm:$0xff] %v300
    %365 = vst [vmem:[#allocation2 + $0x110] sm:$0xff] %v301
    %366 = vst [vmem:[#allocation2 + $0x118] sm:$0xff] %v302
    %367 = vst [vmem:[#allocation2 + $0x120] sm:$0xff] %v303
    %368 = vst [vmem:[#allocation2 + $0x128] sm:$0xff] %v304
    %369 = vst [vmem:[#allocation2 + $0x130] sm:$0xff] %v305
    %370 = vst [vmem:[#allocation2 + $0x138] sm:$0xff] %v306
    %371 = vst [vmem:[#allocation2 + $0x140] sm:$0xff] %v307
    %372 = vst [vmem:[#allocation2 + $0x148] sm:$0xff] %v308
    %373 = vst [vmem:[#allocation2 + $0x150] sm:$0xff] %v309
    %374 = vst [vmem:[#allocation2 + $0x158] sm:$0xff] %v310
    %375 = vst [vmem:[#allocation2 + $0x160] sm:$0xff] %v311
    %376 = vst [vmem:[#allocation2 + $0x168] sm:$0xff] %v312
    %377 = vst [vmem:[#allocation2 + $0x170] sm:$0xff] %v313
    %378 = vst [vmem:[#allocation2 + $0x178] sm:$0xff] %v314
    %379 = vst [vmem:[#allocation2 + $0x180] sm:$0xff] %v315
    %380 = vst [vmem:[#allocation2 + $0x188] sm:$0xff] %v316
    %381 = vst [vmem:[#allocation2 + $0x190] sm:$0xff] %v317
    %382 = vst [vmem:[#allocation2 + $0x198] sm:$0xff] %v318
    %383 = vst [vmem:[#allocation2 + $0x1a0] sm:$0xff] %v319
    %384 = vst [vmem:[#allocation2 + $0x1a8] sm:$0xff] %v320
    %385 = vst [vmem:[#allocation2 + $0x1b0] sm:$0xff] %v321
    %386 = vst [vmem:[#allocation2 + $0x1b8] sm:$0xff] %v322
    %387 = vst [vmem:[#allocation2 + $0x1c0] sm:$0xff] %v323
    %388 = vst [vmem:[#allocation2 + $0x1c8] sm:$0xff] %v324
    %389 = vst [vmem:[#allocation2 + $0x1d0] sm:$0xff] %v325
    %390 = vst [vmem:[#allocation2 + $0x1d8] sm:$0xff] %v326
    %391 = vst [vmem:[#allocation2 + $0x1e0] sm:$0xff] %v327
    %392 = vst [vmem:[#allocation2 + $0x1e8] sm:$0xff] %v328
    %393 = vst [vmem:[#allocation2 + $0x1f0] sm:$0xff] %v329
    %394 = vst [vmem:[#allocation2 + $0x1f8] sm:$0xff] %v330
    %v395 = vld [vmem:[%s2] sm:$0xff]
    %v396 = vld [vmem:[%s2 + $0x8] sm:$0xff]
    %v397 = vld [vmem:[%s2 + $0x10] sm:$0xff]
    %v398 = vld [vmem:[%s2 + $0x18] sm:$0xff]
    %v399 = vld [vmem:[#allocation2] sm:$0xff]
    %v400 = vld [vmem:[#allocation2 + $0x8] sm:$0xff]
    %v401 = vld [vmem:[#allocation2 + $0x80] sm:$0xff]
    %v402 = vld [vmem:[#allocation2 + $0x88] sm:$0xff]
    %v403 = vld [vmem:[#allocation2 + $0x100] sm:$0xff]
    %v404 = vld [vmem:[#allocation2 + $0x108] sm:$0xff]
    %v405 = vld [vmem:[#allocation2 + $0x180] sm:$0xff]
    %v406 = vld [vmem:[#allocation2 + $0x188] sm:$0xff]
    %vm407 = vcmask 64512
    %v409 = vsel %vm407, %v395, 0
    %v412 = vsel %vm407, %v396, 0
    %v415 = vsel %vm407, %v397, 0
    %v418 = vsel %vm407, %v398, 0
    %420 = vmatpush.msra.mxu0 0.0
    %421 = vmatpush.msra.mxu0 0.0
    %422 = vmatpush.msra.mxu0 0.0
    %423 = vmatpush.msra.mxu0 0.0
    %424 = vmatpush.msra.mxu0 0.0
    %425 = vmatpush.msra.mxu0 0.0
    %426 = vmatpush.msra.mxu0 0.0
    %427 = vmatpush.msra.mxu0 0.0
    %428 = vmatpush.msra.mxu0 0.0
    %429 = vmatpush.msra.mxu0 0.0
    %430 = vmatpush.msra.mxu0 0.0
    %431 = vmatpush.msra.mxu0 0.0
    %432 = vmatpush.msra.mxu0 0.0
    %433 = vmatpush.msra.mxu0 0.0
    %434 = vmatpush.msra.mxu0 0.0
    %435 = vmatpush.msra.mxu0 0.0
    %436 = vmatmul.f32.gmra.mxu0 %v409
    %v437 = vpop.f32.mrf.mxu0
    %v438 = vadd.f32 0.0, %v437
    %439 = vmatmul.f32.gmra.mxu0 %v412
    %v440 = vpop.f32.mrf.mxu0
    %v441 = vadd.f32 0.0, %v440
    %442 = vmatmul.f32.gmra.mxu0 %v415
    %v443 = vpop.f32.mrf.mxu0
    %v444 = vadd.f32 0.0, %v443
    %445 = vmatmul.f32.gmra.mxu0 %v418
    %v446 = vpop.f32.mrf.mxu0
    %v447 = vadd.f32 0.0, %v446
    %448 = vdwg.mxu0
    %v449 = vadd.f32 %v399, %v438
    %v450 = vadd.f32 %v400, %v438
    %v451 = vadd.f32 %v401, %v441
    %v452 = vadd.f32 %v402, %v441
    %v453 = vadd.f32 %v403, %v444
    %v454 = vadd.f32 %v404, %v444
    %v455 = vadd.f32 %v405, %v447
    %v456 = vadd.f32 %v406, %v447
    %v457 = vtanh.pop %v449
    %v458 = vtanh.pop %v450
    %v459 = vtanh.pop %v451
    %v460 = vtanh.pop %v452
    %v461 = vtanh.pop %v453
    %v462 = vtanh.pop %v454
    %v463 = vtanh.pop %v455
    %v464 = vtanh.pop %v456
    %v465 = vadd.f32 %v457, 1.0
    %v466 = vadd.f32 %v458, 1.0
    %v467 = vadd.f32 %v459, 1.0
    %v468 = vadd.f32 %v460, 1.0
    %v469 = vadd.f32 %v463, 1.0
    %v470 = vadd.f32 %v464, 1.0
    %v471 = vmul.f32 %v465, 0.5
    %v472 = vmul.f32 %v466, 0.5
    %v473 = vmul.f32 %v467, 0.5
    %v474 = vmul.f32 %v468, 0.5
    %v475 = vmul.f32 %v469, 0.5
    %v476 = vmul.f32 %v470, 0.5
    %v477 = vmul.f32 %v473, 0.0
    %v478 = vmul.f32 %v474, 0.0
    %v479 = vmul.f32 %v471, %v461
    %v480 = vmul.f32 %v472, %v462
    %v481 = vadd.f32 %v477, %v479
    %v482 = vadd.f32 %v478, %v480
    %v483 = vtanh.pop %v481
    %v484 = vtanh.pop %v482
    %v485 = vmul.f32 %v475, %v483
    %v486 = vmul.f32 %v476, %v484
    %487 = vst [vmem:[#allocation3] sm:$0xff] %v485
    %488 = vst [vmem:[#allocation3 + $0x8] sm:$0xff] %v486
    %v489 = vld [vmem:[#allocation2 + $0x10] sm:$0xff]
    %v490 = vld [vmem:[#allocation2 + $0x18] sm:$0xff]
    %v491 = vld [vmem:[#allocation2 + $0x90] sm:$0xff]
    %v492 = vld [vmem:[#allocation2 + $0x98] sm:$0xff]
    %v493 = vld [vmem:[#allocation2 + $0x110] sm:$0xff]
    %v494 = vld [vmem:[#allocation2 + $0x118] sm:$0xff]
    %v495 = vld [vmem:[#allocation2 + $0x190] sm:$0xff]
    %v496 = vld [vmem:[#allocation2 + $0x198] sm:$0xff]
    %497 = vmatpush.msra.mxu0 0.0
    %498 = vmatpush.msra.mxu0 0.0
    %499 = vmatpush.msra.mxu0 0.0
    %500 = vmatpush.msra.mxu0 0.0
    %501 = vmatpush.msra.mxu0 0.0
    %502 = vmatpush.msra.mxu0 0.0
    %503 = vmatpush.msra.mxu0 0.0
    %504 = vmatpush.msra.mxu0 0.0
    %505 = vmatpush.msra.mxu0 0.0
    %506 = vmatpush.msra.mxu0 0.0
    %507 = vmatpush.msra.mxu0 0.0
    %508 = vmatpush.msra.mxu0 0.0
    %509 = vmatpush.msra.mxu0 0.0
    %510 = vmatpush.msra.mxu0 0.0
    %511 = vmatpush.msra.mxu0 0.0
    %512 = vmatpush.msra.mxu0 %v485
    %513 = vmatmul.f32.gmra.mxu0 %v409
    %v514 = vpop.f32.mrf.mxu0
    %v515 = vadd.f32 0.0, %v514
    %516 = vmatmul.f32.gmra.mxu0 %v412
    %v517 = vpop.f32.mrf.mxu0
    %v518 = vadd.f32 0.0, %v517
    %519 = vmatmul.f32.gmra.mxu0 %v415
    %v520 = vpop.f32.mrf.mxu0
    %v521 = vadd.f32 0.0, %v520
    %522 = vmatmul.f32.gmra.mxu0 %v418
    %v523 = vpop.f32.mrf.mxu0
    %v524 = vadd.f32 0.0, %v523
    %525 = vdwg.mxu0
    %526 = vmatpush.msra.mxu0 0.0
    %527 = vmatpush.msra.mxu0 0.0
    %528 = vmatpush.msra.mxu0 0.0
    %529 = vmatpush.msra.mxu0 0.0
    %530 = vmatpush.msra.mxu0 0.0
    %531 = vmatpush.msra.mxu0 0.0
    %532 = vmatpush.msra.mxu0 0.0
    %533 = vmatpush.msra.mxu0 0.0
    %534 = vmatpush.msra.mxu0 0.0
    %535 = vmatpush.msra.mxu0 0.0
    %536 = vmatpush.msra.mxu0 0.0
    %537 = vmatpush.msra.mxu0 0.0
    %538 = vmatpush.msra.mxu0 0.0
    %539 = vmatpush.msra.mxu0 0.0
    %540 = vmatpush.msra.mxu0 0.0
    %541 = vmatpush.msra.mxu0 %v486
    %542 = vmatmul.f32.gmra.mxu0 %v409
    %v543 = vpop.f32.mrf.mxu0
    %v544 = vadd.f32 0.0, %v543
    %545 = vmatmul.f32.gmra.mxu0 %v412
    %v546 = vpop.f32.mrf.mxu0
    %v547 = vadd.f32 0.0, %v546
    %548 = vmatmul.f32.gmra.mxu0 %v415
    %v549 = vpop.f32.mrf.mxu0
    %v550 = vadd.f32 0.0, %v549
    %551 = vmatmul.f32.gmra.mxu0 %v418
    %v552 = vpop.f32.mrf.mxu0
    %v553 = vadd.f32 0.0, %v552
    %554 = vdwg.mxu0
    %v555 = vadd.f32 %v489, %v515
    %v556 = vadd.f32 %v490, %v544
    %v557 = vadd.f32 %v491, %v518
    %v558 = vadd.f32 %v492, %v547
    %v559 = vadd.f32 %v493, %v521
    %v560 = vadd.f32 %v494, %v550
    %v561 = vadd.f32 %v495, %v524
    %v562 = vadd.f32 %v496, %v553
    %v563 = vtanh.pop %v555
    %v564 = vtanh.pop %v556
    %v565 = vtanh.pop %v557
    %v566 = vtanh.pop %v558
    %v567 = vtanh.pop %v559
    %v568 = vtanh.pop %v560
    %v569 = vtanh.pop %v561
    %v570 = vtanh.pop %v562
    %v571 = vadd.f32 %v563, 1.0
    %v572 = vadd.f32 %v564, 1.0
    %v573 = vadd.f32 %v565, 1.0
    %v574 = vadd.f32 %v566, 1.0
    %v575 = vadd.f32 %v569, 1.0
    %v576 = vadd.f32 %v570, 1.0
    %v577 = vmul.f32 %v571, 0.5
    %v578 = vmul.f32 %v572, 0.5
    %v579 = vmul.f32 %v573, 0.5
    %v580 = vmul.f32 %v574, 0.5
    %v581 = vmul.f32 %v575, 0.5
    %v582 = vmul.f32 %v576, 0.5
    %v583 = vmul.f32 %v579, %v481
    %v584 = vmul.f32 %v580, %v482
    %v585 = vmul.f32 %v577, %v567
    %v586 = vmul.f32 %v578, %v568
    %v587 = vadd.f32 %v583, %v585
    %v588 = vadd.f32 %v584, %v586
    %v589 = vtanh.pop %v587
    %v590 = vtanh.pop %v588
    %v591 = vmul.f32 %v581, %v589
    %v592 = vmul.f32 %v582, %v590
    %593 = vst [vmem:[#allocation3 + $0x10] sm:$0xff] %v591
    %594 = vst [vmem:[#allocation3 + $0x18] sm:$0xff] %v592
    %v595 = vld [vmem:[#allocation2 + $0x20] sm:$0xff]
    %v596 = vld [vmem:[#allocation2 + $0x28] sm:$0xff]
    %v597 = vld [vmem:[#allocation2 + $0xa0] sm:$0xff]
    %v598 = vld [vmem:[#allocation2 + $0xa8] sm:$0xff]
    %v599 = vld [vmem:[#allocation2 + $0x120] sm:$0xff]
    %v600 = vld [vmem:[#allocation2 + $0x128] sm:$0xff]
    %v601 = vld [vmem:[#allocation2 + $0x1a0] sm:$0xff]
    %v602 = vld [vmem:[#allocation2 + $0x1a8] sm:$0xff]
    %603 = vmatpush.msra.mxu0 0.0
    %604 = vmatpush.msra.mxu0 0.0
    %605 = vmatpush.msra.mxu0 0.0
    %606 = vmatpush.msra.mxu0 0.0
    %607 = vmatpush.msra.mxu0 0.0
    %608 = vmatpush.msra.mxu0 0.0
    %609 = vmatpush.msra.mxu0 0.0
    %610 = vmatpush.msra.mxu0 0.0
    %611 = vmatpush.msra.mxu0 0.0
    %612 = vmatpush.msra.mxu0 0.0
    %613 = vmatpush.msra.mxu0 0.0
    %614 = vmatpush.msra.mxu0 0.0
    %615 = vmatpush.msra.mxu0 0.0
    %616 = vmatpush.msra.mxu0 0.0
    %617 = vmatpush.msra.mxu0 0.0
    %618 = vmatpush.msra.mxu0 %v591
    %619 = vmatmul.f32.gmra.mxu0 %v409
    %v620 = vpop.f32.mrf.mxu0
    %v621 = vadd.f32 0.0, %v620
    %622 = vmatmul.f32.gmra.mxu0 %v412
    %v623 = vpop.f32.mrf.mxu0
    %v624 = vadd.f32 0.0, %v623
    %625 = vmatmul.f32.gmra.mxu0 %v415
    %v626 = vpop.f32.mrf.mxu0
    %v627 = vadd.f32 0.0, %v626
    %628 = vmatmul.f32.gmra.mxu0 %v418
    %v629 = vpop.f32.mrf.mxu0
    %v630 = vadd.f32 0.0, %v629
    %631 = vdwg.mxu0
    %632 = vmatpush.msra.mxu0 0.0
    %633 = vmatpush.msra.mxu0 0.0
    %634 = vmatpush.msra.mxu0 0.0
    %635 = vmatpush.msra.mxu0 0.0
    %636 = vmatpush.msra.mxu0 0.0
    %637 = vmatpush.msra.mxu0 0.0
    %638 = vmatpush.msra.mxu0 0.0
    %639 = vmatpush.msra.mxu0 0.0
    %640 = vmatpush.msra.mxu0 0.0
    %641 = vmatpush.msra.mxu0 0.0
    %642 = vmatpush.msra.mxu0 0.0
    %643 = vmatpush.msra.mxu0 0.0
    %644 = vmatpush.msra.mxu0 0.0
    %645 = vmatpush.msra.mxu0 0.0
    %646 = vmatpush.msra.mxu0 0.0
    %647 = vmatpush.msra.mxu0 %v592
    %648 = vmatmul.f32.gmra.mxu0 %v409
    %v649 = vpop.f32.mrf.mxu0
    %v650 = vadd.f32 0.0, %v649
    %651 = vmatmul.f32.gmra.mxu0 %v412
    %v652 = vpop.f32.mrf.mxu0
    %v653 = vadd.f32 0.0, %v652
    %654 = vmatmul.f32.gmra.mxu0 %v415
    %v655 = vpop.f32.mrf.mxu0
    %v656 = vadd.f32 0.0, %v655
    %657 = vmatmul.f32.gmra.mxu0 %v418
    %v658 = vpop.f32.mrf.mxu0
    %v659 = vadd.f32 0.0, %v658
    %660 = vdwg.mxu0
    %v661 = vadd.f32 %v595, %v621
    %v662 = vadd.f32 %v596, %v650
    %v663 = vadd.f32 %v597, %v624
    %v664 = vadd.f32 %v598, %v653
    %v665 = vadd.f32 %v599, %v627
    %v666 = vadd.f32 %v600, %v656
    %v667 = vadd.f32 %v601, %v630
    %v668 = vadd.f32 %v602, %v659
    %v669 = vtanh.pop %v661
    %v670 = vtanh.pop %v662
    %v671 = vtanh.pop %v663
    %v672 = vtanh.pop %v664
    %v673 = vtanh.pop %v665
    %v674 = vtanh.pop %v666
    %v675 = vtanh.pop %v667
    %v676 = vtanh.pop %v668
    %v677 = vadd.f32 %v669, 1.0
    %v678 = vadd.f32 %v670, 1.0
    %v679 = vadd.f32 %v671, 1.0
    %v680 = vadd.f32 %v672, 1.0
    %v681 = vadd.f32 %v675, 1.0
    %v682 = vadd.f32 %v676, 1.0
    %v683 = vmul.f32 %v677, 0.5
    %v684 = vmul.f32 %v678, 0.5
    %v685 = vmul.f32 %v679, 0.5
    %v686 = vmul.f32 %v680, 0.5
    %v687 = vmul.f32 %v681, 0.5
    %v688 = vmul.f32 %v682, 0.5
    %v689 = vmul.f32 %v685, %v587
    %v690 = vmul.f32 %v686, %v588
    %v691 = vmul.f32 %v683, %v673
    %v692 = vmul.f32 %v684, %v674
    %v693 = vadd.f32 %v689, %v691
    %v694 = vadd.f32 %v690, %v692
    %v695 = vtanh.pop %v693
    %v696 = vtanh.pop %v694
    %v697 = vmul.f32 %v687, %v695
    %v698 = vmul.f32 %v688, %v696
    %699 = vst [vmem:[#allocation3 + $0x20] sm:$0xff] %v697
    %700 = vst [vmem:[#allocation3 + $0x28] sm:$0xff] %v698
    %v701 = vld [vmem:[#allocation2 + $0x30] sm:$0xff]
    %v702 = vld [vmem:[#allocation2 + $0x38] sm:$0xff]
    %v703 = vld [vmem:[#allocation2 + $0xb0] sm:$0xff]
    %v704 = vld [vmem:[#allocation2 + $0xb8] sm:$0xff]
    %v705 = vld [vmem:[#allocation2 + $0x130] sm:$0xff]
    %v706 = vld [vmem:[#allocation2 + $0x138] sm:$0xff]
    %v707 = vld [vmem:[#allocation2 + $0x1b0] sm:$0xff]
    %v708 = vld [vmem:[#allocation2 + $0x1b8] sm:$0xff]
    %709 = vmatpush.msra.mxu0 0.0
    %710 = vmatpush.msra.mxu0 0.0
    %711 = vmatpush.msra.mxu0 0.0
    %712 = vmatpush.msra.mxu0 0.0
    %713 = vmatpush.msra.mxu0 0.0
    %714 = vmatpush.msra.mxu0 0.0
    %715 = vmatpush.msra.mxu0 0.0
    %716 = vmatpush.msra.mxu0 0.0
    %717 = vmatpush.msra.mxu0 0.0
    %718 = vmatpush.msra.mxu0 0.0
    %719 = vmatpush.msra.mxu0 0.0
    %720 = vmatpush.msra.mxu0 0.0
    %721 = vmatpush.msra.mxu0 0.0
    %722 = vmatpush.msra.mxu0 0.0
    %723 = vmatpush.msra.mxu0 0.0
    %724 = vmatpush.msra.mxu0 %v697
    %725 = vmatmul.f32.gmra.mxu0 %v409
    %v726 = vpop.f32.mrf.mxu0
    %v727 = vadd.f32 0.0, %v726
    %728 = vmatmul.f32.gmra.mxu0 %v412
    %v729 = vpop.f32.mrf.mxu0
    %v730 = vadd.f32 0.0, %v729
    %731 = vmatmul.f32.gmra.mxu0 %v415
    %v732 = vpop.f32.mrf.mxu0
    %v733 = vadd.f32 0.0, %v732
    %734 = vmatmul.f32.gmra.mxu0 %v418
    %v735 = vpop.f32.mrf.mxu0
    %v736 = vadd.f32 0.0, %v735
    %737 = vdwg.mxu0
    %738 = vmatpush.msra.mxu0 0.0
    %739 = vmatpush.msra.mxu0 0.0
    %740 = vmatpush.msra.mxu0 0.0
    %741 = vmatpush.msra.mxu0 0.0
    %742 = vmatpush.msra.mxu0 0.0
    %743 = vmatpush.msra.mxu0 0.0
    %744 = vmatpush.msra.mxu0 0.0
    %745 = vmatpush.msra.mxu0 0.0
    %746 = vmatpush.msra.mxu0 0.0
    %747 = vmatpush.msra.mxu0 0.0
    %748 = vmatpush.msra.mxu0 0.0
    %749 = vmatpush.msra.mxu0 0.0
    %750 = vmatpush.msra.mxu0 0.0
    %751 = vmatpush.msra.mxu0 0.0
    %752 = vmatpush.msra.mxu0 0.0
    %753 = vmatpush.msra.mxu0 %v698
    %754 = vmatmul.f32.gmra.mxu0 %v409
    %v755 = vpop.f32.mrf.mxu0
    %v756 = vadd.f32 0.0, %v755
    %757 = vmatmul.f32.gmra.mxu0 %v412
    %v758 = vpop.f32.mrf.mxu0
    %v759 = vadd.f32 0.0, %v758
    %760 = vmatmul.f32.gmra.mxu0 %v415
    %v761 = vpop.f32.mrf.mxu0
    %v762 = vadd.f32 0.0, %v761
    %763 = vmatmul.f32.gmra.mxu0 %v418
    %v764 = vpop.f32.mrf.mxu0
    %v765 = vadd.f32 0.0, %v764
    %766 = vdwg.mxu0
    %v767 = vadd.f32 %v701, %v727
    %v768 = vadd.f32 %v702, %v756
    %v769 = vadd.f32 %v703, %v730
    %v770 = vadd.f32 %v704, %v759
    %v771 = vadd.f32 %v705, %v733
    %v772 = vadd.f32 %v706, %v762
    %v773 = vadd.f32 %v707, %v736
    %v774 = vadd.f32 %v708, %v765
    %v775 = vtanh.pop %v767
    %v776 = vtanh.pop %v768
    %v777 = vtanh.pop %v769
    %v778 = vtanh.pop %v770
    %v779 = vtanh.pop %v771
    %v780 = vtanh.pop %v772
    %v781 = vtanh.pop %v773
    %v782 = vtanh.pop %v774
    %v783 = vadd.f32 %v775, 1.0
    %v784 = vadd.f32 %v776, 1.0
    %v785 = vadd.f32 %v777, 1.0
    %v786 = vadd.f32 %v778, 1.0
    %v787 = vadd.f32 %v781, 1.0
    %v788 = vadd.f32 %v782, 1.0
    %v789 = vmul.f32 %v783, 0.5
    %v790 = vmul.f32 %v784, 0.5
    %v791 = vmul.f32 %v785, 0.5
    %v792 = vmul.f32 %v786, 0.5
    %v793 = vmul.f32 %v787, 0.5
    %v794 = vmul.f32 %v788, 0.5
    %v795 = vmul.f32 %v791, %v693
    %v796 = vmul.f32 %v792, %v694
    %v797 = vmul.f32 %v789, %v779
    %v798 = vmul.f32 %v790, %v780
    %v799 = vadd.f32 %v795, %v797
    %v800 = vadd.f32 %v796, %v798
    %v801 = vtanh.pop %v799
    %v802 = vtanh.pop %v800
    %v803 = vmul.f32 %v793, %v801
    %v804 = vmul.f32 %v794, %v802
    %805 = vst [vmem:[#allocation3 + $0x30] sm:$0xff] %v803
    %806 = vst [vmem:[#allocation3 + $0x38] sm:$0xff] %v804
    %v807 = vld [vmem:[#allocation2 + $0x40] sm:$0xff]
    %v808 = vld [vmem:[#allocation2 + $0x48] sm:$0xff]
    %v809 = vld [vmem:[#allocation2 + $0xc0] sm:$0xff]
    %v810 = vld [vmem:[#allocation2 + $0xc8] sm:$0xff]
    %v811 = vld [vmem:[#allocation2 + $0x140] sm:$0xff]
    %v812 = vld [vmem:[#allocation2 + $0x148] sm:$0xff]
    %v813 = vld [vmem:[#allocation2 + $0x1c0] sm:$0xff]
    %v814 = vld [vmem:[#allocation2 + $0x1c8] sm:$0xff]
    %815 = vmatpush.msra.mxu0 0.0
    %816 = vmatpush.msra.mxu0 0.0
    %817 = vmatpush.msra.mxu0 0.0
    %818 = vmatpush.msra.mxu0 0.0
    %819 = vmatpush.msra.mxu0 0.0
    %820 = vmatpush.msra.mxu0 0.0
    %821 = vmatpush.msra.mxu0 0.0
    %822 = vmatpush.msra.mxu0 0.0
    %823 = vmatpush.msra.mxu0 0.0
    %824 = vmatpush.msra.mxu0 0.0
    %825 = vmatpush.msra.mxu0 0.0
    %826 = vmatpush.msra.mxu0 0.0
    %827 = vmatpush.msra.mxu0 0.0
    %828 = vmatpush.msra.mxu0 0.0
    %829 = vmatpush.msra.mxu0 0.0
    %830 = vmatpush.msra.mxu0 %v803
    %831 = vmatmul.f32.gmra.mxu0 %v409
    %v832 = vpop.f32.mrf.mxu0
    %v833 = vadd.f32 0.0, %v832
    %834 = vmatmul.f32.gmra.mxu0 %v412
    %v835 = vpop.f32.mrf.mxu0
    %v836 = vadd.f32 0.0, %v835
    %837 = vmatmul.f32.gmra.mxu0 %v415
    %v838 = vpop.f32.mrf.mxu0
    %v839 = vadd.f32 0.0, %v838
    %840 = vmatmul.f32.gmra.mxu0 %v418
    %v841 = vpop.f32.mrf.mxu0
    %v842 = vadd.f32 0.0, %v841
    %843 = vdwg.mxu0
    %844 = vmatpush.msra.mxu0 0.0
    %845 = vmatpush.msra.mxu0 0.0
    %846 = vmatpush.msra.mxu0 0.0
    %847 = vmatpush.msra.mxu0 0.0
    %848 = vmatpush.msra.mxu0 0.0
    %849 = vmatpush.msra.mxu0 0.0
    %850 = vmatpush.msra.mxu0 0.0
    %851 = vmatpush.msra.mxu0 0.0
    %852 = vmatpush.msra.mxu0 0.0
    %853 = vmatpush.msra.mxu0 0.0
    %854 = vmatpush.msra.mxu0 0.0
    %855 = vmatpush.msra.mxu0 0.0
    %856 = vmatpush.msra.mxu0 0.0
    %857 = vmatpush.msra.mxu0 0.0
    %858 = vmatpush.msra.mxu0 0.0
    %859 = vmatpush.msra.mxu0 %v804
    %860 = vmatmul.f32.gmra.mxu0 %v409
    %v861 = vpop.f32.mrf.mxu0
    %v862 = vadd.f32 0.0, %v861
    %863 = vmatmul.f32.gmra.mxu0 %v412
    %v864 = vpop.f32.mrf.mxu0
    %v865 = vadd.f32 0.0, %v864
    %866 = vmatmul.f32.gmra.mxu0 %v415
    %v867 = vpop.f32.mrf.mxu0
    %v868 = vadd.f32 0.0, %v867
    %869 = vmatmul.f32.gmra.mxu0 %v418
    %v870 = vpop.f32.mrf.mxu0
    %v871 = vadd.f32 0.0, %v870
    %872 = vdwg.mxu0
    %v873 = vadd.f32 %v807, %v833
    %v874 = vadd.f32 %v808, %v862
    %v875 = vadd.f32 %v809, %v836
    %v876 = vadd.f32 %v810, %v865
    %v877 = vadd.f32 %v811, %v839
    %v878 = vadd.f32 %v812, %v868
    %v879 = vadd.f32 %v813, %v842
    %v880 = vadd.f32 %v814, %v871
    %v881 = vtanh.pop %v873
    %v882 = vtanh.pop %v874
    %v883 = vtanh.pop %v875
    %v884 = vtanh.pop %v876
    %v885 = vtanh.pop %v877
    %v886 = vtanh.pop %v878
    %v887 = vtanh.pop %v879
    %v888 = vtanh.pop %v880
    %v889 = vadd.f32 %v881, 1.0
    %v890 = vadd.f32 %v882, 1.0
    %v891 = vadd.f32 %v883, 1.0
    %v892 = vadd.f32 %v884, 1.0
    %v893 = vadd.f32 %v887, 1.0
    %v894 = vadd.f32 %v888, 1.0
    %v895 = vmul.f32 %v889, 0.5
    %v896 = vmul.f32 %v890, 0.5
    %v897 = vmul.f32 %v891, 0.5
    %v898 = vmul.f32 %v892, 0.5
    %v899 = vmul.f32 %v893, 0.5
    %v900 = vmul.f32 %v894, 0.5
    %v901 = vmul.f32 %v897, %v799
    %v902 = vmul.f32 %v898, %v800
    %v903 = vmul.f32 %v895, %v885
    %v904 = vmul.f32 %v896, %v886
    %v905 = vadd.f32 %v901, %v903
    %v906 = vadd.f32 %v902, %v904
    %v907 = vtanh.pop %v905
    %v908 = vtanh.pop %v906
    %v909 = vmul.f32 %v899, %v907
    %v910 = vmul.f32 %v900, %v908
    %911 = vst [vmem:[#allocation3 + $0x40] sm:$0xff] %v909
    %912 = vst [vmem:[#allocation3 + $0x48] sm:$0xff] %v910
    %v913 = vld [vmem:[#allocation2 + $0x50] sm:$0xff]
    %v914 = vld [vmem:[#allocation2 + $0x58] sm:$0xff]
    %v915 = vld [vmem:[#allocation2 + $0xd0] sm:$0xff]
    %v916 = vld [vmem:[#allocation2 + $0xd8] sm:$0xff]
    %v917 = vld [vmem:[#allocation2 + $0x150] sm:$0xff]
    %v918 = vld [vmem:[#allocation2 + $0x158] sm:$0xff]
    %v919 = vld [vmem:[#allocation2 + $0x1d0] sm:$0xff]
    %v920 = vld [vmem:[#allocation2 + $0x1d8] sm:$0xff]
    %921 = vmatpush.msra.mxu0 0.0
    %922 = vmatpush.msra.mxu0 0.0
    %923 = vmatpush.msra.mxu0 0.0
    %924 = vmatpush.msra.mxu0 0.0
    %925 = vmatpush.msra.mxu0 0.0
    %926 = vmatpush.msra.mxu0 0.0
    %927 = vmatpush.msra.mxu0 0.0
    %928 = vmatpush.msra.mxu0 0.0
    %929 = vmatpush.msra.mxu0 0.0
    %930 = vmatpush.msra.mxu0 0.0
    %931 = vmatpush.msra.mxu0 0.0
    %932 = vmatpush.msra.mxu0 0.0
    %933 = vmatpush.msra.mxu0 0.0
    %934 = vmatpush.msra.mxu0 0.0
    %935 = vmatpush.msra.mxu0 0.0
    %936 = vmatpush.msra.mxu0 %v909
    %937 = vmatmul.f32.gmra.mxu0 %v409
    %v938 = vpop.f32.mrf.mxu0
    %v939 = vadd.f32 0.0, %v938
    %940 = vmatmul.f32.gmra.mxu0 %v412
    %v941 = vpop.f32.mrf.mxu0
    %v942 = vadd.f32 0.0, %v941
    %943 = vmatmul.f32.gmra.mxu0 %v415
    %v944 = vpop.f32.mrf.mxu0
    %v945 = vadd.f32 0.0, %v944
    %946 = vmatmul.f32.gmra.mxu0 %v418
    %v947 = vpop.f32.mrf.mxu0
    %v948 = vadd.f32 0.0, %v947
    %949 = vdwg.mxu0
    %950 = vmatpush.msra.mxu0 0.0
    %951 = vmatpush.msra.mxu0 0.0
    %952 = vmatpush.msra.mxu0 0.0
    %953 = vmatpush.msra.mxu0 0.0
    %954 = vmatpush.msra.mxu0 0.0
    %955 = vmatpush.msra.mxu0 0.0
    %956 = vmatpush.msra.mxu0 0.0
    %957 = vmatpush.msra.mxu0 0.0
    %958 = vmatpush.msra.mxu0 0.0
    %959 = vmatpush.msra.mxu0 0.0
    %960 = vmatpush.msra.mxu0 0.0
    %961 = vmatpush.msra.mxu0 0.0
    %962 = vmatpush.msra.mxu0 0.0
    %963 = vmatpush.msra.mxu0 0.0
    %964 = vmatpush.msra.mxu0 0.0
    %965 = vmatpush.msra.mxu0 %v910
    %966 = vmatmul.f32.gmra.mxu0 %v409
    %v967 = vpop.f32.mrf.mxu0
    %v968 = vadd.f32 0.0, %v967
    %969 = vmatmul.f32.gmra.mxu0 %v412
    %v970 = vpop.f32.mrf.mxu0
    %v971 = vadd.f32 0.0, %v970
    %972 = vmatmul.f32.gmra.mxu0 %v415
    %v973 = vpop.f32.mrf.mxu0
    %v974 = vadd.f32 0.0, %v973
    %975 = vmatmul.f32.gmra.mxu0 %v418
    %v976 = vpop.f32.mrf.mxu0
    %v977 = vadd.f32 0.0, %v976
    %978 = vdwg.mxu0
    %v979 = vadd.f32 %v913, %v939
    %v980 = vadd.f32 %v914, %v968
    %v981 = vadd.f32 %v915, %v942
    %v982 = vadd.f32 %v916, %v971
    %v983 = vadd.f32 %v917, %v945
    %v984 = vadd.f32 %v918, %v974
    %v985 = vadd.f32 %v919, %v948
    %v986 = vadd.f32 %v920, %v977
    %v987 = vtanh.pop %v979
    %v988 = vtanh.pop %v980
    %v989 = vtanh.pop %v981
    %v990 = vtanh.pop %v982
    %v991 = vtanh.pop %v983
    %v992 = vtanh.pop %v984
    %v993 = vtanh.pop %v985
    %v994 = vtanh.pop %v986
    %v995 = vadd.f32 %v987, 1.0
    %v996 = vadd.f32 %v988, 1.0
    %v997 = vadd.f32 %v989, 1.0
    %v998 = vadd.f32 %v990, 1.0
    %v999 = vadd.f32 %v993, 1.0
    %v1000 = vadd.f32 %v994, 1.0
    %v1001 = vmul.f32 %v995, 0.5
    %v1002 = vmul.f32 %v996, 0.5
    %v1003 = vmul.f32 %v997, 0.5
    %v1004 = vmul.f32 %v998, 0.5
    %v1005 = vmul.f32 %v999, 0.5
    %v1006 = vmul.f32 %v1000, 0.5
    %v1007 = vmul.f32 %v1003, %v905
    %v1008 = vmul.f32 %v1004, %v906
    %v1009 = vmul.f32 %v1001, %v991
    %v1010 = vmul.f32 %v1002, %v992
    %v1011 = vadd.f32 %v1007, %v1009
    %v1012 = vadd.f32 %v1008, %v1010
    %v1013 = vtanh.pop %v1011
    %v1014 = vtanh.pop %v1012
    %v1015 = vmul.f32 %v1005, %v1013
    %v1016 = vmul.f32 %v1006, %v1014
    %1017 = vst [vmem:[#allocation3 + $0x50] sm:$0xff] %v1015
    %1018 = vst [vmem:[#allocation3 + $0x58] sm:$0xff] %v1016
    %v1019 = vld [vmem:[#allocation2 + $0x60] sm:$0xff]
    %v1020 = vld [vmem:[#allocation2 + $0x68] sm:$0xff]
    %v1021 = vld [vmem:[#allocation2 + $0xe0] sm:$0xff]
    %v1022 = vld [vmem:[#allocation2 + $0xe8] sm:$0xff]
    %v1023 = vld [vmem:[#allocation2 + $0x160] sm:$0xff]
    %v1024 = vld [vmem:[#allocation2 + $0x168] sm:$0xff]
    %v1025 = vld [vmem:[#allocation2 + $0x1e0] sm:$0xff]
    %v1026 = vld [vmem:[#allocation2 + $0x1e8] sm:$0xff]
    %1027 = vmatpush.msra.mxu0 0.0
    %1028 = vmatpush.msra.mxu0 0.0
    %1029 = vmatpush.msra.mxu0 0.0
    %1030 = vmatpush.msra.mxu0 0.0
    %1031 = vmatpush.msra.mxu0 0.0
    %1032 = vmatpush.msra.mxu0 0.0
    %1033 = vmatpush.msra.mxu0 0.0
    %1034 = vmatpush.msra.mxu0 0.0
    %1035 = vmatpush.msra.mxu0 0.0
    %1036 = vmatpush.msra.mxu0 0.0
    %1037 = vmatpush.msra.mxu0 0.0
    %1038 = vmatpush.msra.mxu0 0.0
    %1039 = vmatpush.msra.mxu0 0.0
    %1040 = vmatpush.msra.mxu0 0.0
    %1041 = vmatpush.msra.mxu0 0.0
    %1042 = vmatpush.msra.mxu0 %v1015
    %1043 = vmatmul.f32.gmra.mxu0 %v409
    %v1044 = vpop.f32.mrf.mxu0
    %v1045 = vadd.f32 0.0, %v1044
    %1046 = vmatmul.f32.gmra.mxu0 %v412
    %v1047 = vpop.f32.mrf.mxu0
    %v1048 = vadd.f32 0.0, %v1047
    %1049 = vmatmul.f32.gmra.mxu0 %v415
    %v1050 = vpop.f32.mrf.mxu0
    %v1051 = vadd.f32 0.0, %v1050
    %1052 = vmatmul.f32.gmra.mxu0 %v418
    %v1053 = vpop.f32.mrf.mxu0
    %v1054 = vadd.f32 0.0, %v1053
    %1055 = vdwg.mxu0
    %1056 = vmatpush.msra.mxu0 0.0
    %1057 = vmatpush.msra.mxu0 0.0
    %1058 = vmatpush.msra.mxu0 0.0
    %1059 = vmatpush.msra.mxu0 0.0
    %1060 = vmatpush.msra.mxu0 0.0
    %1061 = vmatpush.msra.mxu0 0.0
    %1062 = vmatpush.msra.mxu0 0.0
    %1063 = vmatpush.msra.mxu0 0.0
    %1064 = vmatpush.msra.mxu0 0.0
    %1065 = vmatpush.msra.mxu0 0.0
    %1066 = vmatpush.msra.mxu0 0.0
    %1067 = vmatpush.msra.mxu0 0.0
    %1068 = vmatpush.msra.mxu0 0.0
    %1069 = vmatpush.msra.mxu0 0.0
    %1070 = vmatpush.msra.mxu0 0.0
    %1071 = vmatpush.msra.mxu0 %v1016
    %1072 = vmatmul.f32.gmra.mxu0 %v409
    %v1073 = vpop.f32.mrf.mxu0
    %v1074 = vadd.f32 0.0, %v1073
    %1075 = vmatmul.f32.gmra.mxu0 %v412
    %v1076 = vpop.f32.mrf.mxu0
    %v1077 = vadd.f32 0.0, %v1076
    %1078 = vmatmul.f32.gmra.mxu0 %v415
    %v1079 = vpop.f32.mrf.mxu0
    %v1080 = vadd.f32 0.0, %v1079
    %1081 = vmatmul.f32.gmra.mxu0 %v418
    %v1082 = vpop.f32.mrf.mxu0
    %v1083 = vadd.f32 0.0, %v1082
    %1084 = vdwg.mxu0
    %v1085 = vadd.f32 %v1019, %v1045
    %v1086 = vadd.f32 %v1020, %v1074
    %v1087 = vadd.f32 %v1021, %v1048
    %v1088 = vadd.f32 %v1022, %v1077
    %v1089 = vadd.f32 %v1023, %v1051
    %v1090 = vadd.f32 %v1024, %v1080
    %v1091 = vadd.f32 %v1025, %v1054
    %v1092 = vadd.f32 %v1026, %v1083
    %v1093 = vtanh.pop %v1085
    %v1094 = vtanh.pop %v1086
    %v1095 = vtanh.pop %v1087
    %v1096 = vtanh.pop %v1088
    %v1097 = vtanh.pop %v1089
    %v1098 = vtanh.pop %v1090
    %v1099 = vtanh.pop %v1091
    %v1100 = vtanh.pop %v1092
    %v1101 = vadd.f32 %v1093, 1.0
    %v1102 = vadd.f32 %v1094, 1.0
    %v1103 = vadd.f32 %v1095, 1.0
    %v1104 = vadd.f32 %v1096, 1.0
    %v1105 = vadd.f32 %v1099, 1.0
    %v1106 = vadd.f32 %v1100, 1.0
    %v1107 = vmul.f32 %v1101, 0.5
    %v1108 = vmul.f32 %v1102, 0.5
    %v1109 = vmul.f32 %v1103, 0.5
    %v1110 = vmul.f32 %v1104, 0.5
    %v1111 = vmul.f32 %v1105, 0.5
    %v1112 = vmul.f32 %v1106, 0.5
    %v1113 = vmul.f32 %v1109, %v1011
    %v1114 = vmul.f32 %v1110, %v1012
    %v1115 = vmul.f32 %v1107, %v1097
    %v1116 = vmul.f32 %v1108, %v1098
    %v1117 = vadd.f32 %v1113, %v1115
    %v1118 = vadd.f32 %v1114, %v1116
    %v1119 = vtanh.pop %v1117
    %v1120 = vtanh.pop %v1118
    %v1121 = vmul.f32 %v1111, %v1119
    %v1122 = vmul.f32 %v1112, %v1120
    %1123 = vst [vmem:[#allocation3 + $0x60] sm:$0xff] %v1121
    %1124 = vst [vmem:[#allocation3 + $0x68] sm:$0xff] %v1122
    %v1125 = vld [vmem:[#allocation2 + $0x70] sm:$0xff]
    %v1126 = vld [vmem:[#allocation2 + $0x78] sm:$0xff]
    %v1127 = vld [vmem:[#allocation2 + $0xf0] sm:$0xff]
    %v1128 = vld [vmem:[#allocation2 + $0xf8] sm:$0xff]
    %v1129 = vld [vmem:[#allocation2 + $0x170] sm:$0xff]
    %v1130 = vld [vmem:[#allocation2 + $0x178] sm:$0xff]
    %v1131 = vld [vmem:[#allocation2 + $0x1f0] sm:$0xff]
    %v1132 = vld [vmem:[#allocation2 + $0x1f8] sm:$0xff]
    %1133 = vmatpush.msra.mxu0 0.0
    %1134 = vmatpush.msra.mxu0 0.0
    %1135 = vmatpush.msra.mxu0 0.0
    %1136 = vmatpush.msra.mxu0 0.0
    %1137 = vmatpush.msra.mxu0 0.0
    %1138 = vmatpush.msra.mxu0 0.0
    %1139 = vmatpush.msra.mxu0 0.0
    %1140 = vmatpush.msra.mxu0 0.0
    %1141 = vmatpush.msra.mxu0 0.0
    %1142 = vmatpush.msra.mxu0 0.0
    %1143 = vmatpush.msra.mxu0 0.0
    %1144 = vmatpush.msra.mxu0 0.0
    %1145 = vmatpush.msra.mxu0 0.0
    %1146 = vmatpush.msra.mxu0 0.0
    %1147 = vmatpush.msra.mxu0 0.0
    %1148 = vmatpush.msra.mxu0 %v1121
    %1149 = vmatmul.f32.gmra.mxu0 %v409
    %v1150 = vpop.f32.mrf.mxu0
    %v1151 = vadd.f32 0.0, %v1150
    %1152 = vmatmul.f32.gmra.mxu0 %v412
    %v1153 = vpop.f32.mrf.mxu0
    %v1154 = vadd.f32 0.0, %v1153
    %1155 = vmatmul.f32.gmra.mxu0 %v415
    %v1156 = vpop.f32.mrf.mxu0
    %v1157 = vadd.f32 0.0, %v1156
    %1158 = vmatmul.f32.gmra.mxu0 %v418
    %v1159 = vpop.f32.mrf.mxu0
    %v1160 = vadd.f32 0.0, %v1159
    %1161 = vdwg.mxu0
    %1162 = vmatpush.msra.mxu0 0.0
    %1163 = vmatpush.msra.mxu0 0.0
    %1164 = vmatpush.msra.mxu0 0.0
    %1165 = vmatpush.msra.mxu0 0.0
    %1166 = vmatpush.msra.mxu0 0.0
    %1167 = vmatpush.msra.mxu0 0.0
    %1168 = vmatpush.msra.mxu0 0.0
    %1169 = vmatpush.msra.mxu0 0.0
    %1170 = vmatpush.msra.mxu0 0.0
    %1171 = vmatpush.msra.mxu0 0.0
    %1172 = vmatpush.msra.mxu0 0.0
    %1173 = vmatpush.msra.mxu0 0.0
    %1174 = vmatpush.msra.mxu0 0.0
    %1175 = vmatpush.msra.mxu0 0.0
    %1176 = vmatpush.msra.mxu0 0.0
    %1177 = vmatpush.msra.mxu0 %v1122
    %1178 = vmatmul.f32.gmra.mxu0 %v409
    %v1179 = vpop.f32.mrf.mxu0
    %v1180 = vadd.f32 0.0, %v1179
    %1181 = vmatmul.f32.gmra.mxu0 %v412
    %v1182 = vpop.f32.mrf.mxu0
    %v1183 = vadd.f32 0.0, %v1182
    %1184 = vmatmul.f32.gmra.mxu0 %v415
    %v1185 = vpop.f32.mrf.mxu0
    %v1186 = vadd.f32 0.0, %v1185
    %1187 = vmatmul.f32.gmra.mxu0 %v418
    %v1188 = vpop.f32.mrf.mxu0
    %v1189 = vadd.f32 0.0, %v1188
    %1190 = vdwg.mxu0
    %v1191 = vadd.f32 %v1125, %v1151
    %v1192 = vadd.f32 %v1126, %v1180
    %v1193 = vadd.f32 %v1127, %v1154
    %v1194 = vadd.f32 %v1128, %v1183
    %v1195 = vadd.f32 %v1129, %v1157
    %v1196 = vadd.f32 %v1130, %v1186
    %v1197 = vadd.f32 %v1131, %v1160
    %v1198 = vadd.f32 %v1132, %v1189
    %v1199 = vtanh.pop %v1191
    %v1200 = vtanh.pop %v1192
    %v1201 = vtanh.pop %v1193
    %v1202 = vtanh.pop %v1194
    %v1203 = vtanh.pop %v1195
    %v1204 = vtanh.pop %v1196
    %v1205 = vtanh.pop %v1197
    %v1206 = vtanh.pop %v1198
    %v1207 = vadd.f32 %v1199, 1.0
    %v1208 = vadd.f32 %v1200, 1.0
    %v1209 = vadd.f32 %v1201, 1.0
    %v1210 = vadd.f32 %v1202, 1.0
    %v1211 = vadd.f32 %v1205, 1.0
    %v1212 = vadd.f32 %v1206, 1.0
    %v1213 = vmul.f32 %v1207, 0.5
    %v1214 = vmul.f32 %v1208, 0.5
    %v1215 = vmul.f32 %v1209, 0.5
    %v1216 = vmul.f32 %v1210, 0.5
    %v1217 = vmul.f32 %v1211, 0.5
    %v1218 = vmul.f32 %v1212, 0.5
    %v1219 = vmul.f32 %v1215, %v1117
    %v1220 = vmul.f32 %v1216, %v1118
    %v1221 = vmul.f32 %v1213, %v1203
    %v1222 = vmul.f32 %v1214, %v1204
    %v1223 = vadd.f32 %v1219, %v1221
    %v1224 = vadd.f32 %v1220, %v1222
    %v1225 = vtanh.pop %v1223
    %v1226 = vtanh.pop %v1224
    %v1227 = vmul.f32 %v1217, %v1225
    %v1228 = vmul.f32 %v1218, %v1226
    %1229 = vst [vmem:[#allocation3 + $0x70] sm:$0xff] %v1227
    %1230 = vst [vmem:[#allocation3 + $0x78] sm:$0xff] %v1228
    %v1231 = vld [vmem:[#allocation12] sm:$0xff]
    %v1232 = vld [vmem:[#allocation3] sm:$0xff]
    %v1233 = vld [vmem:[#allocation3 + $0x8] sm:$0xff]
    %v1234 = vld [vmem:[#allocation3 + $0x10] sm:$0xff]
    %v1235 = vld [vmem:[#allocation3 + $0x18] sm:$0xff]
    %v1236 = vld [vmem:[#allocation3 + $0x20] sm:$0xff]
    %v1237 = vld [vmem:[#allocation3 + $0x28] sm:$0xff]
    %v1238 = vld [vmem:[#allocation3 + $0x30] sm:$0xff]
    %v1239 = vld [vmem:[#allocation3 + $0x38] sm:$0xff]
    %v1240 = vld [vmem:[#allocation3 + $0x40] sm:$0xff]
    %v1241 = vld [vmem:[#allocation3 + $0x48] sm:$0xff]
    %v1242 = vld [vmem:[#allocation3 + $0x50] sm:$0xff]
    %v1243 = vld [vmem:[#allocation3 + $0x58] sm:$0xff]
    %v1244 = vld [vmem:[#allocation3 + $0x60] sm:$0xff]
    %v1245 = vld [vmem:[#allocation3 + $0x68] sm:$0xff]
    %v1246 = vld [vmem:[#allocation3 + $0x70] sm:$0xff]
    %v1247 = vld [vmem:[#allocation3 + $0x78] sm:$0xff]
    %v1248 = vld [vmem:[%s10] sm:$0xff]
    %1250 = vset.pattern.permute.xlu0 0
    %1251 = vperm.xlu0 %1250, %v1248
    %v1252 = vpop.permute.xlu0 %1251
    %v1255 = vsel %vm407, %v1231, 0
    %1257 = vmatpush.msra.mxu0 0.0
    %1258 = vmatpush.msra.mxu0 0.0
    %1259 = vmatpush.msra.mxu0 0.0
    %1260 = vmatpush.msra.mxu0 0.0
    %1261 = vmatpush.msra.mxu0 0.0
    %1262 = vmatpush.msra.mxu0 0.0
    %1263 = vmatpush.msra.mxu0 0.0
    %1264 = vmatpush.msra.mxu0 0.0
    %1265 = vmatpush.msra.mxu0 0.0
    %1266 = vmatpush.msra.mxu0 0.0
    %1267 = vmatpush.msra.mxu0 0.0
    %1268 = vmatpush.msra.mxu0 0.0
    %1269 = vmatpush.msra.mxu0 0.0
    %1270 = vmatpush.msra.mxu0 0.0
    %1271 = vmatpush.msra.mxu0 0.0
    %1272 = vmatpush.msra.mxu0 %v1232
    %1273 = vmatmul.f32.gmra.mxu0 %v1255
    %v1274 = vpop.f32.mrf.mxu0
    %v1275 = vadd.f32 %v1252, %v1274
    %1276 = vdwg.mxu0
    %1277 = vmatpush.msra.mxu0 0.0
    %1278 = vmatpush.msra.mxu0 0.0
    %1279 = vmatpush.msra.mxu0 0.0
    %1280 = vmatpush.msra.mxu0 0.0
    %1281 = vmatpush.msra.mxu0 0.0
    %1282 = vmatpush.msra.mxu0 0.0
    %1283 = vmatpush.msra.mxu0 0.0
    %1284 = vmatpush.msra.mxu0 0.0
    %1285 = vmatpush.msra.mxu0 0.0
    %1286 = vmatpush.msra.mxu0 0.0
    %1287 = vmatpush.msra.mxu0 0.0
    %1288 = vmatpush.msra.mxu0 0.0
    %1289 = vmatpush.msra.mxu0 0.0
    %1290 = vmatpush.msra.mxu0 0.0
    %1291 = vmatpush.msra.mxu0 0.0
    %1292 = vmatpush.msra.mxu0 %v1233
    %1293 = vmatmul.f32.gmra.mxu0 %v1255
    %v1294 = vpop.f32.mrf.mxu0
    %v1295 = vadd.f32 %v1252, %v1294
    %1296 = vdwg.mxu0
    %1297 = vmatpush.msra.mxu0 0.0
    %1298 = vmatpush.msra.mxu0 0.0
    %1299 = vmatpush.msra.mxu0 0.0
    %1300 = vmatpush.msra.mxu0 0.0
    %1301 = vmatpush.msra.mxu0 0.0
    %1302 = vmatpush.msra.mxu0 0.0
    %1303 = vmatpush.msra.mxu0 0.0
    %1304 = vmatpush.msra.mxu0 0.0
    %1305 = vmatpush.msra.mxu0 0.0
    %1306 = vmatpush.msra.mxu0 0.0
    %1307 = vmatpush.msra.mxu0 0.0
    %1308 = vmatpush.msra.mxu0 0.0
    %1309 = vmatpush.msra.mxu0 0.0
    %1310 = vmatpush.msra.mxu0 0.0
    %1311 = vmatpush.msra.mxu0 0.0
    %1312 = vmatpush.msra.mxu0 %v1234
    %1313 = vmatmul.f32.gmra.mxu0 %v1255
    %v1314 = vpop.f32.mrf.mxu0
    %v1315 = vadd.f32 %v1252, %v1314
    %1316 = vdwg.mxu0
    %1317 = vmatpush.msra.mxu0 0.0
    %1318 = vmatpush.msra.mxu0 0.0
    %1319 = vmatpush.msra.mxu0 0.0
    %1320 = vmatpush.msra.mxu0 0.0
    %1321 = vmatpush.msra.mxu0 0.0
    %1322 = vmatpush.msra.mxu0 0.0
    %1323 = vmatpush.msra.mxu0 0.0
    %1324 = vmatpush.msra.mxu0 0.0
    %1325 = vmatpush.msra.mxu0 0.0
    %1326 = vmatpush.msra.mxu0 0.0
    %1327 = vmatpush.msra.mxu0 0.0
    %1328 = vmatpush.msra.mxu0 0.0
    %1329 = vmatpush.msra.mxu0 0.0
    %1330 = vmatpush.msra.mxu0 0.0
    %1331 = vmatpush.msra.mxu0 0.0
    %1332 = vmatpush.msra.mxu0 %v1235
    %1333 = vmatmul.f32.gmra.mxu0 %v1255
    %v1334 = vpop.f32.mrf.mxu0
    %v1335 = vadd.f32 %v1252, %v1334
    %1336 = vdwg.mxu0
    %1337 = vmatpush.msra.mxu0 0.0
    %1338 = vmatpush.msra.mxu0 0.0
    %1339 = vmatpush.msra.mxu0 0.0
    %1340 = vmatpush.msra.mxu0 0.0
    %1341 = vmatpush.msra.mxu0 0.0
    %1342 = vmatpush.msra.mxu0 0.0
    %1343 = vmatpush.msra.mxu0 0.0
    %1344 = vmatpush.msra.mxu0 0.0
    %1345 = vmatpush.msra.mxu0 0.0
    %1346 = vmatpush.msra.mxu0 0.0
    %1347 = vmatpush.msra.mxu0 0.0
    %1348 = vmatpush.msra.mxu0 0.0
    %1349 = vmatpush.msra.mxu0 0.0
    %1350 = vmatpush.msra.mxu0 0.0
    %1351 = vmatpush.msra.mxu0 0.0
    %1352 = vmatpush.msra.mxu0 %v1236
    %1353 = vmatmul.f32.gmra.mxu0 %v1255
    %v1354 = vpop.f32.mrf.mxu0
    %v1355 = vadd.f32 %v1252, %v1354
    %1356 = vdwg.mxu0
    %1357 = vmatpush.msra.mxu0 0.0
    %1358 = vmatpush.msra.mxu0 0.0
    %1359 = vmatpush.msra.mxu0 0.0
    %1360 = vmatpush.msra.mxu0 0.0
    %1361 = vmatpush.msra.mxu0 0.0
    %1362 = vmatpush.msra.mxu0 0.0
    %1363 = vmatpush.msra.mxu0 0.0
    %1364 = vmatpush.msra.mxu0 0.0
    %1365 = vmatpush.msra.mxu0 0.0
    %1366 = vmatpush.msra.mxu0 0.0
    %1367 = vmatpush.msra.mxu0 0.0
    %1368 = vmatpush.msra.mxu0 0.0
    %1369 = vmatpush.msra.mxu0 0.0
    %1370 = vmatpush.msra.mxu0 0.0
    %1371 = vmatpush.msra.mxu0 0.0
    %1372 = vmatpush.msra.mxu0 %v1237
    %1373 = vmatmul.f32.gmra.mxu0 %v1255
    %v1374 = vpop.f32.mrf.mxu0
    %v1375 = vadd.f32 %v1252, %v1374
    %1376 = vdwg.mxu0
    %1377 = vmatpush.msra.mxu0 0.0
    %1378 = vmatpush.msra.mxu0 0.0
    %1379 = vmatpush.msra.mxu0 0.0
    %1380 = vmatpush.msra.mxu0 0.0
    %1381 = vmatpush.msra.mxu0 0.0
    %1382 = vmatpush.msra.mxu0 0.0
    %1383 = vmatpush.msra.mxu0 0.0
    %1384 = vmatpush.msra.mxu0 0.0
    %1385 = vmatpush.msra.mxu0 0.0
    %1386 = vmatpush.msra.mxu0 0.0
    %1387 = vmatpush.msra.mxu0 0.0
    %1388 = vmatpush.msra.mxu0 0.0
    %1389 = vmatpush.msra.mxu0 0.0
    %1390 = vmatpush.msra.mxu0 0.0
    %1391 = vmatpush.msra.mxu0 0.0
    %1392 = vmatpush.msra.mxu0 %v1238
    %1393 = vmatmul.f32.gmra.mxu0 %v1255
    %v1394 = vpop.f32.mrf.mxu0
    %v1395 = vadd.f32 %v1252, %v1394
    %1396 = vdwg.mxu0
    %1397 = vmatpush.msra.mxu0 0.0
    %1398 = vmatpush.msra.mxu0 0.0
    %1399 = vmatpush.msra.mxu0 0.0
    %1400 = vmatpush.msra.mxu0 0.0
    %1401 = vmatpush.msra.mxu0 0.0
    %1402 = vmatpush.msra.mxu0 0.0
    %1403 = vmatpush.msra.mxu0 0.0
    %1404 = vmatpush.msra.mxu0 0.0
    %1405 = vmatpush.msra.mxu0 0.0
    %1406 = vmatpush.msra.mxu0 0.0
    %1407 = vmatpush.msra.mxu0 0.0
    %1408 = vmatpush.msra.mxu0 0.0
    %1409 = vmatpush.msra.mxu0 0.0
    %1410 = vmatpush.msra.mxu0 0.0
    %1411 = vmatpush.msra.mxu0 0.0
    %1412 = vmatpush.msra.mxu0 %v1239
    %1413 = vmatmul.f32.gmra.mxu0 %v1255
    %v1414 = vpop.f32.mrf.mxu0
    %v1415 = vadd.f32 %v1252, %v1414
    %1416 = vdwg.mxu0
    %1417 = vmatpush.msra.mxu0 0.0
    %1418 = vmatpush.msra.mxu0 0.0
    %1419 = vmatpush.msra.mxu0 0.0
    %1420 = vmatpush.msra.mxu0 0.0
    %1421 = vmatpush.msra.mxu0 0.0
    %1422 = vmatpush.msra.mxu0 0.0
    %1423 = vmatpush.msra.mxu0 0.0
    %1424 = vmatpush.msra.mxu0 0.0
    %1425 = vmatpush.msra.mxu0 0.0
    %1426 = vmatpush.msra.mxu0 0.0
    %1427 = vmatpush.msra.mxu0 0.0
    %1428 = vmatpush.msra.mxu0 0.0
    %1429 = vmatpush.msra.mxu0 0.0
    %1430 = vmatpush.msra.mxu0 0.0
    %1431 = vmatpush.msra.mxu0 0.0
    %1432 = vmatpush.msra.mxu0 %v1240
    %1433 = vmatmul.f32.gmra.mxu0 %v1255
    %v1434 = vpop.f32.mrf.mxu0
    %v1435 = vadd.f32 %v1252, %v1434
    %1436 = vdwg.mxu0
    %1437 = vmatpush.msra.mxu0 0.0
    %1438 = vmatpush.msra.mxu0 0.0
    %1439 = vmatpush.msra.mxu0 0.0
    %1440 = vmatpush.msra.mxu0 0.0
    %1441 = vmatpush.msra.mxu0 0.0
    %1442 = vmatpush.msra.mxu0 0.0
    %1443 = vmatpush.msra.mxu0 0.0
    %1444 = vmatpush.msra.mxu0 0.0
    %1445 = vmatpush.msra.mxu0 0.0
    %1446 = vmatpush.msra.mxu0 0.0
    %1447 = vmatpush.msra.mxu0 0.0
    %1448 = vmatpush.msra.mxu0 0.0
    %1449 = vmatpush.msra.mxu0 0.0
    %1450 = vmatpush.msra.mxu0 0.0
    %1451 = vmatpush.msra.mxu0 0.0
    %1452 = vmatpush.msra.mxu0 %v1241
    %1453 = vmatmul.f32.gmra.mxu0 %v1255
    %v1454 = vpop.f32.mrf.mxu0
    %v1455 = vadd.f32 %v1252, %v1454
    %1456 = vdwg.mxu0
    %1457 = vmatpush.msra.mxu0 0.0
    %1458 = vmatpush.msra.mxu0 0.0
    %1459 = vmatpush.msra.mxu0 0.0
    %1460 = vmatpush.msra.mxu0 0.0
    %1461 = vmatpush.msra.mxu0 0.0
    %1462 = vmatpush.msra.mxu0 0.0
    %1463 = vmatpush.msra.mxu0 0.0
    %1464 = vmatpush.msra.mxu0 0.0
    %1465 = vmatpush.msra.mxu0 0.0
    %1466 = vmatpush.msra.mxu0 0.0
    %1467 = vmatpush.msra.mxu0 0.0
    %1468 = vmatpush.msra.mxu0 0.0
    %1469 = vmatpush.msra.mxu0 0.0
    %1470 = vmatpush.msra.mxu0 0.0
    %1471 = vmatpush.msra.mxu0 0.0
    %1472 = vmatpush.msra.mxu0 %v1242
    %1473 = vmatmul.f32.gmra.mxu0 %v1255
    %v1474 = vpop.f32.mrf.mxu0
    %v1475 = vadd.f32 %v1252, %v1474
    %1476 = vdwg.mxu0
    %1477 = vmatpush.msra.mxu0 0.0
    %1478 = vmatpush.msra.mxu0 0.0
    %1479 = vmatpush.msra.mxu0 0.0
    %1480 = vmatpush.msra.mxu0 0.0
    %1481 = vmatpush.msra.mxu0 0.0
    %1482 = vmatpush.msra.mxu0 0.0
    %1483 = vmatpush.msra.mxu0 0.0
    %1484 = vmatpush.msra.mxu0 0.0
    %1485 = vmatpush.msra.mxu0 0.0
    %1486 = vmatpush.msra.mxu0 0.0
    %1487 = vmatpush.msra.mxu0 0.0
    %1488 = vmatpush.msra.mxu0 0.0
    %1489 = vmatpush.msra.mxu0 0.0
    %1490 = vmatpush.msra.mxu0 0.0
    %1491 = vmatpush.msra.mxu0 0.0
    %1492 = vmatpush.msra.mxu0 %v1243
    %1493 = vmatmul.f32.gmra.mxu0 %v1255
    %v1494 = vpop.f32.mrf.mxu0
    %v1495 = vadd.f32 %v1252, %v1494
    %1496 = vdwg.mxu0
    %1497 = vmatpush.msra.mxu0 0.0
    %1498 = vmatpush.msra.mxu0 0.0
    %1499 = vmatpush.msra.mxu0 0.0
    %1500 = vmatpush.msra.mxu0 0.0
    %1501 = vmatpush.msra.mxu0 0.0
    %1502 = vmatpush.msra.mxu0 0.0
    %1503 = vmatpush.msra.mxu0 0.0
    %1504 = vmatpush.msra.mxu0 0.0
    %1505 = vmatpush.msra.mxu0 0.0
    %1506 = vmatpush.msra.mxu0 0.0
    %1507 = vmatpush.msra.mxu0 0.0
    %1508 = vmatpush.msra.mxu0 0.0
    %1509 = vmatpush.msra.mxu0 0.0
    %1510 = vmatpush.msra.mxu0 0.0
    %1511 = vmatpush.msra.mxu0 0.0
    %1512 = vmatpush.msra.mxu0 %v1244
    %1513 = vmatmul.f32.gmra.mxu0 %v1255
    %v1514 = vpop.f32.mrf.mxu0
    %v1515 = vadd.f32 %v1252, %v1514
    %1516 = vdwg.mxu0
    %1517 = vmatpush.msra.mxu0 0.0
    %1518 = vmatpush.msra.mxu0 0.0
    %1519 = vmatpush.msra.mxu0 0.0
    %1520 = vmatpush.msra.mxu0 0.0
    %1521 = vmatpush.msra.mxu0 0.0
    %1522 = vmatpush.msra.mxu0 0.0
    %1523 = vmatpush.msra.mxu0 0.0
    %1524 = vmatpush.msra.mxu0 0.0
    %1525 = vmatpush.msra.mxu0 0.0
    %1526 = vmatpush.msra.mxu0 0.0
    %1527 = vmatpush.msra.mxu0 0.0
    %1528 = vmatpush.msra.mxu0 0.0
    %1529 = vmatpush.msra.mxu0 0.0
    %1530 = vmatpush.msra.mxu0 0.0
    %1531 = vmatpush.msra.mxu0 0.0
    %1532 = vmatpush.msra.mxu0 %v1245
    %1533 = vmatmul.f32.gmra.mxu0 %v1255
    %v1534 = vpop.f32.mrf.mxu0
    %v1535 = vadd.f32 %v1252, %v1534
    %1536 = vdwg.mxu0
    %1537 = vmatpush.msra.mxu0 0.0
    %1538 = vmatpush.msra.mxu0 0.0
    %1539 = vmatpush.msra.mxu0 0.0
    %1540 = vmatpush.msra.mxu0 0.0
    %1541 = vmatpush.msra.mxu0 0.0
    %1542 = vmatpush.msra.mxu0 0.0
    %1543 = vmatpush.msra.mxu0 0.0
    %1544 = vmatpush.msra.mxu0 0.0
    %1545 = vmatpush.msra.mxu0 0.0
    %1546 = vmatpush.msra.mxu0 0.0
    %1547 = vmatpush.msra.mxu0 0.0
    %1548 = vmatpush.msra.mxu0 0.0
    %1549 = vmatpush.msra.mxu0 0.0
    %1550 = vmatpush.msra.mxu0 0.0
    %1551 = vmatpush.msra.mxu0 0.0
    %1552 = vmatpush.msra.mxu0 %v1246
    %1553 = vmatmul.f32.gmra.mxu0 %v1255
    %v1554 = vpop.f32.mrf.mxu0
    %v1555 = vadd.f32 %v1252, %v1554
    %1556 = vdwg.mxu0
    %1557 = vmatpush.msra.mxu0 0.0
    %1558 = vmatpush.msra.mxu0 0.0
    %1559 = vmatpush.msra.mxu0 0.0
    %1560 = vmatpush.msra.mxu0 0.0
    %1561 = vmatpush.msra.mxu0 0.0
    %1562 = vmatpush.msra.mxu0 0.0
    %1563 = vmatpush.msra.mxu0 0.0
    %1564 = vmatpush.msra.mxu0 0.0
    %1565 = vmatpush.msra.mxu0 0.0
    %1566 = vmatpush.msra.mxu0 0.0
    %1567 = vmatpush.msra.mxu0 0.0
    %1568 = vmatpush.msra.mxu0 0.0
    %1569 = vmatpush.msra.mxu0 0.0
    %1570 = vmatpush.msra.mxu0 0.0
    %1571 = vmatpush.msra.mxu0 0.0
    %1572 = vmatpush.msra.mxu0 %v1247
    %1573 = vmatmul.f32.gmra.mxu0 %v1255
    %v1574 = vpop.f32.mrf.mxu0
    %v1575 = vadd.f32 %v1252, %v1574
    %1576 = vdwg.mxu0
    %1577 = vst [vmem:[#allocation4] sm:$0xff] %v1275
    %1578 = vst [vmem:[#allocation4 + $0x8] sm:$0xff] %v1295
    %1579 = vst [vmem:[#allocation4 + $0x10] sm:$0xff] %v1315
    %1580 = vst [vmem:[#allocation4 + $0x18] sm:$0xff] %v1335
    %1581 = vst [vmem:[#allocation4 + $0x20] sm:$0xff] %v1355
    %1582 = vst [vmem:[#allocation4 + $0x28] sm:$0xff] %v1375
    %1583 = vst [vmem:[#allocation4 + $0x30] sm:$0xff] %v1395
    %1584 = vst [vmem:[#allocation4 + $0x38] sm:$0xff] %v1415
    %1585 = vst [vmem:[#allocation4 + $0x40] sm:$0xff] %v1435
    %1586 = vst [vmem:[#allocation4 + $0x48] sm:$0xff] %v1455
    %1587 = vst [vmem:[#allocation4 + $0x50] sm:$0xff] %v1475
    %1588 = vst [vmem:[#allocation4 + $0x58] sm:$0xff] %v1495
    %1589 = vst [vmem:[#allocation4 + $0x60] sm:$0xff] %v1515
    %1590 = vst [vmem:[#allocation4 + $0x68] sm:$0xff] %v1535
    %1591 = vst [vmem:[#allocation4 + $0x70] sm:$0xff] %v1555
    %1592 = vst [vmem:[#allocation4 + $0x78] sm:$0xff] %v1575
    %s1593 = smul.u32 8, 32
    %s1594 = smul.u32 %s1593, 16
    %s1595 = sshll.u32 %s1594, 4
    %1596 = dma.done [#allocation7], %s1595
    %s1597 = smul.u32 8, 64
    %s1598 = smul.u32 %s1597, 2
    %s1599 = sshll.u32 %s1598, 4
    %1600 = dma.done %s105, %s1599
    %v1601 = vld [vmem:[#allocation5] sm:$0xff]
    %v1602 = vld [vmem:[#allocation5 + $0x8] sm:$0xff]
    %v1603 = vld [vmem:[#allocation5 + $0x10] sm:$0xff]
    %v1604 = vld [vmem:[#allocation5 + $0x18] sm:$0xff]
    %v1605 = vld [vmem:[#allocation5 + $0x20] sm:$0xff]
    %v1606 = vld [vmem:[#allocation5 + $0x28] sm:$0xff]
    %v1607 = vld [vmem:[#allocation5 + $0x30] sm:$0xff]
    %v1608 = vld [vmem:[#allocation5 + $0x38] sm:$0xff]
    %v1609 = vld [vmem:[#allocation5 + $0x40] sm:$0xff]
    %v1610 = vld [vmem:[#allocation5 + $0x48] sm:$0xff]
    %v1611 = vld [vmem:[#allocation5 + $0x50] sm:$0xff]
    %v1612 = vld [vmem:[#allocation5 + $0x58] sm:$0xff]
    %v1613 = vld [vmem:[#allocation5 + $0x60] sm:$0xff]
    %v1614 = vld [vmem:[#allocation5 + $0x68] sm:$0xff]
    %v1615 = vld [vmem:[#allocation5 + $0x70] sm:$0xff]
    %v1616 = vld [vmem:[#allocation5 + $0x78] sm:$0xff]
    %v1617 = vld [vmem:[#allocation5 + $0x80] sm:$0xff]
    %v1618 = vld [vmem:[#allocation5 + $0x88] sm:$0xff]
    %v1619 = vld [vmem:[#allocation5 + $0x90] sm:$0xff]
    %v1620 = vld [vmem:[#allocation5 + $0x98] sm:$0xff]
    %v1621 = vld [vmem:[#allocation5 + $0xa0] sm:$0xff]
    %v1622 = vld [vmem:[#allocation5 + $0xa8] sm:$0xff]
    %v1623 = vld [vmem:[#allocation5 + $0xb0] sm:$0xff]
    %v1624 = vld [vmem:[#allocation5 + $0xb8] sm:$0xff]
    %v1625 = vld [vmem:[#allocation5 + $0xc0] sm:$0xff]
    %v1626 = vld [vmem:[#allocation5 + $0xc8] sm:$0xff]
    %v1627 = vld [vmem:[#allocation5 + $0xd0] sm:$0xff]
    %v1628 = vld [vmem:[#allocation5 + $0xd8] sm:$0xff]
    %v1629 = vld [vmem:[#allocation5 + $0xe0] sm:$0xff]
    %v1630 = vld [vmem:[#allocation5 + $0xe8] sm:$0xff]
    %v1631 = vld [vmem:[#allocation5 + $0xf0] sm:$0xff]
    %v1632 = vld [vmem:[#allocation5 + $0xf8] sm:$0xff]
    %v1633 = vld [vmem:[#allocation5 + $0x100] sm:$0xff]
    %v1634 = vld [vmem:[#allocation5 + $0x108] sm:$0xff]
    %v1635 = vld [vmem:[#allocation5 + $0x110] sm:$0xff]
    %v1636 = vld [vmem:[#allocation5 + $0x118] sm:$0xff]
    %v1637 = vld [vmem:[#allocation5 + $0x120] sm:$0xff]
    %v1638 = vld [vmem:[#allocation5 + $0x128] sm:$0xff]
    %v1639 = vld [vmem:[#allocation5 + $0x130] sm:$0xff]
    %v1640 = vld [vmem:[#allocation5 + $0x138] sm:$0xff]
    %v1641 = vld [vmem:[#allocation5 + $0x140] sm:$0xff]
    %v1642 = vld [vmem:[#allocation5 + $0x148] sm:$0xff]
    %v1643 = vld [vmem:[#allocation5 + $0x150] sm:$0xff]
    %v1644 = vld [vmem:[#allocation5 + $0x158] sm:$0xff]
    %v1645 = vld [vmem:[#allocation5 + $0x160] sm:$0xff]
    %v1646 = vld [vmem:[#allocation5 + $0x168] sm:$0xff]
    %v1647 = vld [vmem:[#allocation5 + $0x170] sm:$0xff]
    %v1648 = vld [vmem:[#allocation5 + $0x178] sm:$0xff]
    %v1649 = vld [vmem:[#allocation5 + $0x180] sm:$0xff]
    %v1650 = vld [vmem:[#allocation5 + $0x188] sm:$0xff]
    %v1651 = vld [vmem:[#allocation5 + $0x190] sm:$0xff]
    %v1652 = vld [vmem:[#allocation5 + $0x198] sm:$0xff]
    %v1653 = vld [vmem:[#allocation5 + $0x1a0] sm:$0xff]
    %v1654 = vld [vmem:[#allocation5 + $0x1a8] sm:$0xff]
    %v1655 = vld [vmem:[#allocation5 + $0x1b0] sm:$0xff]
    %v1656 = vld [vmem:[#allocation5 + $0x1b8] sm:$0xff]
    %v1657 = vld [vmem:[#allocation5 + $0x1c0] sm:$0xff]
    %v1658 = vld [vmem:[#allocation5 + $0x1c8] sm:$0xff]
    %v1659 = vld [vmem:[#allocation5 + $0x1d0] sm:$0xff]
    %v1660 = vld [vmem:[#allocation5 + $0x1d8] sm:$0xff]
    %v1661 = vld [vmem:[#allocation5 + $0x1e0] sm:$0xff]
    %v1662 = vld [vmem:[#allocation5 + $0x1e8] sm:$0xff]
    %v1663 = vld [vmem:[#allocation5 + $0x1f0] sm:$0xff]
    %v1664 = vld [vmem:[#allocation5 + $0x1f8] sm:$0xff]
    %v1665 = vld [vmem:[#allocation5 + $0x200] sm:$0xff]
    %v1666 = vld [vmem:[#allocation5 + $0x208] sm:$0xff]
    %v1667 = vld [vmem:[#allocation5 + $0x210] sm:$0xff]
    %v1668 = vld [vmem:[#allocation5 + $0x218] sm:$0xff]
    %v1669 = vld [vmem:[#allocation5 + $0x220] sm:$0xff]
    %v1670 = vld [vmem:[#allocation5 + $0x228] sm:$0xff]
    %v1671 = vld [vmem:[#allocation5 + $0x230] sm:$0xff]
    %v1672 = vld [vmem:[#allocation5 + $0x238] sm:$0xff]
    %v1673 = vld [vmem:[#allocation5 + $0x240] sm:$0xff]
    %v1674 = vld [vmem:[#allocation5 + $0x248] sm:$0xff]
    %v1675 = vld [vmem:[#allocation5 + $0x250] sm:$0xff]
    %v1676 = vld [vmem:[#allocation5 + $0x258] sm:$0xff]
    %v1677 = vld [vmem:[#allocation5 + $0x260] sm:$0xff]
    %v1678 = vld [vmem:[#allocation5 + $0x268] sm:$0xff]
    %v1679 = vld [vmem:[#allocation5 + $0x270] sm:$0xff]
    %v1680 = vld [vmem:[#allocation5 + $0x278] sm:$0xff]
    %v1681 = vld [vmem:[#allocation5 + $0x280] sm:$0xff]
    %v1682 = vld [vmem:[#allocation5 + $0x288] sm:$0xff]
    %v1683 = vld [vmem:[#allocation5 + $0x290] sm:$0xff]
    %v1684 = vld [vmem:[#allocation5 + $0x298] sm:$0xff]
    %v1685 = vld [vmem:[#allocation5 + $0x2a0] sm:$0xff]
    %v1686 = vld [vmem:[#allocation5 + $0x2a8] sm:$0xff]
    %v1687 = vld [vmem:[#allocation5 + $0x2b0] sm:$0xff]
    %v1688 = vld [vmem:[#allocation5 + $0x2b8] sm:$0xff]
    %v1689 = vld [vmem:[#allocation5 + $0x2c0] sm:$0xff]
    %v1690 = vld [vmem:[#allocation5 + $0x2c8] sm:$0xff]
    %v1691 = vld [vmem:[#allocation5 + $0x2d0] sm:$0xff]
    %v1692 = vld [vmem:[#allocation5 + $0x2d8] sm:$0xff]
    %v1693 = vld [vmem:[#allocation5 + $0x2e0] sm:$0xff]
    %v1694 = vld [vmem:[#allocation5 + $0x2e8] sm:$0xff]
    %v1695 = vld [vmem:[#allocation5 + $0x2f0] sm:$0xff]
    %v1696 = vld [vmem:[#allocation5 + $0x2f8] sm:$0xff]
    %v1697 = vld [vmem:[#allocation5 + $0x300] sm:$0xff]
    %v1698 = vld [vmem:[#allocation5 + $0x308] sm:$0xff]
    %v1699 = vld [vmem:[#allocation5 + $0x310] sm:$0xff]
    %v1700 = vld [vmem:[#allocation5 + $0x318] sm:$0xff]
    %v1701 = vld [vmem:[#allocation5 + $0x320] sm:$0xff]
    %v1702 = vld [vmem:[#allocation5 + $0x328] sm:$0xff]
    %v1703 = vld [vmem:[#allocation5 + $0x330] sm:$0xff]
    %v1704 = vld [vmem:[#allocation5 + $0x338] sm:$0xff]
    %v1705 = vld [vmem:[#allocation5 + $0x340] sm:$0xff]
    %v1706 = vld [vmem:[#allocation5 + $0x348] sm:$0xff]
    %v1707 = vld [vmem:[#allocation5 + $0x350] sm:$0xff]
    %v1708 = vld [vmem:[#allocation5 + $0x358] sm:$0xff]
    %v1709 = vld [vmem:[#allocation5 + $0x360] sm:$0xff]
    %v1710 = vld [vmem:[#allocation5 + $0x368] sm:$0xff]
    %v1711 = vld [vmem:[#allocation5 + $0x370] sm:$0xff]
    %v1712 = vld [vmem:[#allocation5 + $0x378] sm:$0xff]
    %v1713 = vld [vmem:[#allocation5 + $0x380] sm:$0xff]
    %v1714 = vld [vmem:[#allocation5 + $0x388] sm:$0xff]
    %v1715 = vld [vmem:[#allocation5 + $0x390] sm:$0xff]
    %v1716 = vld [vmem:[#allocation5 + $0x398] sm:$0xff]
    %v1717 = vld [vmem:[#allocation5 + $0x3a0] sm:$0xff]
    %v1718 = vld [vmem:[#allocation5 + $0x3a8] sm:$0xff]
    %v1719 = vld [vmem:[#allocation5 + $0x3b0] sm:$0xff]
    %v1720 = vld [vmem:[#allocation5 + $0x3b8] sm:$0xff]
    %v1721 = vld [vmem:[#allocation5 + $0x3c0] sm:$0xff]
    %v1722 = vld [vmem:[#allocation5 + $0x3c8] sm:$0xff]
    %v1723 = vld [vmem:[#allocation5 + $0x3d0] sm:$0xff]
    %v1724 = vld [vmem:[#allocation5 + $0x3d8] sm:$0xff]
    %v1725 = vld [vmem:[#allocation5 + $0x3e0] sm:$0xff]
    %v1726 = vld [vmem:[#allocation5 + $0x3e8] sm:$0xff]
    %v1727 = vld [vmem:[#allocation5 + $0x3f0] sm:$0xff]
    %v1728 = vld [vmem:[#allocation5 + $0x3f8] sm:$0xff]
    %v1729 = vld [vmem:[#allocation5 + $0x400] sm:$0xff]
    %v1730 = vld [vmem:[#allocation5 + $0x408] sm:$0xff]
    %v1731 = vld [vmem:[#allocation5 + $0x410] sm:$0xff]
    %v1732 = vld [vmem:[#allocation5 + $0x418] sm:$0xff]
    %v1733 = vld [vmem:[#allocation5 + $0x420] sm:$0xff]
    %v1734 = vld [vmem:[#allocation5 + $0x428] sm:$0xff]
    %v1735 = vld [vmem:[#allocation5 + $0x430] sm:$0xff]
    %v1736 = vld [vmem:[#allocation5 + $0x438] sm:$0xff]
    %v1737 = vld [vmem:[#allocation5 + $0x440] sm:$0xff]
    %v1738 = vld [vmem:[#allocation5 + $0x448] sm:$0xff]
    %v1739 = vld [vmem:[#allocation5 + $0x450] sm:$0xff]
    %v1740 = vld [vmem:[#allocation5 + $0x458] sm:$0xff]
    %v1741 = vld [vmem:[#allocation5 + $0x460] sm:$0xff]
    %v1742 = vld [vmem:[#allocation5 + $0x468] sm:$0xff]
    %v1743 = vld [vmem:[#allocation5 + $0x470] sm:$0xff]
    %v1744 = vld [vmem:[#allocation5 + $0x478] sm:$0xff]
    %v1745 = vld [vmem:[#allocation5 + $0x480] sm:$0xff]
    %v1746 = vld [vmem:[#allocation5 + $0x488] sm:$0xff]
    %v1747 = vld [vmem:[#allocation5 + $0x490] sm:$0xff]
    %v1748 = vld [vmem:[#allocation5 + $0x498] sm:$0xff]
    %v1749 = vld [vmem:[#allocation5 + $0x4a0] sm:$0xff]
    %v1750 = vld [vmem:[#allocation5 + $0x4a8] sm:$0xff]
    %v1751 = vld [vmem:[#allocation5 + $0x4b0] sm:$0xff]
    %v1752 = vld [vmem:[#allocation5 + $0x4b8] sm:$0xff]
    %v1753 = vld [vmem:[#allocation5 + $0x4c0] sm:$0xff]
    %v1754 = vld [vmem:[#allocation5 + $0x4c8] sm:$0xff]
    %v1755 = vld [vmem:[#allocation5 + $0x4d0] sm:$0xff]
    %v1756 = vld [vmem:[#allocation5 + $0x4d8] sm:$0xff]
    %v1757 = vld [vmem:[#allocation5 + $0x4e0] sm:$0xff]
    %v1758 = vld [vmem:[#allocation5 + $0x4e8] sm:$0xff]
    %v1759 = vld [vmem:[#allocation5 + $0x4f0] sm:$0xff]
    %v1760 = vld [vmem:[#allocation5 + $0x4f8] sm:$0xff]
    %v1761 = vld [vmem:[#allocation5 + $0x500] sm:$0xff]
    %v1762 = vld [vmem:[#allocation5 + $0x508] sm:$0xff]
    %v1763 = vld [vmem:[#allocation5 + $0x510] sm:$0xff]
    %v1764 = vld [vmem:[#allocation5 + $0x518] sm:$0xff]
    %v1765 = vld [vmem:[#allocation5 + $0x520] sm:$0xff]
    %v1766 = vld [vmem:[#allocation5 + $0x528] sm:$0xff]
    %v1767 = vld [vmem:[#allocation5 + $0x530] sm:$0xff]
    %v1768 = vld [vmem:[#allocation5 + $0x538] sm:$0xff]
    %v1769 = vld [vmem:[#allocation5 + $0x540] sm:$0xff]
    %v1770 = vld [vmem:[#allocation5 + $0x548] sm:$0xff]
    %v1771 = vld [vmem:[#allocation5 + $0x550] sm:$0xff]
    %v1772 = vld [vmem:[#allocation5 + $0x558] sm:$0xff]
    %v1773 = vld [vmem:[#allocation5 + $0x560] sm:$0xff]
    %v1774 = vld [vmem:[#allocation5 + $0x568] sm:$0xff]
    %v1775 = vld [vmem:[#allocation5 + $0x570] sm:$0xff]
    %v1776 = vld [vmem:[#allocation5 + $0x578] sm:$0xff]
    %v1777 = vld [vmem:[#allocation5 + $0x580] sm:$0xff]
    %v1778 = vld [vmem:[#allocation5 + $0x588] sm:$0xff]
    %v1779 = vld [vmem:[#allocation5 + $0x590] sm:$0xff]
    %v1780 = vld [vmem:[#allocation5 + $0x598] sm:$0xff]
    %v1781 = vld [vmem:[#allocation5 + $0x5a0] sm:$0xff]
    %v1782 = vld [vmem:[#allocation5 + $0x5a8] sm:$0xff]
    %v1783 = vld [vmem:[#allocation5 + $0x5b0] sm:$0xff]
    %v1784 = vld [vmem:[#allocation5 + $0x5b8] sm:$0xff]
    %v1785 = vld [vmem:[#allocation5 + $0x5c0] sm:$0xff]
    %v1786 = vld [vmem:[#allocation5 + $0x5c8] sm:$0xff]
    %v1787 = vld [vmem:[#allocation5 + $0x5d0] sm:$0xff]
    %v1788 = vld [vmem:[#allocation5 + $0x5d8] sm:$0xff]
    %v1789 = vld [vmem:[#allocation5 + $0x5e0] sm:$0xff]
    %v1790 = vld [vmem:[#allocation5 + $0x5e8] sm:$0xff]
    %v1791 = vld [vmem:[#allocation5 + $0x5f0] sm:$0xff]
    %v1792 = vld [vmem:[#allocation5 + $0x5f8] sm:$0xff]
    %v1793 = vld [vmem:[#allocation5 + $0x600] sm:$0xff]
    %v1794 = vld [vmem:[#allocation5 + $0x608] sm:$0xff]
    %v1795 = vld [vmem:[#allocation5 + $0x610] sm:$0xff]
    %v1796 = vld [vmem:[#allocation5 + $0x618] sm:$0xff]
    %v1797 = vld [vmem:[#allocation5 + $0x620] sm:$0xff]
    %v1798 = vld [vmem:[#allocation5 + $0x628] sm:$0xff]
    %v1799 = vld [vmem:[#allocation5 + $0x630] sm:$0xff]
    %v1800 = vld [vmem:[#allocation5 + $0x638] sm:$0xff]
    %v1801 = vld [vmem:[#allocation5 + $0x640] sm:$0xff]
    %v1802 = vld [vmem:[#allocation5 + $0x648] sm:$0xff]
    %v1803 = vld [vmem:[#allocation5 + $0x650] sm:$0xff]
    %v1804 = vld [vmem:[#allocation5 + $0x658] sm:$0xff]
    %v1805 = vld [vmem:[#allocation5 + $0x660] sm:$0xff]
    %v1806 = vld [vmem:[#allocation5 + $0x668] sm:$0xff]
    %v1807 = vld [vmem:[#allocation5 + $0x670] sm:$0xff]
    %v1808 = vld [vmem:[#allocation5 + $0x678] sm:$0xff]
    %v1809 = vld [vmem:[#allocation5 + $0x680] sm:$0xff]
    %v1810 = vld [vmem:[#allocation5 + $0x688] sm:$0xff]
    %v1811 = vld [vmem:[#allocation5 + $0x690] sm:$0xff]
    %v1812 = vld [vmem:[#allocation5 + $0x698] sm:$0xff]
    %v1813 = vld [vmem:[#allocation5 + $0x6a0] sm:$0xff]
    %v1814 = vld [vmem:[#allocation5 + $0x6a8] sm:$0xff]
    %v1815 = vld [vmem:[#allocation5 + $0x6b0] sm:$0xff]
    %v1816 = vld [vmem:[#allocation5 + $0x6b8] sm:$0xff]
    %v1817 = vld [vmem:[#allocation5 + $0x6c0] sm:$0xff]
    %v1818 = vld [vmem:[#allocation5 + $0x6c8] sm:$0xff]
    %v1819 = vld [vmem:[#allocation5 + $0x6d0] sm:$0xff]
    %v1820 = vld [vmem:[#allocation5 + $0x6d8] sm:$0xff]
    %v1821 = vld [vmem:[#allocation5 + $0x6e0] sm:$0xff]
    %v1822 = vld [vmem:[#allocation5 + $0x6e8] sm:$0xff]
    %v1823 = vld [vmem:[#allocation5 + $0x6f0] sm:$0xff]
    %v1824 = vld [vmem:[#allocation5 + $0x6f8] sm:$0xff]
    %v1825 = vld [vmem:[#allocation5 + $0x700] sm:$0xff]
    %v1826 = vld [vmem:[#allocation5 + $0x708] sm:$0xff]
    %v1827 = vld [vmem:[#allocation5 + $0x710] sm:$0xff]
    %v1828 = vld [vmem:[#allocation5 + $0x718] sm:$0xff]
    %v1829 = vld [vmem:[#allocation5 + $0x720] sm:$0xff]
    %v1830 = vld [vmem:[#allocation5 + $0x728] sm:$0xff]
    %v1831 = vld [vmem:[#allocation5 + $0x730] sm:$0xff]
    %v1832 = vld [vmem:[#allocation5 + $0x738] sm:$0xff]
    %v1833 = vld [vmem:[#allocation5 + $0x740] sm:$0xff]
    %v1834 = vld [vmem:[#allocation5 + $0x748] sm:$0xff]
    %v1835 = vld [vmem:[#allocation5 + $0x750] sm:$0xff]
    %v1836 = vld [vmem:[#allocation5 + $0x758] sm:$0xff]
    %v1837 = vld [vmem:[#allocation5 + $0x760] sm:$0xff]
    %v1838 = vld [vmem:[#allocation5 + $0x768] sm:$0xff]
    %v1839 = vld [vmem:[#allocation5 + $0x770] sm:$0xff]
    %v1840 = vld [vmem:[#allocation5 + $0x778] sm:$0xff]
    %v1841 = vld [vmem:[#allocation5 + $0x780] sm:$0xff]
    %v1842 = vld [vmem:[#allocation5 + $0x788] sm:$0xff]
    %v1843 = vld [vmem:[#allocation5 + $0x790] sm:$0xff]
    %v1844 = vld [vmem:[#allocation5 + $0x798] sm:$0xff]
    %v1845 = vld [vmem:[#allocation5 + $0x7a0] sm:$0xff]
    %v1846 = vld [vmem:[#allocation5 + $0x7a8] sm:$0xff]
    %v1847 = vld [vmem:[#allocation5 + $0x7b0] sm:$0xff]
    %v1848 = vld [vmem:[#allocation5 + $0x7b8] sm:$0xff]
    %v1849 = vld [vmem:[#allocation5 + $0x7c0] sm:$0xff]
    %v1850 = vld [vmem:[#allocation5 + $0x7c8] sm:$0xff]
    %v1851 = vld [vmem:[#allocation5 + $0x7d0] sm:$0xff]
    %v1852 = vld [vmem:[#allocation5 + $0x7d8] sm:$0xff]
    %v1853 = vld [vmem:[#allocation5 + $0x7e0] sm:$0xff]
    %v1854 = vld [vmem:[#allocation5 + $0x7e8] sm:$0xff]
    %v1855 = vld [vmem:[#allocation5 + $0x7f0] sm:$0xff]
    %v1856 = vld [vmem:[#allocation5 + $0x7f8] sm:$0xff]
    %v1857 = vld [vmem:[#allocation5 + $0x800] sm:$0xff]
    %v1858 = vld [vmem:[#allocation5 + $0x808] sm:$0xff]
    %v1859 = vld [vmem:[#allocation5 + $0x810] sm:$0xff]
    %v1860 = vld [vmem:[#allocation5 + $0x818] sm:$0xff]
    %v1861 = vld [vmem:[#allocation5 + $0x820] sm:$0xff]
    %v1862 = vld [vmem:[#allocation5 + $0x828] sm:$0xff]
    %v1863 = vld [vmem:[#allocation5 + $0x830] sm:$0xff]
    %v1864 = vld [vmem:[#allocation5 + $0x838] sm:$0xff]
    %v1865 = vld [vmem:[#allocation5 + $0x840] sm:$0xff]
    %v1866 = vld [vmem:[#allocation5 + $0x848] sm:$0xff]
    %v1867 = vld [vmem:[#allocation5 + $0x850] sm:$0xff]
    %v1868 = vld [vmem:[#allocation5 + $0x858] sm:$0xff]
    %v1869 = vld [vmem:[#allocation5 + $0x860] sm:$0xff]
    %v1870 = vld [vmem:[#allocation5 + $0x868] sm:$0xff]
    %v1871 = vld [vmem:[#allocation5 + $0x870] sm:$0xff]
    %v1872 = vld [vmem:[#allocation5 + $0x878] sm:$0xff]
    %v1873 = vld [vmem:[#allocation5 + $0x880] sm:$0xff]
    %v1874 = vld [vmem:[#allocation5 + $0x888] sm:$0xff]
    %v1875 = vld [vmem:[#allocation5 + $0x890] sm:$0xff]
    %v1876 = vld [vmem:[#allocation5 + $0x898] sm:$0xff]
    %v1877 = vld [vmem:[#allocation5 + $0x8a0] sm:$0xff]
    %v1878 = vld [vmem:[#allocation5 + $0x8a8] sm:$0xff]
    %v1879 = vld [vmem:[#allocation5 + $0x8b0] sm:$0xff]
    %v1880 = vld [vmem:[#allocation5 + $0x8b8] sm:$0xff]
    %v1881 = vld [vmem:[#allocation5 + $0x8c0] sm:$0xff]
    %v1882 = vld [vmem:[#allocation5 + $0x8c8] sm:$0xff]
    %v1883 = vld [vmem:[#allocation5 + $0x8d0] sm:$0xff]
    %v1884 = vld [vmem:[#allocation5 + $0x8d8] sm:$0xff]
    %v1885 = vld [vmem:[#allocation5 + $0x8e0] sm:$0xff]
    %v1886 = vld [vmem:[#allocation5 + $0x8e8] sm:$0xff]
    %v1887 = vld [vmem:[#allocation5 + $0x8f0] sm:$0xff]
    %v1888 = vld [vmem:[#allocation5 + $0x8f8] sm:$0xff]
    %v1889 = vld [vmem:[#allocation5 + $0x900] sm:$0xff]
    %v1890 = vld [vmem:[#allocation5 + $0x908] sm:$0xff]
    %v1891 = vld [vmem:[#allocation5 + $0x910] sm:$0xff]
    %v1892 = vld [vmem:[#allocation5 + $0x918] sm:$0xff]
    %v1893 = vld [vmem:[#allocation5 + $0x920] sm:$0xff]
    %v1894 = vld [vmem:[#allocation5 + $0x928] sm:$0xff]
    %v1895 = vld [vmem:[#allocation5 + $0x930] sm:$0xff]
    %v1896 = vld [vmem:[#allocation5 + $0x938] sm:$0xff]
    %v1897 = vld [vmem:[#allocation5 + $0x940] sm:$0xff]
    %v1898 = vld [vmem:[#allocation5 + $0x948] sm:$0xff]
    %v1899 = vld [vmem:[#allocation5 + $0x950] sm:$0xff]
    %v1900 = vld [vmem:[#allocation5 + $0x958] sm:$0xff]
    %v1901 = vld [vmem:[#allocation5 + $0x960] sm:$0xff]
    %v1902 = vld [vmem:[#allocation5 + $0x968] sm:$0xff]
    %v1903 = vld [vmem:[#allocation5 + $0x970] sm:$0xff]
    %v1904 = vld [vmem:[#allocation5 + $0x978] sm:$0xff]
    %v1905 = vld [vmem:[#allocation5 + $0x980] sm:$0xff]
    %v1906 = vld [vmem:[#allocation5 + $0x988] sm:$0xff]
    %v1907 = vld [vmem:[#allocation5 + $0x990] sm:$0xff]
    %v1908 = vld [vmem:[#allocation5 + $0x998] sm:$0xff]
    %v1909 = vld [vmem:[#allocation5 + $0x9a0] sm:$0xff]
    %v1910 = vld [vmem:[#allocation5 + $0x9a8] sm:$0xff]
    %v1911 = vld [vmem:[#allocation5 + $0x9b0] sm:$0xff]
    %v1912 = vld [vmem:[#allocation5 + $0x9b8] sm:$0xff]
    %v1913 = vld [vmem:[#allocation5 + $0x9c0] sm:$0xff]
    %v1914 = vld [vmem:[#allocation5 + $0x9c8] sm:$0xff]
    %v1915 = vld [vmem:[#allocation5 + $0x9d0] sm:$0xff]
    %v1916 = vld [vmem:[#allocation5 + $0x9d8] sm:$0xff]
    %v1917 = vld [vmem:[#allocation5 + $0x9e0] sm:$0xff]
    %v1918 = vld [vmem:[#allocation5 + $0x9e8] sm:$0xff]
    %v1919 = vld [vmem:[#allocation5 + $0x9f0] sm:$0xff]
    %v1920 = vld [vmem:[#allocation5 + $0x9f8] sm:$0xff]
    %v1921 = vld [vmem:[#allocation5 + $0xa00] sm:$0xff]
    %v1922 = vld [vmem:[#allocation5 + $0xa08] sm:$0xff]
    %v1923 = vld [vmem:[#allocation5 + $0xa10] sm:$0xff]
    %v1924 = vld [vmem:[#allocation5 + $0xa18] sm:$0xff]
    %v1925 = vld [vmem:[#allocation5 + $0xa20] sm:$0xff]
    %v1926 = vld [vmem:[#allocation5 + $0xa28] sm:$0xff]
    %v1927 = vld [vmem:[#allocation5 + $0xa30] sm:$0xff]
    %v1928 = vld [vmem:[#allocation5 + $0xa38] sm:$0xff]
    %v1929 = vld [vmem:[#allocation5 + $0xa40] sm:$0xff]
    %v1930 = vld [vmem:[#allocation5 + $0xa48] sm:$0xff]
    %v1931 = vld [vmem:[#allocation5 + $0xa50] sm:$0xff]
    %v1932 = vld [vmem:[#allocation5 + $0xa58] sm:$0xff]
    %v1933 = vld [vmem:[#allocation5 + $0xa60] sm:$0xff]
    %v1934 = vld [vmem:[#allocation5 + $0xa68] sm:$0xff]
    %v1935 = vld [vmem:[#allocation5 + $0xa70] sm:$0xff]
    %v1936 = vld [vmem:[#allocation5 + $0xa78] sm:$0xff]
    %v1937 = vld [vmem:[#allocation5 + $0xa80] sm:$0xff]
    %v1938 = vld [vmem:[#allocation5 + $0xa88] sm:$0xff]
    %v1939 = vld [vmem:[#allocation5 + $0xa90] sm:$0xff]
    %v1940 = vld [vmem:[#allocation5 + $0xa98] sm:$0xff]
    %v1941 = vld [vmem:[#allocation5 + $0xaa0] sm:$0xff]
    %v1942 = vld [vmem:[#allocation5 + $0xaa8] sm:$0xff]
    %v1943 = vld [vmem:[#allocation5 + $0xab0] sm:$0xff]
    %v1944 = vld [vmem:[#allocation5 + $0xab8] sm:$0xff]
    %v1945 = vld [vmem:[#allocation5 + $0xac0] sm:$0xff]
    %v1946 = vld [vmem:[#allocation5 + $0xac8] sm:$0xff]
    %v1947 = vld [vmem:[#allocation5 + $0xad0] sm:$0xff]
    %v1948 = vld [vmem:[#allocation5 + $0xad8] sm:$0xff]
    %v1949 = vld [vmem:[#allocation5 + $0xae0] sm:$0xff]
    %v1950 = vld [vmem:[#allocation5 + $0xae8] sm:$0xff]
    %v1951 = vld [vmem:[#allocation5 + $0xaf0] sm:$0xff]
    %v1952 = vld [vmem:[#allocation5 + $0xaf8] sm:$0xff]
    %v1953 = vld [vmem:[#allocation5 + $0xb00] sm:$0xff]
    %v1954 = vld [vmem:[#allocation5 + $0xb08] sm:$0xff]
    %v1955 = vld [vmem:[#allocation5 + $0xb10] sm:$0xff]
    %v1956 = vld [vmem:[#allocation5 + $0xb18] sm:$0xff]
    %v1957 = vld [vmem:[#allocation5 + $0xb20] sm:$0xff]
    %v1958 = vld [vmem:[#allocation5 + $0xb28] sm:$0xff]
    %v1959 = vld [vmem:[#allocation5 + $0xb30] sm:$0xff]
    %v1960 = vld [vmem:[#allocation5 + $0xb38] sm:$0xff]
    %v1961 = vld [vmem:[#allocation5 + $0xb40] sm:$0xff]
    %v1962 = vld [vmem:[#allocation5 + $0xb48] sm:$0xff]
    %v1963 = vld [vmem:[#allocation5 + $0xb50] sm:$0xff]
    %v1964 = vld [vmem:[#allocation5 + $0xb58] sm:$0xff]
    %v1965 = vld [vmem:[#allocation5 + $0xb60] sm:$0xff]
    %v1966 = vld [vmem:[#allocation5 + $0xb68] sm:$0xff]
    %v1967 = vld [vmem:[#allocation5 + $0xb70] sm:$0xff]
    %v1968 = vld [vmem:[#allocation5 + $0xb78] sm:$0xff]
    %v1969 = vld [vmem:[#allocation5 + $0xb80] sm:$0xff]
    %v1970 = vld [vmem:[#allocation5 + $0xb88] sm:$0xff]
    %v1971 = vld [vmem:[#allocation5 + $0xb90] sm:$0xff]
    %v1972 = vld [vmem:[#allocation5 + $0xb98] sm:$0xff]
    %v1973 = vld [vmem:[#allocation5 + $0xba0] sm:$0xff]
    %v1974 = vld [vmem:[#allocation5 + $0xba8] sm:$0xff]
    %v1975 = vld [vmem:[#allocation5 + $0xbb0] sm:$0xff]
    %v1976 = vld [vmem:[#allocation5 + $0xbb8] sm:$0xff]
    %v1977 = vld [vmem:[#allocation5 + $0xbc0] sm:$0xff]
    %v1978 = vld [vmem:[#allocation5 + $0xbc8] sm:$0xff]
    %v1979 = vld [vmem:[#allocation5 + $0xbd0] sm:$0xff]
    %v1980 = vld [vmem:[#allocation5 + $0xbd8] sm:$0xff]
    %v1981 = vld [vmem:[#allocation5 + $0xbe0] sm:$0xff]
    %v1982 = vld [vmem:[#allocation5 + $0xbe8] sm:$0xff]
    %v1983 = vld [vmem:[#allocation5 + $0xbf0] sm:$0xff]
    %v1984 = vld [vmem:[#allocation5 + $0xbf8] sm:$0xff]
    %v1985 = vld [vmem:[#allocation5 + $0xc00] sm:$0xff]
    %v1986 = vld [vmem:[#allocation5 + $0xc08] sm:$0xff]
    %v1987 = vld [vmem:[#allocation5 + $0xc10] sm:$0xff]
    %v1988 = vld [vmem:[#allocation5 + $0xc18] sm:$0xff]
    %v1989 = vld [vmem:[#allocation5 + $0xc20] sm:$0xff]
    %v1990 = vld [vmem:[#allocation5 + $0xc28] sm:$0xff]
    %v1991 = vld [vmem:[#allocation5 + $0xc30] sm:$0xff]
    %v1992 = vld [vmem:[#allocation5 + $0xc38] sm:$0xff]
    %v1993 = vld [vmem:[#allocation5 + $0xc40] sm:$0xff]
    %v1994 = vld [vmem:[#allocation5 + $0xc48] sm:$0xff]
    %v1995 = vld [vmem:[#allocation5 + $0xc50] sm:$0xff]
    %v1996 = vld [vmem:[#allocation5 + $0xc58] sm:$0xff]
    %v1997 = vld [vmem:[#allocation5 + $0xc60] sm:$0xff]
    %v1998 = vld [vmem:[#allocation5 + $0xc68] sm:$0xff]
    %v1999 = vld [vmem:[#allocation5 + $0xc70] sm:$0xff]
    %v2000 = vld [vmem:[#allocation5 + $0xc78] sm:$0xff]
    %v2001 = vld [vmem:[#allocation5 + $0xc80] sm:$0xff]
    %v2002 = vld [vmem:[#allocation5 + $0xc88] sm:$0xff]
    %v2003 = vld [vmem:[#allocation5 + $0xc90] sm:$0xff]
    %v2004 = vld [vmem:[#allocation5 + $0xc98] sm:$0xff]
    %v2005 = vld [vmem:[#allocation5 + $0xca0] sm:$0xff]
    %v2006 = vld [vmem:[#allocation5 + $0xca8] sm:$0xff]
    %v2007 = vld [vmem:[#allocation5 + $0xcb0] sm:$0xff]
    %v2008 = vld [vmem:[#allocation5 + $0xcb8] sm:$0xff]
    %v2009 = vld [vmem:[#allocation5 + $0xcc0] sm:$0xff]
    %v2010 = vld [vmem:[#allocation5 + $0xcc8] sm:$0xff]
    %v2011 = vld [vmem:[#allocation5 + $0xcd0] sm:$0xff]
    %v2012 = vld [vmem:[#allocation5 + $0xcd8] sm:$0xff]
    %v2013 = vld [vmem:[#allocation5 + $0xce0] sm:$0xff]
    %v2014 = vld [vmem:[#allocation5 + $0xce8] sm:$0xff]
    %v2015 = vld [vmem:[#allocation5 + $0xcf0] sm:$0xff]
    %v2016 = vld [vmem:[#allocation5 + $0xcf8] sm:$0xff]
    %v2017 = vld [vmem:[#allocation5 + $0xd00] sm:$0xff]
    %v2018 = vld [vmem:[#allocation5 + $0xd08] sm:$0xff]
    %v2019 = vld [vmem:[#allocation5 + $0xd10] sm:$0xff]
    %v2020 = vld [vmem:[#allocation5 + $0xd18] sm:$0xff]
    %v2021 = vld [vmem:[#allocation5 + $0xd20] sm:$0xff]
    %v2022 = vld [vmem:[#allocation5 + $0xd28] sm:$0xff]
    %v2023 = vld [vmem:[#allocation5 + $0xd30] sm:$0xff]
    %v2024 = vld [vmem:[#allocation5 + $0xd38] sm:$0xff]
    %v2025 = vld [vmem:[#allocation5 + $0xd40] sm:$0xff]
    %v2026 = vld [vmem:[#allocation5 + $0xd48] sm:$0xff]
    %v2027 = vld [vmem:[#allocation5 + $0xd50] sm:$0xff]
    %v2028 = vld [vmem:[#allocation5 + $0xd58] sm:$0xff]
    %v2029 = vld [vmem:[#allocation5 + $0xd60] sm:$0xff]
    %v2030 = vld [vmem:[#allocation5 + $0xd68] sm:$0xff]
    %v2031 = vld [vmem:[#allocation5 + $0xd70] sm:$0xff]
    %v2032 = vld [vmem:[#allocation5 + $0xd78] sm:$0xff]
    %v2033 = vld [vmem:[#allocation5 + $0xd80] sm:$0xff]
    %v2034 = vld [vmem:[#allocation5 + $0xd88] sm:$0xff]
    %v2035 = vld [vmem:[#allocation5 + $0xd90] sm:$0xff]
    %v2036 = vld [vmem:[#allocation5 + $0xd98] sm:$0xff]
    %v2037 = vld [vmem:[#allocation5 + $0xda0] sm:$0xff]
    %v2038 = vld [vmem:[#allocation5 + $0xda8] sm:$0xff]
    %v2039 = vld [vmem:[#allocation5 + $0xdb0] sm:$0xff]
    %v2040 = vld [vmem:[#allocation5 + $0xdb8] sm:$0xff]
    %v2041 = vld [vmem:[#allocation5 + $0xdc0] sm:$0xff]
    %v2042 = vld [vmem:[#allocation5 + $0xdc8] sm:$0xff]
    %v2043 = vld [vmem:[#allocation5 + $0xdd0] sm:$0xff]
    %v2044 = vld [vmem:[#allocation5 + $0xdd8] sm:$0xff]
    %v2045 = vld [vmem:[#allocation5 + $0xde0] sm:$0xff]
    %v2046 = vld [vmem:[#allocation5 + $0xde8] sm:$0xff]
    %v2047 = vld [vmem:[#allocation5 + $0xdf0] sm:$0xff]
    %v2048 = vld [vmem:[#allocation5 + $0xdf8] sm:$0xff]
    %v2049 = vld [vmem:[#allocation5 + $0xe00] sm:$0xff]
    %v2050 = vld [vmem:[#allocation5 + $0xe08] sm:$0xff]
    %v2051 = vld [vmem:[#allocation5 + $0xe10] sm:$0xff]
    %v2052 = vld [vmem:[#allocation5 + $0xe18] sm:$0xff]
    %v2053 = vld [vmem:[#allocation5 + $0xe20] sm:$0xff]
    %v2054 = vld [vmem:[#allocation5 + $0xe28] sm:$0xff]
    %v2055 = vld [vmem:[#allocation5 + $0xe30] sm:$0xff]
    %v2056 = vld [vmem:[#allocation5 + $0xe38] sm:$0xff]
    %v2057 = vld [vmem:[#allocation5 + $0xe40] sm:$0xff]
    %v2058 = vld [vmem:[#allocation5 + $0xe48] sm:$0xff]
    %v2059 = vld [vmem:[#allocation5 + $0xe50] sm:$0xff]
    %v2060 = vld [vmem:[#allocation5 + $0xe58] sm:$0xff]
    %v2061 = vld [vmem:[#allocation5 + $0xe60] sm:$0xff]
    %v2062 = vld [vmem:[#allocation5 + $0xe68] sm:$0xff]
    %v2063 = vld [vmem:[#allocation5 + $0xe70] sm:$0xff]
    %v2064 = vld [vmem:[#allocation5 + $0xe78] sm:$0xff]
    %v2065 = vld [vmem:[#allocation5 + $0xe80] sm:$0xff]
    %v2066 = vld [vmem:[#allocation5 + $0xe88] sm:$0xff]
    %v2067 = vld [vmem:[#allocation5 + $0xe90] sm:$0xff]
    %v2068 = vld [vmem:[#allocation5 + $0xe98] sm:$0xff]
    %v2069 = vld [vmem:[#allocation5 + $0xea0] sm:$0xff]
    %v2070 = vld [vmem:[#allocation5 + $0xea8] sm:$0xff]
    %v2071 = vld [vmem:[#allocation5 + $0xeb0] sm:$0xff]
    %v2072 = vld [vmem:[#allocation5 + $0xeb8] sm:$0xff]
    %v2073 = vld [vmem:[#allocation5 + $0xec0] sm:$0xff]
    %v2074 = vld [vmem:[#allocation5 + $0xec8] sm:$0xff]
    %v2075 = vld [vmem:[#allocation5 + $0xed0] sm:$0xff]
    %v2076 = vld [vmem:[#allocation5 + $0xed8] sm:$0xff]
    %v2077 = vld [vmem:[#allocation5 + $0xee0] sm:$0xff]
    %v2078 = vld [vmem:[#allocation5 + $0xee8] sm:$0xff]
    %v2079 = vld [vmem:[#allocation5 + $0xef0] sm:$0xff]
    %v2080 = vld [vmem:[#allocation5 + $0xef8] sm:$0xff]
    %v2081 = vld [vmem:[#allocation5 + $0xf00] sm:$0xff]
    %v2082 = vld [vmem:[#allocation5 + $0xf08] sm:$0xff]
    %v2083 = vld [vmem:[#allocation5 + $0xf10] sm:$0xff]
    %v2084 = vld [vmem:[#allocation5 + $0xf18] sm:$0xff]
    %v2085 = vld [vmem:[#allocation5 + $0xf20] sm:$0xff]
    %v2086 = vld [vmem:[#allocation5 + $0xf28] sm:$0xff]
    %v2087 = vld [vmem:[#allocation5 + $0xf30] sm:$0xff]
    %v2088 = vld [vmem:[#allocation5 + $0xf38] sm:$0xff]
    %v2089 = vld [vmem:[#allocation5 + $0xf40] sm:$0xff]
    %v2090 = vld [vmem:[#allocation5 + $0xf48] sm:$0xff]
    %v2091 = vld [vmem:[#allocation5 + $0xf50] sm:$0xff]
    %v2092 = vld [vmem:[#allocation5 + $0xf58] sm:$0xff]
    %v2093 = vld [vmem:[#allocation5 + $0xf60] sm:$0xff]
    %v2094 = vld [vmem:[#allocation5 + $0xf68] sm:$0xff]
    %v2095 = vld [vmem:[#allocation5 + $0xf70] sm:$0xff]
    %v2096 = vld [vmem:[#allocation5 + $0xf78] sm:$0xff]
    %v2097 = vld [vmem:[#allocation5 + $0xf80] sm:$0xff]
    %v2098 = vld [vmem:[#allocation5 + $0xf88] sm:$0xff]
    %v2099 = vld [vmem:[#allocation5 + $0xf90] sm:$0xff]
    %v2100 = vld [vmem:[#allocation5 + $0xf98] sm:$0xff]
    %v2101 = vld [vmem:[#allocation5 + $0xfa0] sm:$0xff]
    %v2102 = vld [vmem:[#allocation5 + $0xfa8] sm:$0xff]
    %v2103 = vld [vmem:[#allocation5 + $0xfb0] sm:$0xff]
    %v2104 = vld [vmem:[#allocation5 + $0xfb8] sm:$0xff]
    %v2105 = vld [vmem:[#allocation5 + $0xfc0] sm:$0xff]
    %v2106 = vld [vmem:[#allocation5 + $0xfc8] sm:$0xff]
    %v2107 = vld [vmem:[#allocation5 + $0xfd0] sm:$0xff]
    %v2108 = vld [vmem:[#allocation5 + $0xfd8] sm:$0xff]
    %v2109 = vld [vmem:[#allocation5 + $0xfe0] sm:$0xff]
    %v2110 = vld [vmem:[#allocation5 + $0xfe8] sm:$0xff]
    %v2111 = vld [vmem:[#allocation5 + $0xff0] sm:$0xff]
    %v2112 = vld [vmem:[#allocation5 + $0xff8] sm:$0xff]
    %2113 = vmatpush.msra.mxu0 %v1841
    %2114 = vmatpush.msra.mxu0 %v1825
    %2115 = vmatpush.msra.mxu0 %v1809
    %2116 = vmatpush.msra.mxu0 %v1793
    %2117 = vmatpush.msra.mxu0 %v1777
    %2118 = vmatpush.msra.mxu0 %v1761
    %2119 = vmatpush.msra.mxu0 %v1745
    %2120 = vmatpush.msra.mxu0 %v1729
    %2121 = vmatpush.msra.mxu0 %v1713
    %2122 = vmatpush.msra.mxu0 %v1697
    %2123 = vmatpush.msra.mxu0 %v1681
    %2124 = vmatpush.msra.mxu0 %v1665
    %2125 = vmatpush.msra.mxu0 %v1649
    %2126 = vmatpush.msra.mxu0 %v1633
    %2127 = vmatpush.msra.mxu0 %v1617
    %2128 = vmatpush.msra.mxu0 %v1601
    %2129 = vmatmul.f32.gmra.mxu0 %v1223
    %v2130 = vpop.f32.mrf.mxu0
    %v2131 = vadd.f32 0.0, %v2130
    %2132 = vdwg.mxu0
    %2133 = vmatpush.msra.mxu0 %v2097
    %2134 = vmatpush.msra.mxu0 %v2081
    %2135 = vmatpush.msra.mxu0 %v2065
    %2136 = vmatpush.msra.mxu0 %v2049
    %2137 = vmatpush.msra.mxu0 %v2033
    %2138 = vmatpush.msra.mxu0 %v2017
    %2139 = vmatpush.msra.mxu0 %v2001
    %2140 = vmatpush.msra.mxu0 %v1985
    %2141 = vmatpush.msra.mxu0 %v1969
    %2142 = vmatpush.msra.mxu0 %v1953
    %2143 = vmatpush.msra.mxu0 %v1937
    %2144 = vmatpush.msra.mxu0 %v1921
    %2145 = vmatpush.msra.mxu0 %v1905
    %2146 = vmatpush.msra.mxu0 %v1889
    %2147 = vmatpush.msra.mxu0 %v1873
    %2148 = vmatpush.msra.mxu0 %v1857
    %2149 = vmatmul.f32.gmra.mxu0 %v1224
    %v2150 = vpop.f32.mrf.mxu0
    %v2151 = vadd.f32 %v2131, %v2150
    %2152 = vdwg.mxu0
    %2153 = vmatpush.msra.mxu0 %v1842
    %2154 = vmatpush.msra.mxu0 %v1826
    %2155 = vmatpush.msra.mxu0 %v1810
    %2156 = vmatpush.msra.mxu0 %v1794
    %2157 = vmatpush.msra.mxu0 %v1778
    %2158 = vmatpush.msra.mxu0 %v1762
    %2159 = vmatpush.msra.mxu0 %v1746
    %2160 = vmatpush.msra.mxu0 %v1730
    %2161 = vmatpush.msra.mxu0 %v1714
    %2162 = vmatpush.msra.mxu0 %v1698
    %2163 = vmatpush.msra.mxu0 %v1682
    %2164 = vmatpush.msra.mxu0 %v1666
    %2165 = vmatpush.msra.mxu0 %v1650
    %2166 = vmatpush.msra.mxu0 %v1634
    %2167 = vmatpush.msra.mxu0 %v1618
    %2168 = vmatpush.msra.mxu0 %v1602
    %2169 = vmatmul.f32.gmra.mxu0 %v1223
    %v2170 = vpop.f32.mrf.mxu0
    %v2171 = vadd.f32 0.0, %v2170
    %2172 = vdwg.mxu0
    %2173 = vmatpush.msra.mxu0 %v2098
    %2174 = vmatpush.msra.mxu0 %v2082
    %2175 = vmatpush.msra.mxu0 %v2066
    %2176 = vmatpush.msra.mxu0 %v2050
    %2177 = vmatpush.msra.mxu0 %v2034
    %2178 = vmatpush.msra.mxu0 %v2018
    %2179 = vmatpush.msra.mxu0 %v2002
    %2180 = vmatpush.msra.mxu0 %v1986
    %2181 = vmatpush.msra.mxu0 %v1970
    %2182 = vmatpush.msra.mxu0 %v1954
    %2183 = vmatpush.msra.mxu0 %v1938
    %2184 = vmatpush.msra.mxu0 %v1922
    %2185 = vmatpush.msra.mxu0 %v1906
    %2186 = vmatpush.msra.mxu0 %v1890
    %2187 = vmatpush.msra.mxu0 %v1874
    %2188 = vmatpush.msra.mxu0 %v1858
    %2189 = vmatmul.f32.gmra.mxu0 %v1224
    %v2190 = vpop.f32.mrf.mxu0
    %v2191 = vadd.f32 %v2171, %v2190
    %2192 = vdwg.mxu0
    %2193 = vmatpush.msra.mxu0 %v1843
    %2194 = vmatpush.msra.mxu0 %v1827
    %2195 = vmatpush.msra.mxu0 %v1811
    %2196 = vmatpush.msra.mxu0 %v1795
    %2197 = vmatpush.msra.mxu0 %v1779
    %2198 = vmatpush.msra.mxu0 %v1763
    %2199 = vmatpush.msra.mxu0 %v1747
    %2200 = vmatpush.msra.mxu0 %v1731
    %2201 = vmatpush.msra.mxu0 %v1715
    %2202 = vmatpush.msra.mxu0 %v1699
    %2203 = vmatpush.msra.mxu0 %v1683
    %2204 = vmatpush.msra.mxu0 %v1667
    %2205 = vmatpush.msra.mxu0 %v1651
    %2206 = vmatpush.msra.mxu0 %v1635
    %2207 = vmatpush.msra.mxu0 %v1619
    %2208 = vmatpush.msra.mxu0 %v1603
    %2209 = vmatmul.f32.gmra.mxu0 %v1223
    %v2210 = vpop.f32.mrf.mxu0
    %v2211 = vadd.f32 0.0, %v2210
    %2212 = vdwg.mxu0
    %2213 = vmatpush.msra.mxu0 %v2099
    %2214 = vmatpush.msra.mxu0 %v2083
    %2215 = vmatpush.msra.mxu0 %v2067
    %2216 = vmatpush.msra.mxu0 %v2051
    %2217 = vmatpush.msra.mxu0 %v2035
    %2218 = vmatpush.msra.mxu0 %v2019
    %2219 = vmatpush.msra.mxu0 %v2003
    %2220 = vmatpush.msra.mxu0 %v1987
    %2221 = vmatpush.msra.mxu0 %v1971
    %2222 = vmatpush.msra.mxu0 %v1955
    %2223 = vmatpush.msra.mxu0 %v1939
    %2224 = vmatpush.msra.mxu0 %v1923
    %2225 = vmatpush.msra.mxu0 %v1907
    %2226 = vmatpush.msra.mxu0 %v1891
    %2227 = vmatpush.msra.mxu0 %v1875
    %2228 = vmatpush.msra.mxu0 %v1859
    %2229 = vmatmul.f32.gmra.mxu0 %v1224
    %v2230 = vpop.f32.mrf.mxu0
    %v2231 = vadd.f32 %v2211, %v2230
    %2232 = vdwg.mxu0
    %2233 = vmatpush.msra.mxu0 %v1844
    %2234 = vmatpush.msra.mxu0 %v1828
    %2235 = vmatpush.msra.mxu0 %v1812
    %2236 = vmatpush.msra.mxu0 %v1796
    %2237 = vmatpush.msra.mxu0 %v1780
    %2238 = vmatpush.msra.mxu0 %v1764
    %2239 = vmatpush.msra.mxu0 %v1748
    %2240 = vmatpush.msra.mxu0 %v1732
    %2241 = vmatpush.msra.mxu0 %v1716
    %2242 = vmatpush.msra.mxu0 %v1700
    %2243 = vmatpush.msra.mxu0 %v1684
    %2244 = vmatpush.msra.mxu0 %v1668
    %2245 = vmatpush.msra.mxu0 %v1652
    %2246 = vmatpush.msra.mxu0 %v1636
    %2247 = vmatpush.msra.mxu0 %v1620
    %2248 = vmatpush.msra.mxu0 %v1604
    %2249 = vmatmul.f32.gmra.mxu0 %v1223
    %v2250 = vpop.f32.mrf.mxu0
    %v2251 = vadd.f32 0.0, %v2250
    %2252 = vdwg.mxu0
    %2253 = vmatpush.msra.mxu0 %v2100
    %2254 = vmatpush.msra.mxu0 %v2084
    %2255 = vmatpush.msra.mxu0 %v2068
    %2256 = vmatpush.msra.mxu0 %v2052
    %2257 = vmatpush.msra.mxu0 %v2036
    %2258 = vmatpush.msra.mxu0 %v2020
    %2259 = vmatpush.msra.mxu0 %v2004
    %2260 = vmatpush.msra.mxu0 %v1988
    %2261 = vmatpush.msra.mxu0 %v1972
    %2262 = vmatpush.msra.mxu0 %v1956
    %2263 = vmatpush.msra.mxu0 %v1940
    %2264 = vmatpush.msra.mxu0 %v1924
    %2265 = vmatpush.msra.mxu0 %v1908
    %2266 = vmatpush.msra.mxu0 %v1892
    %2267 = vmatpush.msra.mxu0 %v1876
    %2268 = vmatpush.msra.mxu0 %v1860
    %2269 = vmatmul.f32.gmra.mxu0 %v1224
    %v2270 = vpop.f32.mrf.mxu0
    %v2271 = vadd.f32 %v2251, %v2270
    %2272 = vdwg.mxu0
    %2273 = vmatpush.msra.mxu0 %v1845
    %2274 = vmatpush.msra.mxu0 %v1829
    %2275 = vmatpush.msra.mxu0 %v1813
    %2276 = vmatpush.msra.mxu0 %v1797
    %2277 = vmatpush.msra.mxu0 %v1781
    %2278 = vmatpush.msra.mxu0 %v1765
    %2279 = vmatpush.msra.mxu0 %v1749
    %2280 = vmatpush.msra.mxu0 %v1733
    %2281 = vmatpush.msra.mxu0 %v1717
    %2282 = vmatpush.msra.mxu0 %v1701
    %2283 = vmatpush.msra.mxu0 %v1685
    %2284 = vmatpush.msra.mxu0 %v1669
    %2285 = vmatpush.msra.mxu0 %v1653
    %2286 = vmatpush.msra.mxu0 %v1637
    %2287 = vmatpush.msra.mxu0 %v1621
    %2288 = vmatpush.msra.mxu0 %v1605
    %2289 = vmatmul.f32.gmra.mxu0 %v1223
    %v2290 = vpop.f32.mrf.mxu0
    %v2291 = vadd.f32 0.0, %v2290
    %2292 = vdwg.mxu0
    %2293 = vmatpush.msra.mxu0 %v2101
    %2294 = vmatpush.msra.mxu0 %v2085
    %2295 = vmatpush.msra.mxu0 %v2069
    %2296 = vmatpush.msra.mxu0 %v2053
    %2297 = vmatpush.msra.mxu0 %v2037
    %2298 = vmatpush.msra.mxu0 %v2021
    %2299 = vmatpush.msra.mxu0 %v2005
    %2300 = vmatpush.msra.mxu0 %v1989
    %2301 = vmatpush.msra.mxu0 %v1973
    %2302 = vmatpush.msra.mxu0 %v1957
    %2303 = vmatpush.msra.mxu0 %v1941
    %2304 = vmatpush.msra.mxu0 %v1925
    %2305 = vmatpush.msra.mxu0 %v1909
    %2306 = vmatpush.msra.mxu0 %v1893
    %2307 = vmatpush.msra.mxu0 %v1877
    %2308 = vmatpush.msra.mxu0 %v1861
    %2309 = vmatmul.f32.gmra.mxu0 %v1224
    %v2310 = vpop.f32.mrf.mxu0
    %v2311 = vadd.f32 %v2291, %v2310
    %2312 = vdwg.mxu0
    %2313 = vmatpush.msra.mxu0 %v1846
    %2314 = vmatpush.msra.mxu0 %v1830
    %2315 = vmatpush.msra.mxu0 %v1814
    %2316 = vmatpush.msra.mxu0 %v1798
    %2317 = vmatpush.msra.mxu0 %v1782
    %2318 = vmatpush.msra.mxu0 %v1766
    %2319 = vmatpush.msra.mxu0 %v1750
    %2320 = vmatpush.msra.mxu0 %v1734
    %2321 = vmatpush.msra.mxu0 %v1718
    %2322 = vmatpush.msra.mxu0 %v1702
    %2323 = vmatpush.msra.mxu0 %v1686
    %2324 = vmatpush.msra.mxu0 %v1670
    %2325 = vmatpush.msra.mxu0 %v1654
    %2326 = vmatpush.msra.mxu0 %v1638
    %2327 = vmatpush.msra.mxu0 %v1622
    %2328 = vmatpush.msra.mxu0 %v1606
    %2329 = vmatmul.f32.gmra.mxu0 %v1223
    %v2330 = vpop.f32.mrf.mxu0
    %v2331 = vadd.f32 0.0, %v2330
    %2332 = vdwg.mxu0
    %2333 = vmatpush.msra.mxu0 %v2102
    %2334 = vmatpush.msra.mxu0 %v2086
    %2335 = vmatpush.msra.mxu0 %v2070
    %2336 = vmatpush.msra.mxu0 %v2054
    %2337 = vmatpush.msra.mxu0 %v2038
    %2338 = vmatpush.msra.mxu0 %v2022
    %2339 = vmatpush.msra.mxu0 %v2006
    %2340 = vmatpush.msra.mxu0 %v1990
    %2341 = vmatpush.msra.mxu0 %v1974
    %2342 = vmatpush.msra.mxu0 %v1958
    %2343 = vmatpush.msra.mxu0 %v1942
    %2344 = vmatpush.msra.mxu0 %v1926
    %2345 = vmatpush.msra.mxu0 %v1910
    %2346 = vmatpush.msra.mxu0 %v1894
    %2347 = vmatpush.msra.mxu0 %v1878
    %2348 = vmatpush.msra.mxu0 %v1862
    %2349 = vmatmul.f32.gmra.mxu0 %v1224
    %v2350 = vpop.f32.mrf.mxu0
    %v2351 = vadd.f32 %v2331, %v2350
    %2352 = vdwg.mxu0
    %2353 = vmatpush.msra.mxu0 %v1847
    %2354 = vmatpush.msra.mxu0 %v1831
    %2355 = vmatpush.msra.mxu0 %v1815
    %2356 = vmatpush.msra.mxu0 %v1799
    %2357 = vmatpush.msra.mxu0 %v1783
    %2358 = vmatpush.msra.mxu0 %v1767
    %2359 = vmatpush.msra.mxu0 %v1751
    %2360 = vmatpush.msra.mxu0 %v1735
    %2361 = vmatpush.msra.mxu0 %v1719
    %2362 = vmatpush.msra.mxu0 %v1703
    %2363 = vmatpush.msra.mxu0 %v1687
    %2364 = vmatpush.msra.mxu0 %v1671
    %2365 = vmatpush.msra.mxu0 %v1655
    %2366 = vmatpush.msra.mxu0 %v1639
    %2367 = vmatpush.msra.mxu0 %v1623
    %2368 = vmatpush.msra.mxu0 %v1607
    %2369 = vmatmul.f32.gmra.mxu0 %v1223
    %v2370 = vpop.f32.mrf.mxu0
    %v2371 = vadd.f32 0.0, %v2370
    %2372 = vdwg.mxu0
    %2373 = vmatpush.msra.mxu0 %v2103
    %2374 = vmatpush.msra.mxu0 %v2087
    %2375 = vmatpush.msra.mxu0 %v2071
    %2376 = vmatpush.msra.mxu0 %v2055
    %2377 = vmatpush.msra.mxu0 %v2039
    %2378 = vmatpush.msra.mxu0 %v2023
    %2379 = vmatpush.msra.mxu0 %v2007
    %2380 = vmatpush.msra.mxu0 %v1991
    %2381 = vmatpush.msra.mxu0 %v1975
    %2382 = vmatpush.msra.mxu0 %v1959
    %2383 = vmatpush.msra.mxu0 %v1943
    %2384 = vmatpush.msra.mxu0 %v1927
    %2385 = vmatpush.msra.mxu0 %v1911
    %2386 = vmatpush.msra.mxu0 %v1895
    %2387 = vmatpush.msra.mxu0 %v1879
    %2388 = vmatpush.msra.mxu0 %v1863
    %2389 = vmatmul.f32.gmra.mxu0 %v1224
    %v2390 = vpop.f32.mrf.mxu0
    %v2391 = vadd.f32 %v2371, %v2390
    %2392 = vdwg.mxu0
    %2393 = vmatpush.msra.mxu0 %v1848
    %2394 = vmatpush.msra.mxu0 %v1832
    %2395 = vmatpush.msra.mxu0 %v1816
    %2396 = vmatpush.msra.mxu0 %v1800
    %2397 = vmatpush.msra.mxu0 %v1784
    %2398 = vmatpush.msra.mxu0 %v1768
    %2399 = vmatpush.msra.mxu0 %v1752
    %2400 = vmatpush.msra.mxu0 %v1736
    %2401 = vmatpush.msra.mxu0 %v1720
    %2402 = vmatpush.msra.mxu0 %v1704
    %2403 = vmatpush.msra.mxu0 %v1688
    %2404 = vmatpush.msra.mxu0 %v1672
    %2405 = vmatpush.msra.mxu0 %v1656
    %2406 = vmatpush.msra.mxu0 %v1640
    %2407 = vmatpush.msra.mxu0 %v1624
    %2408 = vmatpush.msra.mxu0 %v1608
    %2409 = vmatmul.f32.gmra.mxu0 %v1223
    %v2410 = vpop.f32.mrf.mxu0
    %v2411 = vadd.f32 0.0, %v2410
    %2412 = vdwg.mxu0
    %2413 = vmatpush.msra.mxu0 %v2104
    %2414 = vmatpush.msra.mxu0 %v2088
    %2415 = vmatpush.msra.mxu0 %v2072
    %2416 = vmatpush.msra.mxu0 %v2056
    %2417 = vmatpush.msra.mxu0 %v2040
    %2418 = vmatpush.msra.mxu0 %v2024
    %2419 = vmatpush.msra.mxu0 %v2008
    %2420 = vmatpush.msra.mxu0 %v1992
    %2421 = vmatpush.msra.mxu0 %v1976
    %2422 = vmatpush.msra.mxu0 %v1960
    %2423 = vmatpush.msra.mxu0 %v1944
    %2424 = vmatpush.msra.mxu0 %v1928
    %2425 = vmatpush.msra.mxu0 %v1912
    %2426 = vmatpush.msra.mxu0 %v1896
    %2427 = vmatpush.msra.mxu0 %v1880
    %2428 = vmatpush.msra.mxu0 %v1864
    %2429 = vmatmul.f32.gmra.mxu0 %v1224
    %v2430 = vpop.f32.mrf.mxu0
    %v2431 = vadd.f32 %v2411, %v2430
    %2432 = vdwg.mxu0
    %2433 = vmatpush.msra.mxu0 %v1849
    %2434 = vmatpush.msra.mxu0 %v1833
    %2435 = vmatpush.msra.mxu0 %v1817
    %2436 = vmatpush.msra.mxu0 %v1801
    %2437 = vmatpush.msra.mxu0 %v1785
    %2438 = vmatpush.msra.mxu0 %v1769
    %2439 = vmatpush.msra.mxu0 %v1753
    %2440 = vmatpush.msra.mxu0 %v1737
    %2441 = vmatpush.msra.mxu0 %v1721
    %2442 = vmatpush.msra.mxu0 %v1705
    %2443 = vmatpush.msra.mxu0 %v1689
    %2444 = vmatpush.msra.mxu0 %v1673
    %2445 = vmatpush.msra.mxu0 %v1657
    %2446 = vmatpush.msra.mxu0 %v1641
    %2447 = vmatpush.msra.mxu0 %v1625
    %2448 = vmatpush.msra.mxu0 %v1609
    %2449 = vmatmul.f32.gmra.mxu0 %v1223
    %v2450 = vpop.f32.mrf.mxu0
    %v2451 = vadd.f32 0.0, %v2450
    %2452 = vdwg.mxu0
    %2453 = vmatpush.msra.mxu0 %v2105
    %2454 = vmatpush.msra.mxu0 %v2089
    %2455 = vmatpush.msra.mxu0 %v2073
    %2456 = vmatpush.msra.mxu0 %v2057
    %2457 = vmatpush.msra.mxu0 %v2041
    %2458 = vmatpush.msra.mxu0 %v2025
    %2459 = vmatpush.msra.mxu0 %v2009
    %2460 = vmatpush.msra.mxu0 %v1993
    %2461 = vmatpush.msra.mxu0 %v1977
    %2462 = vmatpush.msra.mxu0 %v1961
    %2463 = vmatpush.msra.mxu0 %v1945
    %2464 = vmatpush.msra.mxu0 %v1929
    %2465 = vmatpush.msra.mxu0 %v1913
    %2466 = vmatpush.msra.mxu0 %v1897
    %2467 = vmatpush.msra.mxu0 %v1881
    %2468 = vmatpush.msra.mxu0 %v1865
    %2469 = vmatmul.f32.gmra.mxu0 %v1224
    %v2470 = vpop.f32.mrf.mxu0
    %v2471 = vadd.f32 %v2451, %v2470
    %2472 = vdwg.mxu0
    %2473 = vmatpush.msra.mxu0 %v1850
    %2474 = vmatpush.msra.mxu0 %v1834
    %2475 = vmatpush.msra.mxu0 %v1818
    %2476 = vmatpush.msra.mxu0 %v1802
    %2477 = vmatpush.msra.mxu0 %v1786
    %2478 = vmatpush.msra.mxu0 %v1770
    %2479 = vmatpush.msra.mxu0 %v1754
    %2480 = vmatpush.msra.mxu0 %v1738
    %2481 = vmatpush.msra.mxu0 %v1722
    %2482 = vmatpush.msra.mxu0 %v1706
    %2483 = vmatpush.msra.mxu0 %v1690
    %2484 = vmatpush.msra.mxu0 %v1674
    %2485 = vmatpush.msra.mxu0 %v1658
    %2486 = vmatpush.msra.mxu0 %v1642
    %2487 = vmatpush.msra.mxu0 %v1626
    %2488 = vmatpush.msra.mxu0 %v1610
    %2489 = vmatmul.f32.gmra.mxu0 %v1223
    %v2490 = vpop.f32.mrf.mxu0
    %v2491 = vadd.f32 0.0, %v2490
    %2492 = vdwg.mxu0
    %2493 = vmatpush.msra.mxu0 %v2106
    %2494 = vmatpush.msra.mxu0 %v2090
    %2495 = vmatpush.msra.mxu0 %v2074
    %2496 = vmatpush.msra.mxu0 %v2058
    %2497 = vmatpush.msra.mxu0 %v2042
    %2498 = vmatpush.msra.mxu0 %v2026
    %2499 = vmatpush.msra.mxu0 %v2010
    %2500 = vmatpush.msra.mxu0 %v1994
    %2501 = vmatpush.msra.mxu0 %v1978
    %2502 = vmatpush.msra.mxu0 %v1962
    %2503 = vmatpush.msra.mxu0 %v1946
    %2504 = vmatpush.msra.mxu0 %v1930
    %2505 = vmatpush.msra.mxu0 %v1914
    %2506 = vmatpush.msra.mxu0 %v1898
    %2507 = vmatpush.msra.mxu0 %v1882
    %2508 = vmatpush.msra.mxu0 %v1866
    %2509 = vmatmul.f32.gmra.mxu0 %v1224
    %v2510 = vpop.f32.mrf.mxu0
    %v2511 = vadd.f32 %v2491, %v2510
    %2512 = vdwg.mxu0
    %2513 = vmatpush.msra.mxu0 %v1851
    %2514 = vmatpush.msra.mxu0 %v1835
    %2515 = vmatpush.msra.mxu0 %v1819
    %2516 = vmatpush.msra.mxu0 %v1803
    %2517 = vmatpush.msra.mxu0 %v1787
    %2518 = vmatpush.msra.mxu0 %v1771
    %2519 = vmatpush.msra.mxu0 %v1755
    %2520 = vmatpush.msra.mxu0 %v1739
    %2521 = vmatpush.msra.mxu0 %v1723
    %2522 = vmatpush.msra.mxu0 %v1707
    %2523 = vmatpush.msra.mxu0 %v1691
    %2524 = vmatpush.msra.mxu0 %v1675
    %2525 = vmatpush.msra.mxu0 %v1659
    %2526 = vmatpush.msra.mxu0 %v1643
    %2527 = vmatpush.msra.mxu0 %v1627
    %2528 = vmatpush.msra.mxu0 %v1611
    %2529 = vmatmul.f32.gmra.mxu0 %v1223
    %v2530 = vpop.f32.mrf.mxu0
    %v2531 = vadd.f32 0.0, %v2530
    %2532 = vdwg.mxu0
    %2533 = vmatpush.msra.mxu0 %v2107
    %2534 = vmatpush.msra.mxu0 %v2091
    %2535 = vmatpush.msra.mxu0 %v2075
    %2536 = vmatpush.msra.mxu0 %v2059
    %2537 = vmatpush.msra.mxu0 %v2043
    %2538 = vmatpush.msra.mxu0 %v2027
    %2539 = vmatpush.msra.mxu0 %v2011
    %2540 = vmatpush.msra.mxu0 %v1995
    %2541 = vmatpush.msra.mxu0 %v1979
    %2542 = vmatpush.msra.mxu0 %v1963
    %2543 = vmatpush.msra.mxu0 %v1947
    %2544 = vmatpush.msra.mxu0 %v1931
    %2545 = vmatpush.msra.mxu0 %v1915
    %2546 = vmatpush.msra.mxu0 %v1899
    %2547 = vmatpush.msra.mxu0 %v1883
    %2548 = vmatpush.msra.mxu0 %v1867
    %2549 = vmatmul.f32.gmra.mxu0 %v1224
    %v2550 = vpop.f32.mrf.mxu0
    %v2551 = vadd.f32 %v2531, %v2550
    %2552 = vdwg.mxu0
    %2553 = vmatpush.msra.mxu0 %v1852
    %2554 = vmatpush.msra.mxu0 %v1836
    %2555 = vmatpush.msra.mxu0 %v1820
    %2556 = vmatpush.msra.mxu0 %v1804
    %2557 = vmatpush.msra.mxu0 %v1788
    %2558 = vmatpush.msra.mxu0 %v1772
    %2559 = vmatpush.msra.mxu0 %v1756
    %2560 = vmatpush.msra.mxu0 %v1740
    %2561 = vmatpush.msra.mxu0 %v1724
    %2562 = vmatpush.msra.mxu0 %v1708
    %2563 = vmatpush.msra.mxu0 %v1692
    %2564 = vmatpush.msra.mxu0 %v1676
    %2565 = vmatpush.msra.mxu0 %v1660
    %2566 = vmatpush.msra.mxu0 %v1644
    %2567 = vmatpush.msra.mxu0 %v1628
    %2568 = vmatpush.msra.mxu0 %v1612
    %2569 = vmatmul.f32.gmra.mxu0 %v1223
    %v2570 = vpop.f32.mrf.mxu0
    %v2571 = vadd.f32 0.0, %v2570
    %2572 = vdwg.mxu0
    %2573 = vmatpush.msra.mxu0 %v2108
    %2574 = vmatpush.msra.mxu0 %v2092
    %2575 = vmatpush.msra.mxu0 %v2076
    %2576 = vmatpush.msra.mxu0 %v2060
    %2577 = vmatpush.msra.mxu0 %v2044
    %2578 = vmatpush.msra.mxu0 %v2028
    %2579 = vmatpush.msra.mxu0 %v2012
    %2580 = vmatpush.msra.mxu0 %v1996
    %2581 = vmatpush.msra.mxu0 %v1980
    %2582 = vmatpush.msra.mxu0 %v1964
    %2583 = vmatpush.msra.mxu0 %v1948
    %2584 = vmatpush.msra.mxu0 %v1932
    %2585 = vmatpush.msra.mxu0 %v1916
    %2586 = vmatpush.msra.mxu0 %v1900
    %2587 = vmatpush.msra.mxu0 %v1884
    %2588 = vmatpush.msra.mxu0 %v1868
    %2589 = vmatmul.f32.gmra.mxu0 %v1224
    %v2590 = vpop.f32.mrf.mxu0
    %v2591 = vadd.f32 %v2571, %v2590
    %2592 = vdwg.mxu0
    %2593 = vmatpush.msra.mxu0 %v1853
    %2594 = vmatpush.msra.mxu0 %v1837
    %2595 = vmatpush.msra.mxu0 %v1821
    %2596 = vmatpush.msra.mxu0 %v1805
    %2597 = vmatpush.msra.mxu0 %v1789
    %2598 = vmatpush.msra.mxu0 %v1773
    %2599 = vmatpush.msra.mxu0 %v1757
    %2600 = vmatpush.msra.mxu0 %v1741
    %2601 = vmatpush.msra.mxu0 %v1725
    %2602 = vmatpush.msra.mxu0 %v1709
    %2603 = vmatpush.msra.mxu0 %v1693
    %2604 = vmatpush.msra.mxu0 %v1677
    %2605 = vmatpush.msra.mxu0 %v1661
    %2606 = vmatpush.msra.mxu0 %v1645
    %2607 = vmatpush.msra.mxu0 %v1629
    %2608 = vmatpush.msra.mxu0 %v1613
    %2609 = vmatmul.f32.gmra.mxu0 %v1223
    %v2610 = vpop.f32.mrf.mxu0
    %v2611 = vadd.f32 0.0, %v2610
    %2612 = vdwg.mxu0
    %2613 = vmatpush.msra.mxu0 %v2109
    %2614 = vmatpush.msra.mxu0 %v2093
    %2615 = vmatpush.msra.mxu0 %v2077
    %2616 = vmatpush.msra.mxu0 %v2061
    %2617 = vmatpush.msra.mxu0 %v2045
    %2618 = vmatpush.msra.mxu0 %v2029
    %2619 = vmatpush.msra.mxu0 %v2013
    %2620 = vmatpush.msra.mxu0 %v1997
    %2621 = vmatpush.msra.mxu0 %v1981
    %2622 = vmatpush.msra.mxu0 %v1965
    %2623 = vmatpush.msra.mxu0 %v1949
    %2624 = vmatpush.msra.mxu0 %v1933
    %2625 = vmatpush.msra.mxu0 %v1917
    %2626 = vmatpush.msra.mxu0 %v1901
    %2627 = vmatpush.msra.mxu0 %v1885
    %2628 = vmatpush.msra.mxu0 %v1869
    %2629 = vmatmul.f32.gmra.mxu0 %v1224
    %v2630 = vpop.f32.mrf.mxu0
    %v2631 = vadd.f32 %v2611, %v2630
    %2632 = vdwg.mxu0
    %2633 = vmatpush.msra.mxu0 %v1854
    %2634 = vmatpush.msra.mxu0 %v1838
    %2635 = vmatpush.msra.mxu0 %v1822
    %2636 = vmatpush.msra.mxu0 %v1806
    %2637 = vmatpush.msra.mxu0 %v1790
    %2638 = vmatpush.msra.mxu0 %v1774
    %2639 = vmatpush.msra.mxu0 %v1758
    %2640 = vmatpush.msra.mxu0 %v1742
    %2641 = vmatpush.msra.mxu0 %v1726
    %2642 = vmatpush.msra.mxu0 %v1710
    %2643 = vmatpush.msra.mxu0 %v1694
    %2644 = vmatpush.msra.mxu0 %v1678
    %2645 = vmatpush.msra.mxu0 %v1662
    %2646 = vmatpush.msra.mxu0 %v1646
    %2647 = vmatpush.msra.mxu0 %v1630
    %2648 = vmatpush.msra.mxu0 %v1614
    %2649 = vmatmul.f32.gmra.mxu0 %v1223
    %v2650 = vpop.f32.mrf.mxu0
    %v2651 = vadd.f32 0.0, %v2650
    %2652 = vdwg.mxu0
    %2653 = vmatpush.msra.mxu0 %v2110
    %2654 = vmatpush.msra.mxu0 %v2094
    %2655 = vmatpush.msra.mxu0 %v2078
    %2656 = vmatpush.msra.mxu0 %v2062
    %2657 = vmatpush.msra.mxu0 %v2046
    %2658 = vmatpush.msra.mxu0 %v2030
    %2659 = vmatpush.msra.mxu0 %v2014
    %2660 = vmatpush.msra.mxu0 %v1998
    %2661 = vmatpush.msra.mxu0 %v1982
    %2662 = vmatpush.msra.mxu0 %v1966
    %2663 = vmatpush.msra.mxu0 %v1950
    %2664 = vmatpush.msra.mxu0 %v1934
    %2665 = vmatpush.msra.mxu0 %v1918
    %2666 = vmatpush.msra.mxu0 %v1902
    %2667 = vmatpush.msra.mxu0 %v1886
    %2668 = vmatpush.msra.mxu0 %v1870
    %2669 = vmatmul.f32.gmra.mxu0 %v1224
    %v2670 = vpop.f32.mrf.mxu0
    %v2671 = vadd.f32 %v2651, %v2670
    %2672 = vdwg.mxu0
    %2673 = vmatpush.msra.mxu0 %v1855
    %2674 = vmatpush.msra.mxu0 %v1839
    %2675 = vmatpush.msra.mxu0 %v1823
    %2676 = vmatpush.msra.mxu0 %v1807
    %2677 = vmatpush.msra.mxu0 %v1791
    %2678 = vmatpush.msra.mxu0 %v1775
    %2679 = vmatpush.msra.mxu0 %v1759
    %2680 = vmatpush.msra.mxu0 %v1743
    %2681 = vmatpush.msra.mxu0 %v1727
    %2682 = vmatpush.msra.mxu0 %v1711
    %2683 = vmatpush.msra.mxu0 %v1695
    %2684 = vmatpush.msra.mxu0 %v1679
    %2685 = vmatpush.msra.mxu0 %v1663
    %2686 = vmatpush.msra.mxu0 %v1647
    %2687 = vmatpush.msra.mxu0 %v1631
    %2688 = vmatpush.msra.mxu0 %v1615
    %2689 = vmatmul.f32.gmra.mxu0 %v1223
    %v2690 = vpop.f32.mrf.mxu0
    %v2691 = vadd.f32 0.0, %v2690
    %2692 = vdwg.mxu0
    %2693 = vmatpush.msra.mxu0 %v2111
    %2694 = vmatpush.msra.mxu0 %v2095
    %2695 = vmatpush.msra.mxu0 %v2079
    %2696 = vmatpush.msra.mxu0 %v2063
    %2697 = vmatpush.msra.mxu0 %v2047
    %2698 = vmatpush.msra.mxu0 %v2031
    %2699 = vmatpush.msra.mxu0 %v2015
    %2700 = vmatpush.msra.mxu0 %v1999
    %2701 = vmatpush.msra.mxu0 %v1983
    %2702 = vmatpush.msra.mxu0 %v1967
    %2703 = vmatpush.msra.mxu0 %v1951
    %2704 = vmatpush.msra.mxu0 %v1935
    %2705 = vmatpush.msra.mxu0 %v1919
    %2706 = vmatpush.msra.mxu0 %v1903
    %2707 = vmatpush.msra.mxu0 %v1887
    %2708 = vmatpush.msra.mxu0 %v1871
    %2709 = vmatmul.f32.gmra.mxu0 %v1224
    %v2710 = vpop.f32.mrf.mxu0
    %v2711 = vadd.f32 %v2691, %v2710
    %2712 = vdwg.mxu0
    %2713 = vmatpush.msra.mxu0 %v1856
    %2714 = vmatpush.msra.mxu0 %v1840
    %2715 = vmatpush.msra.mxu0 %v1824
    %2716 = vmatpush.msra.mxu0 %v1808
    %2717 = vmatpush.msra.mxu0 %v1792
    %2718 = vmatpush.msra.mxu0 %v1776
    %2719 = vmatpush.msra.mxu0 %v1760
    %2720 = vmatpush.msra.mxu0 %v1744
    %2721 = vmatpush.msra.mxu0 %v1728
    %2722 = vmatpush.msra.mxu0 %v1712
    %2723 = vmatpush.msra.mxu0 %v1696
    %2724 = vmatpush.msra.mxu0 %v1680
    %2725 = vmatpush.msra.mxu0 %v1664
    %2726 = vmatpush.msra.mxu0 %v1648
    %2727 = vmatpush.msra.mxu0 %v1632
    %2728 = vmatpush.msra.mxu0 %v1616
    %2729 = vmatmul.f32.gmra.mxu0 %v1223
    %v2730 = vpop.f32.mrf.mxu0
    %v2731 = vadd.f32 0.0, %v2730
    %2732 = vdwg.mxu0
    %2733 = vmatpush.msra.mxu0 %v2112
    %2734 = vmatpush.msra.mxu0 %v2096
    %2735 = vmatpush.msra.mxu0 %v2080
    %2736 = vmatpush.msra.mxu0 %v2064
    %2737 = vmatpush.msra.mxu0 %v2048
    %2738 = vmatpush.msra.mxu0 %v2032
    %2739 = vmatpush.msra.mxu0 %v2016
    %2740 = vmatpush.msra.mxu0 %v2000
    %2741 = vmatpush.msra.mxu0 %v1984
    %2742 = vmatpush.msra.mxu0 %v1968
    %2743 = vmatpush.msra.mxu0 %v1952
    %2744 = vmatpush.msra.mxu0 %v1936
    %2745 = vmatpush.msra.mxu0 %v1920
    %2746 = vmatpush.msra.mxu0 %v1904
    %2747 = vmatpush.msra.mxu0 %v1888
    %2748 = vmatpush.msra.mxu0 %v1872
    %2749 = vmatmul.f32.gmra.mxu0 %v1224
    %v2750 = vpop.f32.mrf.mxu0
    %v2751 = vadd.f32 %v2731, %v2750
    %2752 = vdwg.mxu0
    %v2753 = vld [vmem:[#allocation8] sm:$0xf]
    %v2758 = vrot.slane %v2191, 7
    %v2759 = vrot.slane %v2231, 6
    %v2760 = vrot.slane %v2271, 5
    %vm2761 = vcmask 1040384
    %v2762 = vsel %vm2761, %v2151, %v2758
    %vm2763 = vcmask 1042434
    %v2764 = vsel %vm2763, %v2759, %v2760
    %vm2765 = vcmask 1041408
    %v2766 = vsel %vm2765, %v2762, %v2764
    %v2768 = vadd.f32 %v2753, %v2766
    %2773 = vst [vmem:[#allocation1] sm:$0xff] %v2311
    %2774 = vst [vmem:[#allocation1 + $0x9] sm:$0xff] %v2351
    %2775 = vst [vmem:[#allocation1 + $0x12] sm:$0xff] %v2391
    %2776 = vst [vmem:[#allocation1 + $0x1b] sm:$0xff] %v2431
    %s2777 = scalar_lea.vmem [#allocation1], 1
    %v2778 = vld [vmem:[%s2777] ss:$9 sm:$0xff]
    %v2780 = vadd.f32 %v2768, %v2778
    %2785 = vst [vmem:[#allocation1] sm:$0xff] %v2471
    %2786 = vst [vmem:[#allocation1 + $0x9] sm:$0xff] %v2511
    %2787 = vst [vmem:[#allocation1 + $0x12] sm:$0xff] %v2551
    %2788 = vst [vmem:[#allocation1 + $0x1b] sm:$0xff] %v2591
    %s2789 = scalar_lea.vmem [#allocation1], 2
    %v2790 = vld [vmem:[%s2789] ss:$9 sm:$0xff]
    %v2792 = vadd.f32 %v2780, %v2790
    %2797 = vst [vmem:[#allocation1] sm:$0xff] %v2631
    %2798 = vst [vmem:[#allocation1 + $0x9] sm:$0xff] %v2671
    %2799 = vst [vmem:[#allocation1 + $0x12] sm:$0xff] %v2711
    %2800 = vst [vmem:[#allocation1 + $0x1b] sm:$0xff] %v2751
    %s2801 = scalar_lea.vmem [#allocation1], 3
    %v2802 = vld [vmem:[%s2801] ss:$9 sm:$0xff]
    %v2804 = vadd.f32 %v2792, %v2802
    %v2805 = vmax.f32 %v2804, 0.0
    %v2807 = vperm.slane %v2805, 0
    %v2808 = vperm.slane %v2805, 1
    %v2809 = vperm.slane %v2805, 2
    %v2810 = vperm.slane %v2805, 3
    %v2815 = vld [vmem:[#allocation6] sm:$0xff]
    %v2816 = vld [vmem:[#allocation6 + $0x8] sm:$0xff]
    %v2817 = vld [vmem:[#allocation6 + $0x10] sm:$0xff]
    %v2818 = vld [vmem:[#allocation6 + $0x18] sm:$0xff]
    %v2819 = vld [vmem:[#allocation6 + $0x20] sm:$0xff]
    %v2820 = vld [vmem:[#allocation6 + $0x28] sm:$0xff]
    %v2821 = vld [vmem:[#allocation6 + $0x30] sm:$0xff]
    %v2822 = vld [vmem:[#allocation6 + $0x38] sm:$0xff]
    %v2823 = vld [vmem:[#allocation6 + $0x40] sm:$0xff]
    %v2824 = vld [vmem:[#allocation6 + $0x48] sm:$0xff]
    %v2825 = vld [vmem:[#allocation6 + $0x50] sm:$0xff]
    %v2826 = vld [vmem:[#allocation6 + $0x58] sm:$0xff]
    %v2827 = vld [vmem:[#allocation6 + $0x60] sm:$0xff]
    %v2828 = vld [vmem:[#allocation6 + $0x68] sm:$0xff]
    %v2829 = vld [vmem:[#allocation6 + $0x70] sm:$0xff]
    %v2830 = vld [vmem:[#allocation6 + $0x78] sm:$0xff]
    %v2831 = vld [vmem:[#allocation6 + $0x80] sm:$0xff]
    %v2832 = vld [vmem:[#allocation6 + $0x88] sm:$0xff]
    %v2833 = vld [vmem:[#allocation6 + $0x90] sm:$0xff]
    %v2834 = vld [vmem:[#allocation6 + $0x98] sm:$0xff]
    %v2835 = vld [vmem:[#allocation6 + $0xa0] sm:$0xff]
    %v2836 = vld [vmem:[#allocation6 + $0xa8] sm:$0xff]
    %v2837 = vld [vmem:[#allocation6 + $0xb0] sm:$0xff]
    %v2838 = vld [vmem:[#allocation6 + $0xb8] sm:$0xff]
    %v2839 = vld [vmem:[#allocation6 + $0xc0] sm:$0xff]
    %v2840 = vld [vmem:[#allocation6 + $0xc8] sm:$0xff]
    %v2841 = vld [vmem:[#allocation6 + $0xd0] sm:$0xff]
    %v2842 = vld [vmem:[#allocation6 + $0xd8] sm:$0xff]
    %v2843 = vld [vmem:[#allocation6 + $0xe0] sm:$0xff]
    %v2844 = vld [vmem:[#allocation6 + $0xe8] sm:$0xff]
    %v2845 = vld [vmem:[#allocation6 + $0xf0] sm:$0xff]
    %v2846 = vld [vmem:[#allocation6 + $0xf8] sm:$0xff]
    %v2847 = vld [vmem:[#allocation6 + $0x100] sm:$0xff]
    %v2848 = vld [vmem:[#allocation6 + $0x108] sm:$0xff]
    %v2849 = vld [vmem:[#allocation6 + $0x110] sm:$0xff]
    %v2850 = vld [vmem:[#allocation6 + $0x118] sm:$0xff]
    %v2851 = vld [vmem:[#allocation6 + $0x120] sm:$0xff]
    %v2852 = vld [vmem:[#allocation6 + $0x128] sm:$0xff]
    %v2853 = vld [vmem:[#allocation6 + $0x130] sm:$0xff]
    %v2854 = vld [vmem:[#allocation6 + $0x138] sm:$0xff]
    %v2855 = vld [vmem:[#allocation6 + $0x140] sm:$0xff]
    %v2856 = vld [vmem:[#allocation6 + $0x148] sm:$0xff]
    %v2857 = vld [vmem:[#allocation6 + $0x150] sm:$0xff]
    %v2858 = vld [vmem:[#allocation6 + $0x158] sm:$0xff]
    %v2859 = vld [vmem:[#allocation6 + $0x160] sm:$0xff]
    %v2860 = vld [vmem:[#allocation6 + $0x168] sm:$0xff]
    %v2861 = vld [vmem:[#allocation6 + $0x170] sm:$0xff]
    %v2862 = vld [vmem:[#allocation6 + $0x178] sm:$0xff]
    %v2863 = vld [vmem:[#allocation6 + $0x180] sm:$0xff]
    %v2864 = vld [vmem:[#allocation6 + $0x188] sm:$0xff]
    %v2865 = vld [vmem:[#allocation6 + $0x190] sm:$0xff]
    %v2866 = vld [vmem:[#allocation6 + $0x198] sm:$0xff]
    %v2867 = vld [vmem:[#allocation6 + $0x1a0] sm:$0xff]
    %v2868 = vld [vmem:[#allocation6 + $0x1a8] sm:$0xff]
    %v2869 = vld [vmem:[#allocation6 + $0x1b0] sm:$0xff]
    %v2870 = vld [vmem:[#allocation6 + $0x1b8] sm:$0xff]
    %v2871 = vld [vmem:[#allocation6 + $0x1c0] sm:$0xff]
    %v2872 = vld [vmem:[#allocation6 + $0x1c8] sm:$0xff]
    %v2873 = vld [vmem:[#allocation6 + $0x1d0] sm:$0xff]
    %v2874 = vld [vmem:[#allocation6 + $0x1d8] sm:$0xff]
    %v2875 = vld [vmem:[#allocation6 + $0x1e0] sm:$0xff]
    %v2876 = vld [vmem:[#allocation6 + $0x1e8] sm:$0xff]
    %v2877 = vld [vmem:[#allocation6 + $0x1f0] sm:$0xff]
    %v2878 = vld [vmem:[#allocation6 + $0x1f8] sm:$0xff]
    %v2879 = vld [vmem:[#allocation6 + $0x200] sm:$0xff]
    %v2880 = vld [vmem:[#allocation6 + $0x208] sm:$0xff]
    %v2881 = vld [vmem:[#allocation6 + $0x210] sm:$0xff]
    %v2882 = vld [vmem:[#allocation6 + $0x218] sm:$0xff]
    %v2883 = vld [vmem:[#allocation6 + $0x220] sm:$0xff]
    %v2884 = vld [vmem:[#allocation6 + $0x228] sm:$0xff]
    %v2885 = vld [vmem:[#allocation6 + $0x230] sm:$0xff]
    %v2886 = vld [vmem:[#allocation6 + $0x238] sm:$0xff]
    %v2887 = vld [vmem:[#allocation6 + $0x240] sm:$0xff]
    %v2888 = vld [vmem:[#allocation6 + $0x248] sm:$0xff]
    %v2889 = vld [vmem:[#allocation6 + $0x250] sm:$0xff]
    %v2890 = vld [vmem:[#allocation6 + $0x258] sm:$0xff]
    %v2891 = vld [vmem:[#allocation6 + $0x260] sm:$0xff]
    %v2892 = vld [vmem:[#allocation6 + $0x268] sm:$0xff]
    %v2893 = vld [vmem:[#allocation6 + $0x270] sm:$0xff]
    %v2894 = vld [vmem:[#allocation6 + $0x278] sm:$0xff]
    %v2895 = vld [vmem:[#allocation6 + $0x280] sm:$0xff]
    %v2896 = vld [vmem:[#allocation6 + $0x288] sm:$0xff]
    %v2897 = vld [vmem:[#allocation6 + $0x290] sm:$0xff]
    %v2898 = vld [vmem:[#allocation6 + $0x298] sm:$0xff]
    %v2899 = vld [vmem:[#allocation6 + $0x2a0] sm:$0xff]
    %v2900 = vld [vmem:[#allocation6 + $0x2a8] sm:$0xff]
    %v2901 = vld [vmem:[#allocation6 + $0x2b0] sm:$0xff]
    %v2902 = vld [vmem:[#allocation6 + $0x2b8] sm:$0xff]
    %v2903 = vld [vmem:[#allocation6 + $0x2c0] sm:$0xff]
    %v2904 = vld [vmem:[#allocation6 + $0x2c8] sm:$0xff]
    %v2905 = vld [vmem:[#allocation6 + $0x2d0] sm:$0xff]
    %v2906 = vld [vmem:[#allocation6 + $0x2d8] sm:$0xff]
    %v2907 = vld [vmem:[#allocation6 + $0x2e0] sm:$0xff]
    %v2908 = vld [vmem:[#allocation6 + $0x2e8] sm:$0xff]
    %v2909 = vld [vmem:[#allocation6 + $0x2f0] sm:$0xff]
    %v2910 = vld [vmem:[#allocation6 + $0x2f8] sm:$0xff]
    %v2911 = vld [vmem:[#allocation6 + $0x300] sm:$0xff]
    %v2912 = vld [vmem:[#allocation6 + $0x308] sm:$0xff]
    %v2913 = vld [vmem:[#allocation6 + $0x310] sm:$0xff]
    %v2914 = vld [vmem:[#allocation6 + $0x318] sm:$0xff]
    %v2915 = vld [vmem:[#allocation6 + $0x320] sm:$0xff]
    %v2916 = vld [vmem:[#allocation6 + $0x328] sm:$0xff]
    %v2917 = vld [vmem:[#allocation6 + $0x330] sm:$0xff]
    %v2918 = vld [vmem:[#allocation6 + $0x338] sm:$0xff]
    %v2919 = vld [vmem:[#allocation6 + $0x340] sm:$0xff]
    %v2920 = vld [vmem:[#allocation6 + $0x348] sm:$0xff]
    %v2921 = vld [vmem:[#allocation6 + $0x350] sm:$0xff]
    %v2922 = vld [vmem:[#allocation6 + $0x358] sm:$0xff]
    %v2923 = vld [vmem:[#allocation6 + $0x360] sm:$0xff]
    %v2924 = vld [vmem:[#allocation6 + $0x368] sm:$0xff]
    %v2925 = vld [vmem:[#allocation6 + $0x370] sm:$0xff]
    %v2926 = vld [vmem:[#allocation6 + $0x378] sm:$0xff]
    %v2927 = vld [vmem:[#allocation6 + $0x380] sm:$0xff]
    %v2928 = vld [vmem:[#allocation6 + $0x388] sm:$0xff]
    %v2929 = vld [vmem:[#allocation6 + $0x390] sm:$0xff]
    %v2930 = vld [vmem:[#allocation6 + $0x398] sm:$0xff]
    %v2931 = vld [vmem:[#allocation6 + $0x3a0] sm:$0xff]
    %v2932 = vld [vmem:[#allocation6 + $0x3a8] sm:$0xff]
    %v2933 = vld [vmem:[#allocation6 + $0x3b0] sm:$0xff]
    %v2934 = vld [vmem:[#allocation6 + $0x3b8] sm:$0xff]
    %v2935 = vld [vmem:[#allocation6 + $0x3c0] sm:$0xff]
    %v2936 = vld [vmem:[#allocation6 + $0x3c8] sm:$0xff]
    %v2937 = vld [vmem:[#allocation6 + $0x3d0] sm:$0xff]
    %v2938 = vld [vmem:[#allocation6 + $0x3d8] sm:$0xff]
    %v2939 = vld [vmem:[#allocation6 + $0x3e0] sm:$0xff]
    %v2940 = vld [vmem:[#allocation6 + $0x3e8] sm:$0xff]
    %v2941 = vld [vmem:[#allocation6 + $0x3f0] sm:$0xff]
    %v2942 = vld [vmem:[#allocation6 + $0x3f8] sm:$0xff]
    %v2943 = vld [vmem:[#allocation10] sm:$0x3]
    %v2945 = vperm.slane %v2943, 0
    %v2946 = vperm.slane %v2943, 1
    %2949 = vmatpush.msra.mxu0 %v2845
    %2950 = vmatpush.msra.mxu0 %v2843
    %2951 = vmatpush.msra.mxu0 %v2841
    %2952 = vmatpush.msra.mxu0 %v2839
    %2953 = vmatpush.msra.mxu0 %v2837
    %2954 = vmatpush.msra.mxu0 %v2835
    %2955 = vmatpush.msra.mxu0 %v2833
    %2956 = vmatpush.msra.mxu0 %v2831
    %2957 = vmatpush.msra.mxu0 %v2829
    %2958 = vmatpush.msra.mxu0 %v2827
    %2959 = vmatpush.msra.mxu0 %v2825
    %2960 = vmatpush.msra.mxu0 %v2823
    %2961 = vmatpush.msra.mxu0 %v2821
    %2962 = vmatpush.msra.mxu0 %v2819
    %2963 = vmatpush.msra.mxu0 %v2817
    %2964 = vmatpush.msra.mxu0 %v2815
    %2965 = vmatmul.f32.gmra.mxu0 %v2807
    %v2966 = vpop.f32.mrf.mxu0
    %v2967 = vadd.f32 %v2945, %v2966
    %2968 = vdwg.mxu0
    %2969 = vmatpush.msra.mxu0 %v2877
    %2970 = vmatpush.msra.mxu0 %v2875
    %2971 = vmatpush.msra.mxu0 %v2873
    %2972 = vmatpush.msra.mxu0 %v2871
    %2973 = vmatpush.msra.mxu0 %v2869
    %2974 = vmatpush.msra.mxu0 %v2867
    %2975 = vmatpush.msra.mxu0 %v2865
    %2976 = vmatpush.msra.mxu0 %v2863
    %2977 = vmatpush.msra.mxu0 %v2861
    %2978 = vmatpush.msra.mxu0 %v2859
    %2979 = vmatpush.msra.mxu0 %v2857
    %2980 = vmatpush.msra.mxu0 %v2855
    %2981 = vmatpush.msra.mxu0 %v2853
    %2982 = vmatpush.msra.mxu0 %v2851
    %2983 = vmatpush.msra.mxu0 %v2849
    %2984 = vmatpush.msra.mxu0 %v2847
    %2985 = vmatmul.f32.gmra.mxu0 %v2808
    %v2986 = vpop.f32.mrf.mxu0
    %v2987 = vadd.f32 %v2967, %v2986
    %2988 = vdwg.mxu0
    %2989 = vmatpush.msra.mxu0 %v2909
    %2990 = vmatpush.msra.mxu0 %v2907
    %2991 = vmatpush.msra.mxu0 %v2905
    %2992 = vmatpush.msra.mxu0 %v2903
    %2993 = vmatpush.msra.mxu0 %v2901
    %2994 = vmatpush.msra.mxu0 %v2899
    %2995 = vmatpush.msra.mxu0 %v2897
    %2996 = vmatpush.msra.mxu0 %v2895
    %2997 = vmatpush.msra.mxu0 %v2893
    %2998 = vmatpush.msra.mxu0 %v2891
    %2999 = vmatpush.msra.mxu0 %v2889
    %3000 = vmatpush.msra.mxu0 %v2887
    %3001 = vmatpush.msra.mxu0 %v2885
    %3002 = vmatpush.msra.mxu0 %v2883
    %3003 = vmatpush.msra.mxu0 %v2881
    %3004 = vmatpush.msra.mxu0 %v2879
    %3005 = vmatmul.f32.gmra.mxu0 %v2809
    %v3006 = vpop.f32.mrf.mxu0
    %v3007 = vadd.f32 %v2987, %v3006
    %3008 = vdwg.mxu0
    %3009 = vmatpush.msra.mxu0 %v2941
    %3010 = vmatpush.msra.mxu0 %v2939
    %3011 = vmatpush.msra.mxu0 %v2937
    %3012 = vmatpush.msra.mxu0 %v2935
    %3013 = vmatpush.msra.mxu0 %v2933
    %3014 = vmatpush.msra.mxu0 %v2931
    %3015 = vmatpush.msra.mxu0 %v2929
    %3016 = vmatpush.msra.mxu0 %v2927
    %3017 = vmatpush.msra.mxu0 %v2925
    %3018 = vmatpush.msra.mxu0 %v2923
    %3019 = vmatpush.msra.mxu0 %v2921
    %3020 = vmatpush.msra.mxu0 %v2919
    %3021 = vmatpush.msra.mxu0 %v2917
    %3022 = vmatpush.msra.mxu0 %v2915
    %3023 = vmatpush.msra.mxu0 %v2913
    %3024 = vmatpush.msra.mxu0 %v2911
    %3025 = vmatmul.f32.gmra.mxu0 %v2810
    %v3026 = vpop.f32.mrf.mxu0
    %v3027 = vadd.f32 %v3007, %v3026
    %3028 = vdwg.mxu0
    %3029 = vmatpush.msra.mxu0 %v2846
    %3030 = vmatpush.msra.mxu0 %v2844
    %3031 = vmatpush.msra.mxu0 %v2842
    %3032 = vmatpush.msra.mxu0 %v2840
    %3033 = vmatpush.msra.mxu0 %v2838
    %3034 = vmatpush.msra.mxu0 %v2836
    %3035 = vmatpush.msra.mxu0 %v2834
    %3036 = vmatpush.msra.mxu0 %v2832
    %3037 = vmatpush.msra.mxu0 %v2830
    %3038 = vmatpush.msra.mxu0 %v2828
    %3039 = vmatpush.msra.mxu0 %v2826
    %3040 = vmatpush.msra.mxu0 %v2824
    %3041 = vmatpush.msra.mxu0 %v2822
    %3042 = vmatpush.msra.mxu0 %v2820
    %3043 = vmatpush.msra.mxu0 %v2818
    %3044 = vmatpush.msra.mxu0 %v2816
    %3045 = vmatmul.f32.gmra.mxu0 %v2807
    %v3046 = vpop.f32.mrf.mxu0
    %v3047 = vadd.f32 %v2946, %v3046
    %3048 = vdwg.mxu0
    %3049 = vmatpush.msra.mxu0 %v2878
    %3050 = vmatpush.msra.mxu0 %v2876
    %3051 = vmatpush.msra.mxu0 %v2874
    %3052 = vmatpush.msra.mxu0 %v2872
    %3053 = vmatpush.msra.mxu0 %v2870
    %3054 = vmatpush.msra.mxu0 %v2868
    %3055 = vmatpush.msra.mxu0 %v2866
    %3056 = vmatpush.msra.mxu0 %v2864
    %3057 = vmatpush.msra.mxu0 %v2862
    %3058 = vmatpush.msra.mxu0 %v2860
    %3059 = vmatpush.msra.mxu0 %v2858
    %3060 = vmatpush.msra.mxu0 %v2856
    %3061 = vmatpush.msra.mxu0 %v2854
    %3062 = vmatpush.msra.mxu0 %v2852
    %3063 = vmatpush.msra.mxu0 %v2850
    %3064 = vmatpush.msra.mxu0 %v2848
    %3065 = vmatmul.f32.gmra.mxu0 %v2808
    %v3066 = vpop.f32.mrf.mxu0
    %v3067 = vadd.f32 %v3047, %v3066
    %3068 = vdwg.mxu0
    %3069 = vmatpush.msra.mxu0 %v2910
    %3070 = vmatpush.msra.mxu0 %v2908
    %3071 = vmatpush.msra.mxu0 %v2906
    %3072 = vmatpush.msra.mxu0 %v2904
    %3073 = vmatpush.msra.mxu0 %v2902
    %3074 = vmatpush.msra.mxu0 %v2900
    %3075 = vmatpush.msra.mxu0 %v2898
    %3076 = vmatpush.msra.mxu0 %v2896
    %3077 = vmatpush.msra.mxu0 %v2894
    %3078 = vmatpush.msra.mxu0 %v2892
    %3079 = vmatpush.msra.mxu0 %v2890
    %3080 = vmatpush.msra.mxu0 %v2888
    %3081 = vmatpush.msra.mxu0 %v2886
    %3082 = vmatpush.msra.mxu0 %v2884
    %3083 = vmatpush.msra.mxu0 %v2882
    %3084 = vmatpush.msra.mxu0 %v2880
    %3085 = vmatmul.f32.gmra.mxu0 %v2809
    %v3086 = vpop.f32.mrf.mxu0
    %v3087 = vadd.f32 %v3067, %v3086
    %3088 = vdwg.mxu0
    %3089 = vmatpush.msra.mxu0 %v2942
    %3090 = vmatpush.msra.mxu0 %v2940
    %3091 = vmatpush.msra.mxu0 %v2938
    %3092 = vmatpush.msra.mxu0 %v2936
    %3093 = vmatpush.msra.mxu0 %v2934
    %3094 = vmatpush.msra.mxu0 %v2932
    %3095 = vmatpush.msra.mxu0 %v2930
    %3096 = vmatpush.msra.mxu0 %v2928
    %3097 = vmatpush.msra.mxu0 %v2926
    %3098 = vmatpush.msra.mxu0 %v2924
    %3099 = vmatpush.msra.mxu0 %v2922
    %3100 = vmatpush.msra.mxu0 %v2920
    %3101 = vmatpush.msra.mxu0 %v2918
    %3102 = vmatpush.msra.mxu0 %v2916
    %3103 = vmatpush.msra.mxu0 %v2914
    %3104 = vmatpush.msra.mxu0 %v2912
    %3105 = vmatmul.f32.gmra.mxu0 %v2810
    %v3106 = vpop.f32.mrf.mxu0
    %v3107 = vadd.f32 %v3087, %v3106
    %3108 = vdwg.mxu0
    %v3109 = vld [vmem:[%s9] sm:$0xff]
    %v3110 = vld [vmem:[#allocation13] sm:$0x3]
    %v3111 = vlaneseq
    %v3112 = vshrl.u32 %v3111, 7
    %v3113 = vld [vmem:[#allocation4] sm:$0xff]
    %v3114 = vld [vmem:[#allocation4 + $0x8] sm:$0xff]
    %3116 = vset.pattern.permute.xlu0 0
    %3117 = vperm.xlu0 %3116, %v3109
    %v3118 = vpop.permute.xlu0 %3117
    %v3121 = vperm.slane %v3110, 0
    %v3122 = vperm.slane %v3110, 1
    %v3125 = vmul.f32 %v3118, %v3121
    %v3126 = vmul.f32 %v3118, %v3122
    %v3127 = vadd.f32 %v3113, %v3125
    %v3128 = vadd.f32 %v3114, %v3126
    %v3129 = vtanh.pop %v3127
    %v3130 = vtanh.pop %v3128
    %v3131 = vadd.f32 %v3129, 1.0
    %v3132 = vadd.f32 %v3130, 1.0
    %v3133 = vmul.f32 %v3131, 0.5
    %v3134 = vmul.f32 %v3132, 0.5
    %v3137 = vrot.slane %v3027, 7
    %v3138 = vrot.slane %v3107, 7
    %v3141 = vmul.f32 %v3133, %v3137
    %v3142 = vmul.f32 %v3134, %v3138
    %v3145 = vrot.slane %v3129, 2
    %v3146 = vrot.slane %v3130, 2
    %v3149 = vmul.f32 %v3133, %v3145
    %v3150 = vmul.f32 %v3134, %v3146
    %v3153 = vrot.slane %v3149, 7
    %v3154 = vrot.slane %v3150, 7
    %v3157 = vadd.f32 %v3141, %v3153
    %v3158 = vadd.f32 %v3142, %v3154
    %v3159 = vtanh.pop %v3157
    %v3160 = vtanh.pop %v3158
    %v3163 = vrot.slane %v3159, 6
    %v3164 = vrot.slane %v3160, 6
    %v3167 = vmul.f32 %v3133, %v3163
    %v3168 = vmul.f32 %v3134, %v3164
    %vm3169 = vcmp.eq.s32.totalorder %v3112, 0
    %v3170 = vperm.slane %v3167, 3
    %v3171 = vperm.slane %v3168, 3
    %v3172 = vsel %vm3169, %v3170, 0.0
    %v3173 = vsel %vm3169, %v3171, 0.0
    %v3174 = vld [vmem:[#allocation4 + $0x10] sm:$0xff]
    %v3175 = vld [vmem:[#allocation4 + $0x18] sm:$0xff]
    %v3176 = vmul.f32 %v3118, %v3170
    %v3177 = vmul.f32 %v3118, %v3171
    %v3178 = vadd.f32 %v3174, %v3176
    %v3179 = vadd.f32 %v3175, %v3177
    %v3180 = vtanh.pop %v3178
    %v3181 = vtanh.pop %v3179
    %v3182 = vadd.f32 %v3180, 1.0
    %v3183 = vadd.f32 %v3181, 1.0
    %v3184 = vmul.f32 %v3182, 0.5
    %v3185 = vmul.f32 %v3183, 0.5
    %v3186 = vmul.f32 %v3184, %v3157
    %v3187 = vmul.f32 %v3185, %v3158
    %v3190 = vrot.slane %v3180, 2
    %v3191 = vrot.slane %v3181, 2
    %v3194 = vmul.f32 %v3184, %v3190
    %v3195 = vmul.f32 %v3185, %v3191
    %v3198 = vrot.slane %v3194, 7
    %v3199 = vrot.slane %v3195, 7
    %v3202 = vadd.f32 %v3186, %v3198
    %v3203 = vadd.f32 %v3187, %v3199
    %v3204 = vtanh.pop %v3202
    %v3205 = vtanh.pop %v3203
    %v3208 = vrot.slane %v3204, 6
    %v3209 = vrot.slane %v3205, 6
    %v3212 = vmul.f32 %v3184, %v3208
    %v3213 = vmul.f32 %v3185, %v3209
    %vm3214 = vcmp.eq.s32.totalorder %v3112, 1
    %v3215 = vperm.slane %v3212, 3
    %v3216 = vperm.slane %v3213, 3
    %v3217 = vsel %vm3214, %v3215, %v3172
    %v3218 = vsel %vm3214, %v3216, %v3173
    %v3219 = vld [vmem:[#allocation4 + $0x20] sm:$0xff]
    %v3220 = vld [vmem:[#allocation4 + $0x28] sm:$0xff]
    %v3221 = vmul.f32 %v3118, %v3215
    %v3222 = vmul.f32 %v3118, %v3216
    %v3223 = vadd.f32 %v3219, %v3221
    %v3224 = vadd.f32 %v3220, %v3222
    %v3225 = vtanh.pop %v3223
    %v3226 = vtanh.pop %v3224
    %v3227 = vadd.f32 %v3225, 1.0
    %v3228 = vadd.f32 %v3226, 1.0
    %v3229 = vmul.f32 %v3227, 0.5
    %v3230 = vmul.f32 %v3228, 0.5
    %v3231 = vmul.f32 %v3229, %v3202
    %v3232 = vmul.f32 %v3230, %v3203
    %v3235 = vrot.slane %v3225, 2
    %v3236 = vrot.slane %v3226, 2
    %v3239 = vmul.f32 %v3229, %v3235
    %v3240 = vmul.f32 %v3230, %v3236
    %v3243 = vrot.slane %v3239, 7
    %v3244 = vrot.slane %v3240, 7
    %v3247 = vadd.f32 %v3231, %v3243
    %v3248 = vadd.f32 %v3232, %v3244
    %v3249 = vtanh.pop %v3247
    %v3250 = vtanh.pop %v3248
    %v3253 = vrot.slane %v3249, 6
    %v3254 = vrot.slane %v3250, 6
    %v3257 = vmul.f32 %v3229, %v3253
    %v3258 = vmul.f32 %v3230, %v3254
    %vm3259 = vcmp.eq.s32.totalorder %v3112, 2
    %v3260 = vperm.slane %v3257, 3
    %v3261 = vperm.slane %v3258, 3
    %v3262 = vsel %vm3259, %v3260, %v3217
    %v3263 = vsel %vm3259, %v3261, %v3218
    %v3264 = vld [vmem:[#allocation4 + $0x30] sm:$0xff]
    %v3265 = vld [vmem:[#allocation4 + $0x38] sm:$0xff]
    %v3266 = vmul.f32 %v3118, %v3260
    %v3267 = vmul.f32 %v3118, %v3261
    %v3268 = vadd.f32 %v3264, %v3266
    %v3269 = vadd.f32 %v3265, %v3267
    %v3270 = vtanh.pop %v3268
    %v3271 = vtanh.pop %v3269
    %v3272 = vadd.f32 %v3270, 1.0
    %v3273 = vadd.f32 %v3271, 1.0
    %v3274 = vmul.f32 %v3272, 0.5
    %v3275 = vmul.f32 %v3273, 0.5
    %v3276 = vmul.f32 %v3274, %v3247
    %v3277 = vmul.f32 %v3275, %v3248
    %v3280 = vrot.slane %v3270, 2
    %v3281 = vrot.slane %v3271, 2
    %v3284 = vmul.f32 %v3274, %v3280
    %v3285 = vmul.f32 %v3275, %v3281
    %v3288 = vrot.slane %v3284, 7
    %v3289 = vrot.slane %v3285, 7
    %v3292 = vadd.f32 %v3276, %v3288
    %v3293 = vadd.f32 %v3277, %v3289
    %v3294 = vtanh.pop %v3292
    %v3295 = vtanh.pop %v3293
    %v3298 = vrot.slane %v3294, 6
    %v3299 = vrot.slane %v3295, 6
    %v3302 = vmul.f32 %v3274, %v3298
    %v3303 = vmul.f32 %v3275, %v3299
    %vm3304 = vcmp.eq.s32.totalorder %v3112, 3
    %v3305 = vperm.slane %v3302, 3
    %v3306 = vperm.slane %v3303, 3
    %v3307 = vsel %vm3304, %v3305, %v3262
    %v3308 = vsel %vm3304, %v3306, %v3263
    %v3309 = vld [vmem:[#allocation4 + $0x40] sm:$0xff]
    %v3310 = vld [vmem:[#allocation4 + $0x48] sm:$0xff]
    %v3311 = vmul.f32 %v3118, %v3305
    %v3312 = vmul.f32 %v3118, %v3306
    %v3313 = vadd.f32 %v3309, %v3311
    %v3314 = vadd.f32 %v3310, %v3312
    %v3315 = vtanh.pop %v3313
    %v3316 = vtanh.pop %v3314
    %v3317 = vadd.f32 %v3315, 1.0
    %v3318 = vadd.f32 %v3316, 1.0
    %v3319 = vmul.f32 %v3317, 0.5
    %v3320 = vmul.f32 %v3318, 0.5
    %v3321 = vmul.f32 %v3319, %v3292
    %v3322 = vmul.f32 %v3320, %v3293
    %v3325 = vrot.slane %v3315, 2
    %v3326 = vrot.slane %v3316, 2
    %v3329 = vmul.f32 %v3319, %v3325
    %v3330 = vmul.f32 %v3320, %v3326
    %v3333 = vrot.slane %v3329, 7
    %v3334 = vrot.slane %v3330, 7
    %v3337 = vadd.f32 %v3321, %v3333
    %v3338 = vadd.f32 %v3322, %v3334
    %v3339 = vtanh.pop %v3337
    %v3340 = vtanh.pop %v3338
    %v3343 = vrot.slane %v3339, 6
    %v3344 = vrot.slane %v3340, 6
    %v3347 = vmul.f32 %v3319, %v3343
    %v3348 = vmul.f32 %v3320, %v3344
    %vm3349 = vcmp.eq.s32.totalorder %v3112, 4
    %v3350 = vperm.slane %v3347, 3
    %v3351 = vperm.slane %v3348, 3
    %v3352 = vsel %vm3349, %v3350, %v3307
    %v3353 = vsel %vm3349, %v3351, %v3308
    %v3354 = vld [vmem:[#allocation4 + $0x50] sm:$0xff]
    %v3355 = vld [vmem:[#allocation4 + $0x58] sm:$0xff]
    %v3356 = vmul.f32 %v3118, %v3350
    %v3357 = vmul.f32 %v3118, %v3351
    %v3358 = vadd.f32 %v3354, %v3356
    %v3359 = vadd.f32 %v3355, %v3357
    %v3360 = vtanh.pop %v3358
    %v3361 = vtanh.pop %v3359
    %v3362 = vadd.f32 %v3360, 1.0
    %v3363 = vadd.f32 %v3361, 1.0
    %v3364 = vmul.f32 %v3362, 0.5
    %v3365 = vmul.f32 %v3363, 0.5
    %v3366 = vmul.f32 %v3364, %v3337
    %v3367 = vmul.f32 %v3365, %v3338
    %v3370 = vrot.slane %v3360, 2
    %v3371 = vrot.slane %v3361, 2
    %v3374 = vmul.f32 %v3364, %v3370
    %v3375 = vmul.f32 %v3365, %v3371
    %v3378 = vrot.slane %v3374, 7
    %v3379 = vrot.slane %v3375, 7
    %v3382 = vadd.f32 %v3366, %v3378
    %v3383 = vadd.f32 %v3367, %v3379
    %v3384 = vtanh.pop %v3382
    %v3385 = vtanh.pop %v3383
    %v3388 = vrot.slane %v3384, 6
    %v3389 = vrot.slane %v3385, 6
    %v3392 = vmul.f32 %v3364, %v3388
    %v3393 = vmul.f32 %v3365, %v3389
    %vm3394 = vcmp.eq.s32.totalorder %v3112, 5
    %v3395 = vperm.slane %v3392, 3
    %v3396 = vperm.slane %v3393, 3
    %v3397 = vsel %vm3394, %v3395, %v3352
    %v3398 = vsel %vm3394, %v3396, %v3353
    %v3399 = vld [vmem:[#allocation4 + $0x60] sm:$0xff]
    %v3400 = vld [vmem:[#allocation4 + $0x68] sm:$0xff]
    %v3401 = vmul.f32 %v3118, %v3395
    %v3402 = vmul.f32 %v3118, %v3396
    %v3403 = vadd.f32 %v3399, %v3401
    %v3404 = vadd.f32 %v3400, %v3402
    %v3405 = vtanh.pop %v3403
    %v3406 = vtanh.pop %v3404
    %v3407 = vadd.f32 %v3405, 1.0
    %v3408 = vadd.f32 %v3406, 1.0
    %v3409 = vmul.f32 %v3407, 0.5
    %v3410 = vmul.f32 %v3408, 0.5
    %v3411 = vmul.f32 %v3409, %v3382
    %v3412 = vmul.f32 %v3410, %v3383
    %v3415 = vrot.slane %v3405, 2
    %v3416 = vrot.slane %v3406, 2
    %v3419 = vmul.f32 %v3409, %v3415
    %v3420 = vmul.f32 %v3410, %v3416
    %v3423 = vrot.slane %v3419, 7
    %v3424 = vrot.slane %v3420, 7
    %v3427 = vadd.f32 %v3411, %v3423
    %v3428 = vadd.f32 %v3412, %v3424
    %v3429 = vtanh.pop %v3427
    %v3430 = vtanh.pop %v3428
    %v3433 = vrot.slane %v3429, 6
    %v3434 = vrot.slane %v3430, 6
    %v3437 = vmul.f32 %v3409, %v3433
    %v3438 = vmul.f32 %v3410, %v3434
    %vm3439 = vcmp.eq.s32.totalorder %v3112, 6
    %v3440 = vperm.slane %v3437, 3
    %v3441 = vperm.slane %v3438, 3
    %v3442 = vsel %vm3439, %v3440, %v3397
    %v3443 = vsel %vm3439, %v3441, %v3398
    %v3444 = vld [vmem:[#allocation4 + $0x70] sm:$0xff]
    %v3445 = vld [vmem:[#allocation4 + $0x78] sm:$0xff]
    %v3446 = vmul.f32 %v3118, %v3440
    %v3447 = vmul.f32 %v3118, %v3441
    %v3448 = vadd.f32 %v3444, %v3446
    %v3449 = vadd.f32 %v3445, %v3447
    %v3450 = vtanh.pop %v3448
    %v3451 = vtanh.pop %v3449
    %v3452 = vadd.f32 %v3450, 1.0
    %v3453 = vadd.f32 %v3451, 1.0
    %v3454 = vmul.f32 %v3452, 0.5
    %v3455 = vmul.f32 %v3453, 0.5
    %v3456 = vmul.f32 %v3454, %v3427
    %v3457 = vmul.f32 %v3455, %v3428
    %v3460 = vrot.slane %v3450, 2
    %v3461 = vrot.slane %v3451, 2
    %v3464 = vmul.f32 %v3454, %v3460
    %v3465 = vmul.f32 %v3455, %v3461
    %v3468 = vrot.slane %v3464, 7
    %v3469 = vrot.slane %v3465, 7
    %v3472 = vadd.f32 %v3456, %v3468
    %v3473 = vadd.f32 %v3457, %v3469
    %v3474 = vtanh.pop %v3472
    %v3475 = vtanh.pop %v3473
    %v3478 = vrot.slane %v3474, 6
    %v3479 = vrot.slane %v3475, 6
    %v3482 = vmul.f32 %v3454, %v3478
    %v3483 = vmul.f32 %v3455, %v3479
    %vm3484 = vcmp.eq.s32.totalorder %v3112, 7
    %v3485 = vperm.slane %v3482, 3
    %v3486 = vperm.slane %v3483, 3
    %v3487 = vsel %vm3484, %v3485, %v3442
    %v3488 = vsel %vm3484, %v3486, %v3443
    %3489 = vst [vmem:[%s12] sm:$0xff] %v3487
    %3490 = vst [vmem:[%s12 + $0x8] sm:$0xff] %v3488
    // Predicated region
    $region66: #{lstm_simp_forward.1} parent=1 // pred_check
      _
    $region67: #{lstm_simp_forward.1} parent=1 // pred_check_branch
      %3492 = sbr.rel (0) target = $region69
    $region68: #{lstm_simp_forward.1} parent=1 // pred_region
      _
    $region69: #{lstm_simp_forward.1} parent=1 // pred_fallthru
      _
    // Predicated region
    $region70: #{lstm_simp_forward.1} parent=1 // pred_check
      _
    $region71: #{lstm_simp_forward.1} parent=1 // pred_check_branch
      %3494 = sbr.rel (0) target = $region73
    $region72: #{lstm_simp_forward.1} parent=1 // pred_region
      _
    $region73: #{lstm_simp_forward.1} parent=1 // pred_fallthru
      _
    %3495 = vsyncpa [#allocation9], 1
    %3496 = vsyncpa [#allocation11], 1
    %3497 = vsyncpa [#allocation14], 1
  %3498 = vsyncmov [#allocation7]
  %s3499 = vpop.sfrf %3498
  %p3500 = scmp.eq.s32.totalorder %s3499, 0
  %p3501 = pneg %p3500
  %3503 = shalt.err (%p3501)
  %s3504 = scalar_lea.sflag [#allocation7], 1
  %3505 = vsyncmov %s3504
  %s3506 = vpop.sfrf %3505
  %p3507 = scmp.eq.s32.totalorder %s3506, 0
  %p3508 = pneg %p3507
  %3510 = shalt.err (%p3508)

</llo_original>
